<compile_context>
chip_gen: v7x
topology: tpu7x:2x2x1
jax: 0.10.0
libtpu: 0.0.40
codegen_flags: <defaults>
</compile_context>

<pallas_src>
import jax
import jax.numpy as jnp
import numpy as np
from jax import lax
from jax.experimental import pallas as pl
from jax.experimental.pallas import tpu as pltpu


def _tensorcores_per_chip():
    """2 TensorCores per chip on v7x / v4 / v5p; 1 on v5e / v6e."""
    try:
        kind = jax.devices()[0].device_kind.lower()
    except Exception:
        return 1
    if any(tag in kind for tag in ("v7", "7x", "v4", "v5p")):
        return 2
    return 1


def _make_convt_relu_kernel(nb, Cin, Cout, K, Wo, HW, stride, W_in,
                            padding, halo_top):
    """Per-grid-step kernel processing `nb` batch elements (all params static)."""

    def dilated_col_is_zero(c):
        # Column c of the (interior-dilated + right-padded) output grid carries
        # no input sample -> reading it always yields a structural zero.
        return (c % stride != 0) or (c // stride >= W_in)

    def needs_mask(dw):
        if dw == 0:
            return False
        if dw > 0:
            wrapped = range(0, dw)            # wrapped lanes read next row, cols [0, dw)
        else:
            wrapped = range(Wo + dw, Wo)      # wrapped lanes read prev row, cols [Wo+dw, Wo)
        return not all(dilated_col_is_zero(c) for c in wrapped)

    any_mask = any(needs_mask(padding - kw) for kw in range(K))

    def kernel(x_ref, w_ref, b_ref, o_ref):
        # x_ref: (nb, Cin, HWP)        input on the output grid + zero row halo
        # w_ref: (Cout, Cin*K*K)       lane-dense weight slab, tap t = (ci*K+kh)*K+kw
        # b_ref: (Cout, 1)             bias
        # o_ref: (nb, Cout, HW)        output, flattened NCHW
        w = w_ref[...]                                            # one VMEM tile
        bias_b = jnp.broadcast_to(b_ref[...].astype(jnp.float32), (Cout, HW))
        if any_mask:
            col = lax.broadcasted_iota(jnp.int32, (Cout, HW), 1) % Wo

        for n in range(nb):                                       # static unroll
            acc = bias_b                                          # bias folded into init
            for kw in range(K):                                   # group taps by dw
                dw = padding - kw
                masked = needs_mask(dw)
                part = jnp.zeros((Cout, HW), jnp.float32) if masked else acc
                for kh in range(K):
                    dh = padding - kh
                    # Zero-filled shifted plane (row under/overflow lands in the
                    # zero halo rows of the padded input block).
                    start = (halo_top + dh) * Wo + dw
                    plane = x_ref[n, :, start:start + HW]          # (Cin, HW)
                    for ci in range(Cin):
                        t = (ci * K + kh) * K + kw
                        # (1,HW) * (Cout,1) -> (Cout,HW): VPU broadcast-FMA.
                        part = part + plane[ci:ci + 1, :] * w[:, t:t + 1]
                if masked:
                    keep = (col < Wo - dw) if dw > 0 else (col >= -dw)
                    acc = acc + jnp.where(keep, part, 0.0)
                else:
                    acc = part
            o_ref[n] = jnp.maximum(acc, 0.0).astype(o_ref.dtype)   # +ReLU

    return kernel


def conv_transpose_block(x_nchw, weight, bias, *, stride, kernel_size):
    """ConvTransposeBlock.forward: ConvTranspose2d(kernel_size, stride,
    padding=kernel_size//2, output_padding=0 if stride==1 else 1) + ReLU.

    x_nchw : (N, Cin, H, W)     float32, PyTorch NCHW layout
    weight : (Cin, Cout, K, K)  PyTorch ConvTranspose2d weight layout
    bias   : (Cout,)
    returns: (N, Cout, Ho, Wo)  NCHW, matching PyTorch
    """
    padding = kernel_size // 2
    output_padding = 0 if stride == 1 else 1
    K = kernel_size
    N, Cin, H, W = x_nchw.shape
    Cout = weight.shape[1]
    Ho = (H - 1) * stride - 2 * padding + K + output_padding
    Wo = (W - 1) * stride - 2 * padding + K + output_padding
    HW = Ho * Wo

    # Trailing rows/cols of the output grid that carry no input sample.
    pad_h = Ho - ((H - 1) * stride + 1)
    pad_w = Wo - ((W - 1) * stride + 1)
    assert pad_h >= 0 and pad_w >= 0, "unsupported conv-transpose geometry"

    # Zero halo rows so every tap window is a plain in-bounds lane window.
    halo_top = padding + 1
    halo_bot = K - padding
    rows_p = Ho + halo_top + halo_bot
    HWP = rows_p * Wo

    # Interior-dilate x onto the output-aligned grid and add the halo rows.
    # (allow_input_fusion lets XLA fuse this pad into the Pallas input DMA.)
    x2 = lax.pad(
        x_nchw.astype(jnp.float32), jnp.array(0.0, jnp.float32),
        ((0, 0, 0), (0, 0, 0),
         (halo_top, pad_h + halo_bot, stride - 1),
         (0, pad_w, stride - 1)))
    x2 = x2.reshape(N, Cin, HWP)

    # Static weight repack: (Cin, Cout, K, K) -> lane-dense (Cout, Cin*K*K).
    w2 = jnp.transpose(weight.astype(jnp.float32), (1, 0, 2, 3))
    w2 = w2.reshape(Cout, Cin * K * K)
    b2 = bias.astype(jnp.float32).reshape(Cout, 1)

    # Batch elements per grid step: shard across TensorCores on 2-TC chips,
    # single grid step on single-TC chips (v5e/v6e).
    n_tc = _tensorcores_per_chip()
    if n_tc > 1 and N % n_tc == 0:
        nb = N // n_tc
    else:
        nb = N
    if nb > 32:          # keep per-step VMEM blocks modest for huge batches
        nb = 1
    grid = (N // nb,)

    kernel = _make_convt_relu_kernel(nb, Cin, Cout, K, Wo, HW, stride, W,
                                     padding, halo_top)

    try:
        cparams = pltpu.CompilerParams(
            dimension_semantics=("parallel",),
            allow_input_fusion=[True, False, False])
    except TypeError:  # older CompilerParams signature without allow_input_fusion
        cparams = pltpu.CompilerParams(dimension_semantics=("parallel",))

    out_flat = pl.pallas_call(
        kernel,
        out_shape=jax.ShapeDtypeStruct((N, Cout, HW), jnp.float32),
        grid=grid,
        in_specs=[
            pl.BlockSpec((nb, Cin, HWP), lambda g: (g, 0, 0)),
            pl.BlockSpec((Cout, Cin * K * K), lambda g: (0, 0)),
            pl.BlockSpec((Cout, 1), lambda g: (0, 0)),
        ],
        out_specs=pl.BlockSpec((nb, Cout, HW), lambda g: (g, 0, 0)),
        compiler_params=cparams,
    )(x2, w2, b2)

    # Pure bitcast: flattened NCHW -> NCHW.
    return out_flat.reshape(N, Cout, Ho, Wo)


def _reference(x_nchw, weight, bias, *, stride, kernel_size):
    """Independent XLA reference (lhs-dilated conv) for validation."""
    padding = kernel_size // 2
    output_padding = 0 if stride == 1 else 1
    K = kernel_size
    x = jnp.transpose(x_nchw, (0, 2, 3, 1))
    w_hwio = jnp.transpose(weight[:, :, ::-1, ::-1], (2, 3, 0, 1))
    pad_lo = K - 1 - padding
    pad_hi = K - 1 - padding + output_padding
    y = lax.conv_general_dilated(
        x, w_hwio, window_strides=(1, 1),
        padding=((pad_lo, pad_hi), (pad_lo, pad_hi)),
        lhs_dilation=(stride, stride),
        dimension_numbers=("NHWC", "HWIO", "NHWC"))
    y = jnp.maximum(y + bias[None, None, None, :], 0.0)
    return jnp.transpose(y, (0, 3, 1, 2))


if __name__ == "__main__":
    # Module config: in_ch=4, out_ch=8, kernel_size=3, stride=2
    #   -> padding=1, output_padding=1, spatial 16 -> 32.
    N, Cin, H, W = 2, 4, 16, 16
    Cout, K, stride = 8, 3, 2

    key = jax.random.PRNGKey(0)
    k1, k2, k3 = jax.random.split(key, 3)
    x = jax.random.normal(k1, (N, Cin, H, W), jnp.float32)
    bound = 1.0 / np.sqrt(Cin * K * K)
    weight = jax.random.uniform(k2, (Cin, Cout, K, K), jnp.float32, -bound, bound)
    bias = jax.random.uniform(k3, (Cout,), jnp.float32, -bound, bound)

    out = conv_transpose_block(x, weight, bias, stride=stride, kernel_size=K)
    out = jax.block_until_ready(out)

    ref = _reference(x, weight, bias, stride=stride, kernel_size=K)
    assert out.shape == (N, Cout, 2 * H, 2 * W), out.shape
    np.testing.assert_allclose(np.asarray(out), np.asarray(ref),
                               atol=1e-5, rtol=1e-5)
    print("KERNEL_OK")
</pallas_src>

<mosaic_0001>
module attributes {stable_mosaic.version = 11 : i64} {
  func.func @kernel(%arg0: i32, %arg1: memref<2x4x1152xf32, #tpu.memory_space<vmem>>, %arg2: memref<8x36xf32, #tpu.memory_space<vmem>>, %arg3: memref<8x1xf32, #tpu.memory_space<vmem>>, %arg4: memref<2x8x1024xf32, #tpu.memory_space<vmem>>) attributes {dimension_semantics = [#tpu.dimension_semantics<parallel>], iteration_bounds = array<i64: 1>, scalar_prefetch = 0 : i64, scratch_operands = 0 : i64, tpu.core_type = #tpu.core_type<tc>, window_params = [{transform_indices = @transform_0, window_bounds = array<i64: 2, 4, 1152>}, {pipeline_mode = #tpu.pipeline_mode<synchronous>, transform_indices = @transform_1, window_bounds = array<i64: 8, 36>}, {pipeline_mode = #tpu.pipeline_mode<synchronous>, transform_indices = @transform_2, window_bounds = array<i64: 8, 1>}, {transform_indices = @transform_3, window_bounds = array<i64: 2, 8, 1024>}]} {
    %c0 = arith.constant 0 : index
    %c0_0 = arith.constant 0 : index
    %0 = vector.load %arg2[%c0, %c0_0] : memref<8x36xf32, #tpu.memory_space<vmem>>, vector<8x36xf32>
    %c0_1 = arith.constant 0 : index
    %c0_2 = arith.constant 0 : index
    %1 = vector.load %arg3[%c0_1, %c0_2] : memref<8x1xf32, #tpu.memory_space<vmem>>, vector<8x1xf32>
    %2 = vector.shape_cast %1 : vector<8x1xf32> to vector<8x1xf32>
    %3 = vector.broadcast %2 : vector<8x1xf32> to vector<8x1024xf32>
    %4 = tpu.iota {dimensions = array<i32: 1>} : vector<8x1024xi32>
    %c32_i32 = arith.constant 32 : i32
    %c0_i32 = arith.constant 0 : i32
    %5 = arith.cmpi eq, %c32_i32, %c0_i32 : i32
    %c1_i32 = arith.constant 1 : i32
    %6 = arith.select %5, %c1_i32, %c32_i32 : i32
    %7 = vector.broadcast %6 : i32 to vector<8x1024xi32>
    %8 = arith.remsi %4, %7 : vector<8x1024xi32>
    %c0_i32_3 = arith.constant 0 : i32
    %9 = vector.broadcast %c0_i32_3 : i32 to vector<8x1024xi32>
    %10 = arith.cmpi ne, %8, %9 : vector<8x1024xi32>
    %c0_i32_4 = arith.constant 0 : i32
    %11 = vector.broadcast %c0_i32_4 : i32 to vector<8x1024xi32>
    %12 = arith.cmpi slt, %8, %11 : vector<8x1024xi32>
    %c0_i32_5 = arith.constant 0 : i32
    %13 = arith.cmpi slt, %6, %c0_i32_5 : i32
    %14 = vector.broadcast %13 : i1 to vector<8x1024xi1>
    %15 = vector.broadcast %14 : vector<8x1024xi1> to vector<8x1024xi1>
    %16 = arith.xori %12, %15 : vector<8x1024xi1>
    %17 = arith.andi %16, %10 : vector<8x1024xi1>
    %18 = vector.broadcast %6 : i32 to vector<8x1024xi32>
    %19 = arith.addi %8, %18 : vector<8x1024xi32>
    %20 = arith.select %17, %19, %8 : vector<8x1024xi1>, vector<8x1024xi32>
    %cst = arith.constant 0.000000e+00 : f32
    %21 = vector.broadcast %cst : f32 to vector<8x1024xf32>
    %c0_6 = arith.constant 0 : index
    %c0_7 = arith.constant 0 : index
    %c97 = arith.constant 97 : index
    %22 = vector.load %arg1[%c0_6, %c0_7, %c97] : memref<2x4x1152xf32, #tpu.memory_space<vmem>>, vector<1x4x1024xf32>
    %23 = vector.shape_cast %22 : vector<1x4x1024xf32> to vector<4x1024xf32>
    %24 = vector.extract_strided_slice %23 {offsets = [0, 0], sizes = [1, 1024], strides = [1, 1]} : vector<4x1024xf32> to vector<1x1024xf32>
    %25 = vector.extract_strided_slice %0 {offsets = [0, 0], sizes = [8, 1], strides = [1, 1]} : vector<8x36xf32> to vector<8x1xf32>
    %26 = vector.broadcast %24 : vector<1x1024xf32> to vector<8x1024xf32>
    %27 = vector.broadcast %25 : vector<8x1xf32> to vector<8x1024xf32>
    %28 = arith.mulf %26, %27 : vector<8x1024xf32>
    %29 = arith.addf %21, %28 : vector<8x1024xf32>
    %30 = vector.extract_strided_slice %23 {offsets = [1, 0], sizes = [1, 1024], strides = [1, 1]} : vector<4x1024xf32> to vector<1x1024xf32>
    %31 = vector.extract_strided_slice %0 {offsets = [0, 9], sizes = [8, 1], strides = [1, 1]} : vector<8x36xf32> to vector<8x1xf32>
    %32 = vector.broadcast %30 : vector<1x1024xf32> to vector<8x1024xf32>
    %33 = vector.broadcast %31 : vector<8x1xf32> to vector<8x1024xf32>
    %34 = arith.mulf %32, %33 : vector<8x1024xf32>
    %35 = arith.addf %29, %34 : vector<8x1024xf32>
    %36 = vector.extract_strided_slice %23 {offsets = [2, 0], sizes = [1, 1024], strides = [1, 1]} : vector<4x1024xf32> to vector<1x1024xf32>
    %37 = vector.extract_strided_slice %0 {offsets = [0, 18], sizes = [8, 1], strides = [1, 1]} : vector<8x36xf32> to vector<8x1xf32>
    %38 = vector.broadcast %36 : vector<1x1024xf32> to vector<8x1024xf32>
    %39 = vector.broadcast %37 : vector<8x1xf32> to vector<8x1024xf32>
    %40 = arith.mulf %38, %39 : vector<8x1024xf32>
    %41 = arith.addf %35, %40 : vector<8x1024xf32>
    %42 = vector.extract_strided_slice %23 {offsets = [3, 0], sizes = [1, 1024], strides = [1, 1]} : vector<4x1024xf32> to vector<1x1024xf32>
    %43 = vector.extract_strided_slice %0 {offsets = [0, 27], sizes = [8, 1], strides = [1, 1]} : vector<8x36xf32> to vector<8x1xf32>
    %44 = vector.broadcast %42 : vector<1x1024xf32> to vector<8x1024xf32>
    %45 = vector.broadcast %43 : vector<8x1xf32> to vector<8x1024xf32>
    %46 = arith.mulf %44, %45 : vector<8x1024xf32>
    %47 = arith.addf %41, %46 : vector<8x1024xf32>
    %c0_8 = arith.constant 0 : index
    %c0_9 = arith.constant 0 : index
    %c65 = arith.constant 65 : index
    %48 = vector.load %arg1[%c0_8, %c0_9, %c65] : memref<2x4x1152xf32, #tpu.memory_space<vmem>>, vector<1x4x1024xf32>
    %49 = vector.shape_cast %48 : vector<1x4x1024xf32> to vector<4x1024xf32>
    %50 = vector.extract_strided_slice %49 {offsets = [0, 0], sizes = [1, 1024], strides = [1, 1]} : vector<4x1024xf32> to vector<1x1024xf32>
    %51 = vector.extract_strided_slice %0 {offsets = [0, 3], sizes = [8, 1], strides = [1, 1]} : vector<8x36xf32> to vector<8x1xf32>
    %52 = vector.broadcast %50 : vector<1x1024xf32> to vector<8x1024xf32>
    %53 = vector.broadcast %51 : vector<8x1xf32> to vector<8x1024xf32>
    %54 = arith.mulf %52, %53 : vector<8x1024xf32>
    %55 = arith.addf %47, %54 : vector<8x1024xf32>
    %56 = vector.extract_strided_slice %49 {offsets = [1, 0], sizes = [1, 1024], strides = [1, 1]} : vector<4x1024xf32> to vector<1x1024xf32>
    %57 = vector.extract_strided_slice %0 {offsets = [0, 12], sizes = [8, 1], strides = [1, 1]} : vector<8x36xf32> to vector<8x1xf32>
    %58 = vector.broadcast %56 : vector<1x1024xf32> to vector<8x1024xf32>
    %59 = vector.broadcast %57 : vector<8x1xf32> to vector<8x1024xf32>
    %60 = arith.mulf %58, %59 : vector<8x1024xf32>
    %61 = arith.addf %55, %60 : vector<8x1024xf32>
    %62 = vector.extract_strided_slice %49 {offsets = [2, 0], sizes = [1, 1024], strides = [1, 1]} : vector<4x1024xf32> to vector<1x1024xf32>
    %63 = vector.extract_strided_slice %0 {offsets = [0, 21], sizes = [8, 1], strides = [1, 1]} : vector<8x36xf32> to vector<8x1xf32>
    %64 = vector.broadcast %62 : vector<1x1024xf32> to vector<8x1024xf32>
    %65 = vector.broadcast %63 : vector<8x1xf32> to vector<8x1024xf32>
    %66 = arith.mulf %64, %65 : vector<8x1024xf32>
    %67 = arith.addf %61, %66 : vector<8x1024xf32>
    %68 = vector.extract_strided_slice %49 {offsets = [3, 0], sizes = [1, 1024], strides = [1, 1]} : vector<4x1024xf32> to vector<1x1024xf32>
    %69 = vector.extract_strided_slice %0 {offsets = [0, 30], sizes = [8, 1], strides = [1, 1]} : vector<8x36xf32> to vector<8x1xf32>
    %70 = vector.broadcast %68 : vector<1x1024xf32> to vector<8x1024xf32>
    %71 = vector.broadcast %69 : vector<8x1xf32> to vector<8x1024xf32>
    %72 = arith.mulf %70, %71 : vector<8x1024xf32>
    %73 = arith.addf %67, %72 : vector<8x1024xf32>
    %c0_10 = arith.constant 0 : index
    %c0_11 = arith.constant 0 : index
    %c33 = arith.constant 33 : index
    %74 = vector.load %arg1[%c0_10, %c0_11, %c33] : memref<2x4x1152xf32, #tpu.memory_space<vmem>>, vector<1x4x1024xf32>
    %75 = vector.shape_cast %74 : vector<1x4x1024xf32> to vector<4x1024xf32>
    %76 = vector.extract_strided_slice %75 {offsets = [0, 0], sizes = [1, 1024], strides = [1, 1]} : vector<4x1024xf32> to vector<1x1024xf32>
    %77 = vector.extract_strided_slice %0 {offsets = [0, 6], sizes = [8, 1], strides = [1, 1]} : vector<8x36xf32> to vector<8x1xf32>
    %78 = vector.broadcast %76 : vector<1x1024xf32> to vector<8x1024xf32>
    %79 = vector.broadcast %77 : vector<8x1xf32> to vector<8x1024xf32>
    %80 = arith.mulf %78, %79 : vector<8x1024xf32>
    %81 = arith.addf %73, %80 : vector<8x1024xf32>
    %82 = vector.extract_strided_slice %75 {offsets = [1, 0], sizes = [1, 1024], strides = [1, 1]} : vector<4x1024xf32> to vector<1x1024xf32>
    %83 = vector.extract_strided_slice %0 {offsets = [0, 15], sizes = [8, 1], strides = [1, 1]} : vector<8x36xf32> to vector<8x1xf32>
    %84 = vector.broadcast %82 : vector<1x1024xf32> to vector<8x1024xf32>
    %85 = vector.broadcast %83 : vector<8x1xf32> to vector<8x1024xf32>
    %86 = arith.mulf %84, %85 : vector<8x1024xf32>
    %87 = arith.addf %81, %86 : vector<8x1024xf32>
    %88 = vector.extract_strided_slice %75 {offsets = [2, 0], sizes = [1, 1024], strides = [1, 1]} : vector<4x1024xf32> to vector<1x1024xf32>
    %89 = vector.extract_strided_slice %0 {offsets = [0, 24], sizes = [8, 1], strides = [1, 1]} : vector<8x36xf32> to vector<8x1xf32>
    %90 = vector.broadcast %88 : vector<1x1024xf32> to vector<8x1024xf32>
    %91 = vector.broadcast %89 : vector<8x1xf32> to vector<8x1024xf32>
    %92 = arith.mulf %90, %91 : vector<8x1024xf32>
    %93 = arith.addf %87, %92 : vector<8x1024xf32>
    %94 = vector.extract_strided_slice %75 {offsets = [3, 0], sizes = [1, 1024], strides = [1, 1]} : vector<4x1024xf32> to vector<1x1024xf32>
    %95 = vector.extract_strided_slice %0 {offsets = [0, 33], sizes = [8, 1], strides = [1, 1]} : vector<8x36xf32> to vector<8x1xf32>
    %96 = vector.broadcast %94 : vector<1x1024xf32> to vector<8x1024xf32>
    %97 = vector.broadcast %95 : vector<8x1xf32> to vector<8x1024xf32>
    %98 = arith.mulf %96, %97 : vector<8x1024xf32>
    %99 = arith.addf %93, %98 : vector<8x1024xf32>
    %c31_i32 = arith.constant 31 : i32
    %100 = vector.broadcast %c31_i32 : i32 to vector<8x1024xi32>
    %101 = arith.cmpi slt, %20, %100 : vector<8x1024xi32>
    %cst_12 = arith.constant 0.000000e+00 : f32
    %102 = vector.broadcast %cst_12 : f32 to vector<8x1024xf32>
    %103 = arith.select %101, %99, %102 : vector<8x1024xi1>, vector<8x1024xf32>
    %104 = arith.addf %3, %103 : vector<8x1024xf32>
    %c0_13 = arith.constant 0 : index
    %c0_14 = arith.constant 0 : index
    %c96 = arith.constant 96 : index
    %105 = vector.load %arg1[%c0_13, %c0_14, %c96] : memref<2x4x1152xf32, #tpu.memory_space<vmem>>, vector<1x4x1024xf32>
    %106 = vector.shape_cast %105 : vector<1x4x1024xf32> to vector<4x1024xf32>
    %107 = vector.extract_strided_slice %106 {offsets = [0, 0], sizes = [1, 1024], strides = [1, 1]} : vector<4x1024xf32> to vector<1x1024xf32>
    %108 = vector.extract_strided_slice %0 {offsets = [0, 1], sizes = [8, 1], strides = [1, 1]} : vector<8x36xf32> to vector<8x1xf32>
    %109 = vector.broadcast %107 : vector<1x1024xf32> to vector<8x1024xf32>
    %110 = vector.broadcast %108 : vector<8x1xf32> to vector<8x1024xf32>
    %111 = arith.mulf %109, %110 : vector<8x1024xf32>
    %112 = arith.addf %104, %111 : vector<8x1024xf32>
    %113 = vector.extract_strided_slice %106 {offsets = [1, 0], sizes = [1, 1024], strides = [1, 1]} : vector<4x1024xf32> to vector<1x1024xf32>
    %114 = vector.extract_strided_slice %0 {offsets = [0, 10], sizes = [8, 1], strides = [1, 1]} : vector<8x36xf32> to vector<8x1xf32>
    %115 = vector.broadcast %113 : vector<1x1024xf32> to vector<8x1024xf32>
    %116 = vector.broadcast %114 : vector<8x1xf32> to vector<8x1024xf32>
    %117 = arith.mulf %115, %116 : vector<8x1024xf32>
    %118 = arith.addf %112, %117 : vector<8x1024xf32>
    %119 = vector.extract_strided_slice %106 {offsets = [2, 0], sizes = [1, 1024], strides = [1, 1]} : vector<4x1024xf32> to vector<1x1024xf32>
    %120 = vector.extract_strided_slice %0 {offsets = [0, 19], sizes = [8, 1], strides = [1, 1]} : vector<8x36xf32> to vector<8x1xf32>
    %121 = vector.broadcast %119 : vector<1x1024xf32> to vector<8x1024xf32>
    %122 = vector.broadcast %120 : vector<8x1xf32> to vector<8x1024xf32>
    %123 = arith.mulf %121, %122 : vector<8x1024xf32>
    %124 = arith.addf %118, %123 : vector<8x1024xf32>
    %125 = vector.extract_strided_slice %106 {offsets = [3, 0], sizes = [1, 1024], strides = [1, 1]} : vector<4x1024xf32> to vector<1x1024xf32>
    %126 = vector.extract_strided_slice %0 {offsets = [0, 28], sizes = [8, 1], strides = [1, 1]} : vector<8x36xf32> to vector<8x1xf32>
    %127 = vector.broadcast %125 : vector<1x1024xf32> to vector<8x1024xf32>
    %128 = vector.broadcast %126 : vector<8x1xf32> to vector<8x1024xf32>
    %129 = arith.mulf %127, %128 : vector<8x1024xf32>
    %130 = arith.addf %124, %129 : vector<8x1024xf32>
    %c0_15 = arith.constant 0 : index
    %c0_16 = arith.constant 0 : index
    %c64 = arith.constant 64 : index
    %131 = vector.load %arg1[%c0_15, %c0_16, %c64] : memref<2x4x1152xf32, #tpu.memory_space<vmem>>, vector<1x4x1024xf32>
    %132 = vector.shape_cast %131 : vector<1x4x1024xf32> to vector<4x1024xf32>
    %133 = vector.extract_strided_slice %132 {offsets = [0, 0], sizes = [1, 1024], strides = [1, 1]} : vector<4x1024xf32> to vector<1x1024xf32>
    %134 = vector.extract_strided_slice %0 {offsets = [0, 4], sizes = [8, 1], strides = [1, 1]} : vector<8x36xf32> to vector<8x1xf32>
    %135 = vector.broadcast %133 : vector<1x1024xf32> to vector<8x1024xf32>
    %136 = vector.broadcast %134 : vector<8x1xf32> to vector<8x1024xf32>
    %137 = arith.mulf %135, %136 : vector<8x1024xf32>
    %138 = arith.addf %130, %137 : vector<8x1024xf32>
    %139 = vector.extract_strided_slice %132 {offsets = [1, 0], sizes = [1, 1024], strides = [1, 1]} : vector<4x1024xf32> to vector<1x1024xf32>
    %140 = vector.extract_strided_slice %0 {offsets = [0, 13], sizes = [8, 1], strides = [1, 1]} : vector<8x36xf32> to vector<8x1xf32>
    %141 = vector.broadcast %139 : vector<1x1024xf32> to vector<8x1024xf32>
    %142 = vector.broadcast %140 : vector<8x1xf32> to vector<8x1024xf32>
    %143 = arith.mulf %141, %142 : vector<8x1024xf32>
    %144 = arith.addf %138, %143 : vector<8x1024xf32>
    %145 = vector.extract_strided_slice %132 {offsets = [2, 0], sizes = [1, 1024], strides = [1, 1]} : vector<4x1024xf32> to vector<1x1024xf32>
    %146 = vector.extract_strided_slice %0 {offsets = [0, 22], sizes = [8, 1], strides = [1, 1]} : vector<8x36xf32> to vector<8x1xf32>
    %147 = vector.broadcast %145 : vector<1x1024xf32> to vector<8x1024xf32>
    %148 = vector.broadcast %146 : vector<8x1xf32> to vector<8x1024xf32>
    %149 = arith.mulf %147, %148 : vector<8x1024xf32>
    %150 = arith.addf %144, %149 : vector<8x1024xf32>
    %151 = vector.extract_strided_slice %132 {offsets = [3, 0], sizes = [1, 1024], strides = [1, 1]} : vector<4x1024xf32> to vector<1x1024xf32>
    %152 = vector.extract_strided_slice %0 {offsets = [0, 31], sizes = [8, 1], strides = [1, 1]} : vector<8x36xf32> to vector<8x1xf32>
    %153 = vector.broadcast %151 : vector<1x1024xf32> to vector<8x1024xf32>
    %154 = vector.broadcast %152 : vector<8x1xf32> to vector<8x1024xf32>
    %155 = arith.mulf %153, %154 : vector<8x1024xf32>
    %156 = arith.addf %150, %155 : vector<8x1024xf32>
    %c0_17 = arith.constant 0 : index
    %c0_18 = arith.constant 0 : index
    %c32 = arith.constant 32 : index
    %157 = vector.load %arg1[%c0_17, %c0_18, %c32] : memref<2x4x1152xf32, #tpu.memory_space<vmem>>, vector<1x4x1024xf32>
    %158 = vector.shape_cast %157 : vector<1x4x1024xf32> to vector<4x1024xf32>
    %159 = vector.extract_strided_slice %158 {offsets = [0, 0], sizes = [1, 1024], strides = [1, 1]} : vector<4x1024xf32> to vector<1x1024xf32>
    %160 = vector.extract_strided_slice %0 {offsets = [0, 7], sizes = [8, 1], strides = [1, 1]} : vector<8x36xf32> to vector<8x1xf32>
    %161 = vector.broadcast %159 : vector<1x1024xf32> to vector<8x1024xf32>
    %162 = vector.broadcast %160 : vector<8x1xf32> to vector<8x1024xf32>
    %163 = arith.mulf %161, %162 : vector<8x1024xf32>
    %164 = arith.addf %156, %163 : vector<8x1024xf32>
    %165 = vector.extract_strided_slice %158 {offsets = [1, 0], sizes = [1, 1024], strides = [1, 1]} : vector<4x1024xf32> to vector<1x1024xf32>
    %166 = vector.extract_strided_slice %0 {offsets = [0, 16], sizes = [8, 1], strides = [1, 1]} : vector<8x36xf32> to vector<8x1xf32>
    %167 = vector.broadcast %165 : vector<1x1024xf32> to vector<8x1024xf32>
    %168 = vector.broadcast %166 : vector<8x1xf32> to vector<8x1024xf32>
    %169 = arith.mulf %167, %168 : vector<8x1024xf32>
    %170 = arith.addf %164, %169 : vector<8x1024xf32>
    %171 = vector.extract_strided_slice %158 {offsets = [2, 0], sizes = [1, 1024], strides = [1, 1]} : vector<4x1024xf32> to vector<1x1024xf32>
    %172 = vector.extract_strided_slice %0 {offsets = [0, 25], sizes = [8, 1], strides = [1, 1]} : vector<8x36xf32> to vector<8x1xf32>
    %173 = vector.broadcast %171 : vector<1x1024xf32> to vector<8x1024xf32>
    %174 = vector.broadcast %172 : vector<8x1xf32> to vector<8x1024xf32>
    %175 = arith.mulf %173, %174 : vector<8x1024xf32>
    %176 = arith.addf %170, %175 : vector<8x1024xf32>
    %177 = vector.extract_strided_slice %158 {offsets = [3, 0], sizes = [1, 1024], strides = [1, 1]} : vector<4x1024xf32> to vector<1x1024xf32>
    %178 = vector.extract_strided_slice %0 {offsets = [0, 34], sizes = [8, 1], strides = [1, 1]} : vector<8x36xf32> to vector<8x1xf32>
    %179 = vector.broadcast %177 : vector<1x1024xf32> to vector<8x1024xf32>
    %180 = vector.broadcast %178 : vector<8x1xf32> to vector<8x1024xf32>
    %181 = arith.mulf %179, %180 : vector<8x1024xf32>
    %182 = arith.addf %176, %181 : vector<8x1024xf32>
    %c0_19 = arith.constant 0 : index
    %c0_20 = arith.constant 0 : index
    %c95 = arith.constant 95 : index
    %183 = vector.load %arg1[%c0_19, %c0_20, %c95] : memref<2x4x1152xf32, #tpu.memory_space<vmem>>, vector<1x4x1024xf32>
    %184 = vector.shape_cast %183 : vector<1x4x1024xf32> to vector<4x1024xf32>
    %185 = vector.extract_strided_slice %184 {offsets = [0, 0], sizes = [1, 1024], strides = [1, 1]} : vector<4x1024xf32> to vector<1x1024xf32>
    %186 = vector.extract_strided_slice %0 {offsets = [0, 2], sizes = [8, 1], strides = [1, 1]} : vector<8x36xf32> to vector<8x1xf32>
    %187 = vector.broadcast %185 : vector<1x1024xf32> to vector<8x1024xf32>
    %188 = vector.broadcast %186 : vector<8x1xf32> to vector<8x1024xf32>
    %189 = arith.mulf %187, %188 : vector<8x1024xf32>
    %190 = arith.addf %182, %189 : vector<8x1024xf32>
    %191 = vector.extract_strided_slice %184 {offsets = [1, 0], sizes = [1, 1024], strides = [1, 1]} : vector<4x1024xf32> to vector<1x1024xf32>
    %192 = vector.extract_strided_slice %0 {offsets = [0, 11], sizes = [8, 1], strides = [1, 1]} : vector<8x36xf32> to vector<8x1xf32>
    %193 = vector.broadcast %191 : vector<1x1024xf32> to vector<8x1024xf32>
    %194 = vector.broadcast %192 : vector<8x1xf32> to vector<8x1024xf32>
    %195 = arith.mulf %193, %194 : vector<8x1024xf32>
    %196 = arith.addf %190, %195 : vector<8x1024xf32>
    %197 = vector.extract_strided_slice %184 {offsets = [2, 0], sizes = [1, 1024], strides = [1, 1]} : vector<4x1024xf32> to vector<1x1024xf32>
    %198 = vector.extract_strided_slice %0 {offsets = [0, 20], sizes = [8, 1], strides = [1, 1]} : vector<8x36xf32> to vector<8x1xf32>
    %199 = vector.broadcast %197 : vector<1x1024xf32> to vector<8x1024xf32>
    %200 = vector.broadcast %198 : vector<8x1xf32> to vector<8x1024xf32>
    %201 = arith.mulf %199, %200 : vector<8x1024xf32>
    %202 = arith.addf %196, %201 : vector<8x1024xf32>
    %203 = vector.extract_strided_slice %184 {offsets = [3, 0], sizes = [1, 1024], strides = [1, 1]} : vector<4x1024xf32> to vector<1x1024xf32>
    %204 = vector.extract_strided_slice %0 {offsets = [0, 29], sizes = [8, 1], strides = [1, 1]} : vector<8x36xf32> to vector<8x1xf32>
    %205 = vector.broadcast %203 : vector<1x1024xf32> to vector<8x1024xf32>
    %206 = vector.broadcast %204 : vector<8x1xf32> to vector<8x1024xf32>
    %207 = arith.mulf %205, %206 : vector<8x1024xf32>
    %208 = arith.addf %202, %207 : vector<8x1024xf32>
    %c0_21 = arith.constant 0 : index
    %c0_22 = arith.constant 0 : index
    %c63 = arith.constant 63 : index
    %209 = vector.load %arg1[%c0_21, %c0_22, %c63] : memref<2x4x1152xf32, #tpu.memory_space<vmem>>, vector<1x4x1024xf32>
    %210 = vector.shape_cast %209 : vector<1x4x1024xf32> to vector<4x1024xf32>
    %211 = vector.extract_strided_slice %210 {offsets = [0, 0], sizes = [1, 1024], strides = [1, 1]} : vector<4x1024xf32> to vector<1x1024xf32>
    %212 = vector.extract_strided_slice %0 {offsets = [0, 5], sizes = [8, 1], strides = [1, 1]} : vector<8x36xf32> to vector<8x1xf32>
    %213 = vector.broadcast %211 : vector<1x1024xf32> to vector<8x1024xf32>
    %214 = vector.broadcast %212 : vector<8x1xf32> to vector<8x1024xf32>
    %215 = arith.mulf %213, %214 : vector<8x1024xf32>
    %216 = arith.addf %208, %215 : vector<8x1024xf32>
    %217 = vector.extract_strided_slice %210 {offsets = [1, 0], sizes = [1, 1024], strides = [1, 1]} : vector<4x1024xf32> to vector<1x1024xf32>
    %218 = vector.extract_strided_slice %0 {offsets = [0, 14], sizes = [8, 1], strides = [1, 1]} : vector<8x36xf32> to vector<8x1xf32>
    %219 = vector.broadcast %217 : vector<1x1024xf32> to vector<8x1024xf32>
    %220 = vector.broadcast %218 : vector<8x1xf32> to vector<8x1024xf32>
    %221 = arith.mulf %219, %220 : vector<8x1024xf32>
    %222 = arith.addf %216, %221 : vector<8x1024xf32>
    %223 = vector.extract_strided_slice %210 {offsets = [2, 0], sizes = [1, 1024], strides = [1, 1]} : vector<4x1024xf32> to vector<1x1024xf32>
    %224 = vector.extract_strided_slice %0 {offsets = [0, 23], sizes = [8, 1], strides = [1, 1]} : vector<8x36xf32> to vector<8x1xf32>
    %225 = vector.broadcast %223 : vector<1x1024xf32> to vector<8x1024xf32>
    %226 = vector.broadcast %224 : vector<8x1xf32> to vector<8x1024xf32>
    %227 = arith.mulf %225, %226 : vector<8x1024xf32>
    %228 = arith.addf %222, %227 : vector<8x1024xf32>
    %229 = vector.extract_strided_slice %210 {offsets = [3, 0], sizes = [1, 1024], strides = [1, 1]} : vector<4x1024xf32> to vector<1x1024xf32>
    %230 = vector.extract_strided_slice %0 {offsets = [0, 32], sizes = [8, 1], strides = [1, 1]} : vector<8x36xf32> to vector<8x1xf32>
    %231 = vector.broadcast %229 : vector<1x1024xf32> to vector<8x1024xf32>
    %232 = vector.broadcast %230 : vector<8x1xf32> to vector<8x1024xf32>
    %233 = arith.mulf %231, %232 : vector<8x1024xf32>
    %234 = arith.addf %228, %233 : vector<8x1024xf32>
    %c0_23 = arith.constant 0 : index
    %c0_24 = arith.constant 0 : index
    %c31 = arith.constant 31 : index
    %235 = vector.load %arg1[%c0_23, %c0_24, %c31] : memref<2x4x1152xf32, #tpu.memory_space<vmem>>, vector<1x4x1024xf32>
    %236 = vector.shape_cast %235 : vector<1x4x1024xf32> to vector<4x1024xf32>
    %237 = vector.extract_strided_slice %236 {offsets = [0, 0], sizes = [1, 1024], strides = [1, 1]} : vector<4x1024xf32> to vector<1x1024xf32>
    %238 = vector.extract_strided_slice %0 {offsets = [0, 8], sizes = [8, 1], strides = [1, 1]} : vector<8x36xf32> to vector<8x1xf32>
    %239 = vector.broadcast %237 : vector<1x1024xf32> to vector<8x1024xf32>
    %240 = vector.broadcast %238 : vector<8x1xf32> to vector<8x1024xf32>
    %241 = arith.mulf %239, %240 : vector<8x1024xf32>
    %242 = arith.addf %234, %241 : vector<8x1024xf32>
    %243 = vector.extract_strided_slice %236 {offsets = [1, 0], sizes = [1, 1024], strides = [1, 1]} : vector<4x1024xf32> to vector<1x1024xf32>
    %244 = vector.extract_strided_slice %0 {offsets = [0, 17], sizes = [8, 1], strides = [1, 1]} : vector<8x36xf32> to vector<8x1xf32>
    %245 = vector.broadcast %243 : vector<1x1024xf32> to vector<8x1024xf32>
    %246 = vector.broadcast %244 : vector<8x1xf32> to vector<8x1024xf32>
    %247 = arith.mulf %245, %246 : vector<8x1024xf32>
    %248 = arith.addf %242, %247 : vector<8x1024xf32>
    %249 = vector.extract_strided_slice %236 {offsets = [2, 0], sizes = [1, 1024], strides = [1, 1]} : vector<4x1024xf32> to vector<1x1024xf32>
    %250 = vector.extract_strided_slice %0 {offsets = [0, 26], sizes = [8, 1], strides = [1, 1]} : vector<8x36xf32> to vector<8x1xf32>
    %251 = vector.broadcast %249 : vector<1x1024xf32> to vector<8x1024xf32>
    %252 = vector.broadcast %250 : vector<8x1xf32> to vector<8x1024xf32>
    %253 = arith.mulf %251, %252 : vector<8x1024xf32>
    %254 = arith.addf %248, %253 : vector<8x1024xf32>
    %255 = vector.extract_strided_slice %236 {offsets = [3, 0], sizes = [1, 1024], strides = [1, 1]} : vector<4x1024xf32> to vector<1x1024xf32>
    %256 = vector.extract_strided_slice %0 {offsets = [0, 35], sizes = [8, 1], strides = [1, 1]} : vector<8x36xf32> to vector<8x1xf32>
    %257 = vector.broadcast %255 : vector<1x1024xf32> to vector<8x1024xf32>
    %258 = vector.broadcast %256 : vector<8x1xf32> to vector<8x1024xf32>
    %259 = arith.mulf %257, %258 : vector<8x1024xf32>
    %260 = arith.addf %254, %259 : vector<8x1024xf32>
    %cst_25 = arith.constant 0.000000e+00 : f32
    %261 = vector.broadcast %cst_25 : f32 to vector<8x1024xf32>
    %262 = arith.maximumf %260, %261 : vector<8x1024xf32>
    %c0_26 = arith.constant 0 : index
    %c0_27 = arith.constant 0 : index
    %c0_28 = arith.constant 0 : index
    %263 = vector.load %arg4[%c0_26, %c0_27, %c0_28] : memref<2x8x1024xf32, #tpu.memory_space<vmem>>, vector<1x8x1024xf32>
    %264 = vector.shape_cast %263 : vector<1x8x1024xf32> to vector<8x1024xf32>
    %265 = vector.shape_cast %262 : vector<8x1024xf32> to vector<1x8x1024xf32>
    tpu.vector_store %arg4[%c0_26, %c0_27, %c0_28], %265 {strides = array<i32>} : memref<2x8x1024xf32, #tpu.memory_space<vmem>>, vector<1x8x1024xf32>,
    %cst_29 = arith.constant 0.000000e+00 : f32
    %266 = vector.broadcast %cst_29 : f32 to vector<8x1024xf32>
    %c1 = arith.constant 1 : index
    %c0_30 = arith.constant 0 : index
    %c97_31 = arith.constant 97 : index
    %267 = vector.load %arg1[%c1, %c0_30, %c97_31] : memref<2x4x1152xf32, #tpu.memory_space<vmem>>, vector<1x4x1024xf32>
    %268 = vector.shape_cast %267 : vector<1x4x1024xf32> to vector<4x1024xf32>
    %269 = vector.extract_strided_slice %268 {offsets = [0, 0], sizes = [1, 1024], strides = [1, 1]} : vector<4x1024xf32> to vector<1x1024xf32>
    %270 = vector.extract_strided_slice %0 {offsets = [0, 0], sizes = [8, 1], strides = [1, 1]} : vector<8x36xf32> to vector<8x1xf32>
    %271 = vector.broadcast %269 : vector<1x1024xf32> to vector<8x1024xf32>
    %272 = vector.broadcast %270 : vector<8x1xf32> to vector<8x1024xf32>
    %273 = arith.mulf %271, %272 : vector<8x1024xf32>
    %274 = arith.addf %266, %273 : vector<8x1024xf32>
    %275 = vector.extract_strided_slice %268 {offsets = [1, 0], sizes = [1, 1024], strides = [1, 1]} : vector<4x1024xf32> to vector<1x1024xf32>
    %276 = vector.extract_strided_slice %0 {offsets = [0, 9], sizes = [8, 1], strides = [1, 1]} : vector<8x36xf32> to vector<8x1xf32>
    %277 = vector.broadcast %275 : vector<1x1024xf32> to vector<8x1024xf32>
    %278 = vector.broadcast %276 : vector<8x1xf32> to vector<8x1024xf32>
    %279 = arith.mulf %277, %278 : vector<8x1024xf32>
    %280 = arith.addf %274, %279 : vector<8x1024xf32>
    %281 = vector.extract_strided_slice %268 {offsets = [2, 0], sizes = [1, 1024], strides = [1, 1]} : vector<4x1024xf32> to vector<1x1024xf32>
    %282 = vector.extract_strided_slice %0 {offsets = [0, 18], sizes = [8, 1], strides = [1, 1]} : vector<8x36xf32> to vector<8x1xf32>
    %283 = vector.broadcast %281 : vector<1x1024xf32> to vector<8x1024xf32>
    %284 = vector.broadcast %282 : vector<8x1xf32> to vector<8x1024xf32>
    %285 = arith.mulf %283, %284 : vector<8x1024xf32>
    %286 = arith.addf %280, %285 : vector<8x1024xf32>
    %287 = vector.extract_strided_slice %268 {offsets = [3, 0], sizes = [1, 1024], strides = [1, 1]} : vector<4x1024xf32> to vector<1x1024xf32>
    %288 = vector.extract_strided_slice %0 {offsets = [0, 27], sizes = [8, 1], strides = [1, 1]} : vector<8x36xf32> to vector<8x1xf32>
    %289 = vector.broadcast %287 : vector<1x1024xf32> to vector<8x1024xf32>
    %290 = vector.broadcast %288 : vector<8x1xf32> to vector<8x1024xf32>
    %291 = arith.mulf %289, %290 : vector<8x1024xf32>
    %292 = arith.addf %286, %291 : vector<8x1024xf32>
    %c1_32 = arith.constant 1 : index
    %c0_33 = arith.constant 0 : index
    %c65_34 = arith.constant 65 : index
    %293 = vector.load %arg1[%c1_32, %c0_33, %c65_34] : memref<2x4x1152xf32, #tpu.memory_space<vmem>>, vector<1x4x1024xf32>
    %294 = vector.shape_cast %293 : vector<1x4x1024xf32> to vector<4x1024xf32>
    %295 = vector.extract_strided_slice %294 {offsets = [0, 0], sizes = [1, 1024], strides = [1, 1]} : vector<4x1024xf32> to vector<1x1024xf32>
    %296 = vector.extract_strided_slice %0 {offsets = [0, 3], sizes = [8, 1], strides = [1, 1]} : vector<8x36xf32> to vector<8x1xf32>
    %297 = vector.broadcast %295 : vector<1x1024xf32> to vector<8x1024xf32>
    %298 = vector.broadcast %296 : vector<8x1xf32> to vector<8x1024xf32>
    %299 = arith.mulf %297, %298 : vector<8x1024xf32>
    %300 = arith.addf %292, %299 : vector<8x1024xf32>
    %301 = vector.extract_strided_slice %294 {offsets = [1, 0], sizes = [1, 1024], strides = [1, 1]} : vector<4x1024xf32> to vector<1x1024xf32>
    %302 = vector.extract_strided_slice %0 {offsets = [0, 12], sizes = [8, 1], strides = [1, 1]} : vector<8x36xf32> to vector<8x1xf32>
    %303 = vector.broadcast %301 : vector<1x1024xf32> to vector<8x1024xf32>
    %304 = vector.broadcast %302 : vector<8x1xf32> to vector<8x1024xf32>
    %305 = arith.mulf %303, %304 : vector<8x1024xf32>
    %306 = arith.addf %300, %305 : vector<8x1024xf32>
    %307 = vector.extract_strided_slice %294 {offsets = [2, 0], sizes = [1, 1024], strides = [1, 1]} : vector<4x1024xf32> to vector<1x1024xf32>
    %308 = vector.extract_strided_slice %0 {offsets = [0, 21], sizes = [8, 1], strides = [1, 1]} : vector<8x36xf32> to vector<8x1xf32>
    %309 = vector.broadcast %307 : vector<1x1024xf32> to vector<8x1024xf32>
    %310 = vector.broadcast %308 : vector<8x1xf32> to vector<8x1024xf32>
    %311 = arith.mulf %309, %310 : vector<8x1024xf32>
    %312 = arith.addf %306, %311 : vector<8x1024xf32>
    %313 = vector.extract_strided_slice %294 {offsets = [3, 0], sizes = [1, 1024], strides = [1, 1]} : vector<4x1024xf32> to vector<1x1024xf32>
    %314 = vector.extract_strided_slice %0 {offsets = [0, 30], sizes = [8, 1], strides = [1, 1]} : vector<8x36xf32> to vector<8x1xf32>
    %315 = vector.broadcast %313 : vector<1x1024xf32> to vector<8x1024xf32>
    %316 = vector.broadcast %314 : vector<8x1xf32> to vector<8x1024xf32>
    %317 = arith.mulf %315, %316 : vector<8x1024xf32>
    %318 = arith.addf %312, %317 : vector<8x1024xf32>
    %c1_35 = arith.constant 1 : index
    %c0_36 = arith.constant 0 : index
    %c33_37 = arith.constant 33 : index
    %319 = vector.load %arg1[%c1_35, %c0_36, %c33_37] : memref<2x4x1152xf32, #tpu.memory_space<vmem>>, vector<1x4x1024xf32>
    %320 = vector.shape_cast %319 : vector<1x4x1024xf32> to vector<4x1024xf32>
    %321 = vector.extract_strided_slice %320 {offsets = [0, 0], sizes = [1, 1024], strides = [1, 1]} : vector<4x1024xf32> to vector<1x1024xf32>
    %322 = vector.extract_strided_slice %0 {offsets = [0, 6], sizes = [8, 1], strides = [1, 1]} : vector<8x36xf32> to vector<8x1xf32>
    %323 = vector.broadcast %321 : vector<1x1024xf32> to vector<8x1024xf32>
    %324 = vector.broadcast %322 : vector<8x1xf32> to vector<8x1024xf32>
    %325 = arith.mulf %323, %324 : vector<8x1024xf32>
    %326 = arith.addf %318, %325 : vector<8x1024xf32>
    %327 = vector.extract_strided_slice %320 {offsets = [1, 0], sizes = [1, 1024], strides = [1, 1]} : vector<4x1024xf32> to vector<1x1024xf32>
    %328 = vector.extract_strided_slice %0 {offsets = [0, 15], sizes = [8, 1], strides = [1, 1]} : vector<8x36xf32> to vector<8x1xf32>
    %329 = vector.broadcast %327 : vector<1x1024xf32> to vector<8x1024xf32>
    %330 = vector.broadcast %328 : vector<8x1xf32> to vector<8x1024xf32>
    %331 = arith.mulf %329, %330 : vector<8x1024xf32>
    %332 = arith.addf %326, %331 : vector<8x1024xf32>
    %333 = vector.extract_strided_slice %320 {offsets = [2, 0], sizes = [1, 1024], strides = [1, 1]} : vector<4x1024xf32> to vector<1x1024xf32>
    %334 = vector.extract_strided_slice %0 {offsets = [0, 24], sizes = [8, 1], strides = [1, 1]} : vector<8x36xf32> to vector<8x1xf32>
    %335 = vector.broadcast %333 : vector<1x1024xf32> to vector<8x1024xf32>
    %336 = vector.broadcast %334 : vector<8x1xf32> to vector<8x1024xf32>
    %337 = arith.mulf %335, %336 : vector<8x1024xf32>
    %338 = arith.addf %332, %337 : vector<8x1024xf32>
    %339 = vector.extract_strided_slice %320 {offsets = [3, 0], sizes = [1, 1024], strides = [1, 1]} : vector<4x1024xf32> to vector<1x1024xf32>
    %340 = vector.extract_strided_slice %0 {offsets = [0, 33], sizes = [8, 1], strides = [1, 1]} : vector<8x36xf32> to vector<8x1xf32>
    %341 = vector.broadcast %339 : vector<1x1024xf32> to vector<8x1024xf32>
    %342 = vector.broadcast %340 : vector<8x1xf32> to vector<8x1024xf32>
    %343 = arith.mulf %341, %342 : vector<8x1024xf32>
    %344 = arith.addf %338, %343 : vector<8x1024xf32>
    %c31_i32_38 = arith.constant 31 : i32
    %345 = vector.broadcast %c31_i32_38 : i32 to vector<8x1024xi32>
    %346 = arith.cmpi slt, %20, %345 : vector<8x1024xi32>
    %cst_39 = arith.constant 0.000000e+00 : f32
    %347 = vector.broadcast %cst_39 : f32 to vector<8x1024xf32>
    %348 = arith.select %346, %344, %347 : vector<8x1024xi1>, vector<8x1024xf32>
    %349 = arith.addf %3, %348 : vector<8x1024xf32>
    %c1_40 = arith.constant 1 : index
    %c0_41 = arith.constant 0 : index
    %c96_42 = arith.constant 96 : index
    %350 = vector.load %arg1[%c1_40, %c0_41, %c96_42] : memref<2x4x1152xf32, #tpu.memory_space<vmem>>, vector<1x4x1024xf32>
    %351 = vector.shape_cast %350 : vector<1x4x1024xf32> to vector<4x1024xf32>
    %352 = vector.extract_strided_slice %351 {offsets = [0, 0], sizes = [1, 1024], strides = [1, 1]} : vector<4x1024xf32> to vector<1x1024xf32>
    %353 = vector.extract_strided_slice %0 {offsets = [0, 1], sizes = [8, 1], strides = [1, 1]} : vector<8x36xf32> to vector<8x1xf32>
    %354 = vector.broadcast %352 : vector<1x1024xf32> to vector<8x1024xf32>
    %355 = vector.broadcast %353 : vector<8x1xf32> to vector<8x1024xf32>
    %356 = arith.mulf %354, %355 : vector<8x1024xf32>
    %357 = arith.addf %349, %356 : vector<8x1024xf32>
    %358 = vector.extract_strided_slice %351 {offsets = [1, 0], sizes = [1, 1024], strides = [1, 1]} : vector<4x1024xf32> to vector<1x1024xf32>
    %359 = vector.extract_strided_slice %0 {offsets = [0, 10], sizes = [8, 1], strides = [1, 1]} : vector<8x36xf32> to vector<8x1xf32>
    %360 = vector.broadcast %358 : vector<1x1024xf32> to vector<8x1024xf32>
    %361 = vector.broadcast %359 : vector<8x1xf32> to vector<8x1024xf32>
    %362 = arith.mulf %360, %361 : vector<8x1024xf32>
    %363 = arith.addf %357, %362 : vector<8x1024xf32>
    %364 = vector.extract_strided_slice %351 {offsets = [2, 0], sizes = [1, 1024], strides = [1, 1]} : vector<4x1024xf32> to vector<1x1024xf32>
    %365 = vector.extract_strided_slice %0 {offsets = [0, 19], sizes = [8, 1], strides = [1, 1]} : vector<8x36xf32> to vector<8x1xf32>
    %366 = vector.broadcast %364 : vector<1x1024xf32> to vector<8x1024xf32>
    %367 = vector.broadcast %365 : vector<8x1xf32> to vector<8x1024xf32>
    %368 = arith.mulf %366, %367 : vector<8x1024xf32>
    %369 = arith.addf %363, %368 : vector<8x1024xf32>
    %370 = vector.extract_strided_slice %351 {offsets = [3, 0], sizes = [1, 1024], strides = [1, 1]} : vector<4x1024xf32> to vector<1x1024xf32>
    %371 = vector.extract_strided_slice %0 {offsets = [0, 28], sizes = [8, 1], strides = [1, 1]} : vector<8x36xf32> to vector<8x1xf32>
    %372 = vector.broadcast %370 : vector<1x1024xf32> to vector<8x1024xf32>
    %373 = vector.broadcast %371 : vector<8x1xf32> to vector<8x1024xf32>
    %374 = arith.mulf %372, %373 : vector<8x1024xf32>
    %375 = arith.addf %369, %374 : vector<8x1024xf32>
    %c1_43 = arith.constant 1 : index
    %c0_44 = arith.constant 0 : index
    %c64_45 = arith.constant 64 : index
    %376 = vector.load %arg1[%c1_43, %c0_44, %c64_45] : memref<2x4x1152xf32, #tpu.memory_space<vmem>>, vector<1x4x1024xf32>
    %377 = vector.shape_cast %376 : vector<1x4x1024xf32> to vector<4x1024xf32>
    %378 = vector.extract_strided_slice %377 {offsets = [0, 0], sizes = [1, 1024], strides = [1, 1]} : vector<4x1024xf32> to vector<1x1024xf32>
    %379 = vector.extract_strided_slice %0 {offsets = [0, 4], sizes = [8, 1], strides = [1, 1]} : vector<8x36xf32> to vector<8x1xf32>
    %380 = vector.broadcast %378 : vector<1x1024xf32> to vector<8x1024xf32>
    %381 = vector.broadcast %379 : vector<8x1xf32> to vector<8x1024xf32>
    %382 = arith.mulf %380, %381 : vector<8x1024xf32>
    %383 = arith.addf %375, %382 : vector<8x1024xf32>
    %384 = vector.extract_strided_slice %377 {offsets = [1, 0], sizes = [1, 1024], strides = [1, 1]} : vector<4x1024xf32> to vector<1x1024xf32>
    %385 = vector.extract_strided_slice %0 {offsets = [0, 13], sizes = [8, 1], strides = [1, 1]} : vector<8x36xf32> to vector<8x1xf32>
    %386 = vector.broadcast %384 : vector<1x1024xf32> to vector<8x1024xf32>
    %387 = vector.broadcast %385 : vector<8x1xf32> to vector<8x1024xf32>
    %388 = arith.mulf %386, %387 : vector<8x1024xf32>
    %389 = arith.addf %383, %388 : vector<8x1024xf32>
    %390 = vector.extract_strided_slice %377 {offsets = [2, 0], sizes = [1, 1024], strides = [1, 1]} : vector<4x1024xf32> to vector<1x1024xf32>
    %391 = vector.extract_strided_slice %0 {offsets = [0, 22], sizes = [8, 1], strides = [1, 1]} : vector<8x36xf32> to vector<8x1xf32>
    %392 = vector.broadcast %390 : vector<1x1024xf32> to vector<8x1024xf32>
    %393 = vector.broadcast %391 : vector<8x1xf32> to vector<8x1024xf32>
    %394 = arith.mulf %392, %393 : vector<8x1024xf32>
    %395 = arith.addf %389, %394 : vector<8x1024xf32>
    %396 = vector.extract_strided_slice %377 {offsets = [3, 0], sizes = [1, 1024], strides = [1, 1]} : vector<4x1024xf32> to vector<1x1024xf32>
    %397 = vector.extract_strided_slice %0 {offsets = [0, 31], sizes = [8, 1], strides = [1, 1]} : vector<8x36xf32> to vector<8x1xf32>
    %398 = vector.broadcast %396 : vector<1x1024xf32> to vector<8x1024xf32>
    %399 = vector.broadcast %397 : vector<8x1xf32> to vector<8x1024xf32>
    %400 = arith.mulf %398, %399 : vector<8x1024xf32>
    %401 = arith.addf %395, %400 : vector<8x1024xf32>
    %c1_46 = arith.constant 1 : index
    %c0_47 = arith.constant 0 : index
    %c32_48 = arith.constant 32 : index
    %402 = vector.load %arg1[%c1_46, %c0_47, %c32_48] : memref<2x4x1152xf32, #tpu.memory_space<vmem>>, vector<1x4x1024xf32>
    %403 = vector.shape_cast %402 : vector<1x4x1024xf32> to vector<4x1024xf32>
    %404 = vector.extract_strided_slice %403 {offsets = [0, 0], sizes = [1, 1024], strides = [1, 1]} : vector<4x1024xf32> to vector<1x1024xf32>
    %405 = vector.extract_strided_slice %0 {offsets = [0, 7], sizes = [8, 1], strides = [1, 1]} : vector<8x36xf32> to vector<8x1xf32>
    %406 = vector.broadcast %404 : vector<1x1024xf32> to vector<8x1024xf32>
    %407 = vector.broadcast %405 : vector<8x1xf32> to vector<8x1024xf32>
    %408 = arith.mulf %406, %407 : vector<8x1024xf32>
    %409 = arith.addf %401, %408 : vector<8x1024xf32>
    %410 = vector.extract_strided_slice %403 {offsets = [1, 0], sizes = [1, 1024], strides = [1, 1]} : vector<4x1024xf32> to vector<1x1024xf32>
    %411 = vector.extract_strided_slice %0 {offsets = [0, 16], sizes = [8, 1], strides = [1, 1]} : vector<8x36xf32> to vector<8x1xf32>
    %412 = vector.broadcast %410 : vector<1x1024xf32> to vector<8x1024xf32>
    %413 = vector.broadcast %411 : vector<8x1xf32> to vector<8x1024xf32>
    %414 = arith.mulf %412, %413 : vector<8x1024xf32>
    %415 = arith.addf %409, %414 : vector<8x1024xf32>
    %416 = vector.extract_strided_slice %403 {offsets = [2, 0], sizes = [1, 1024], strides = [1, 1]} : vector<4x1024xf32> to vector<1x1024xf32>
    %417 = vector.extract_strided_slice %0 {offsets = [0, 25], sizes = [8, 1], strides = [1, 1]} : vector<8x36xf32> to vector<8x1xf32>
    %418 = vector.broadcast %416 : vector<1x1024xf32> to vector<8x1024xf32>
    %419 = vector.broadcast %417 : vector<8x1xf32> to vector<8x1024xf32>
    %420 = arith.mulf %418, %419 : vector<8x1024xf32>
    %421 = arith.addf %415, %420 : vector<8x1024xf32>
    %422 = vector.extract_strided_slice %403 {offsets = [3, 0], sizes = [1, 1024], strides = [1, 1]} : vector<4x1024xf32> to vector<1x1024xf32>
    %423 = vector.extract_strided_slice %0 {offsets = [0, 34], sizes = [8, 1], strides = [1, 1]} : vector<8x36xf32> to vector<8x1xf32>
    %424 = vector.broadcast %422 : vector<1x1024xf32> to vector<8x1024xf32>
    %425 = vector.broadcast %423 : vector<8x1xf32> to vector<8x1024xf32>
    %426 = arith.mulf %424, %425 : vector<8x1024xf32>
    %427 = arith.addf %421, %426 : vector<8x1024xf32>
    %c1_49 = arith.constant 1 : index
    %c0_50 = arith.constant 0 : index
    %c95_51 = arith.constant 95 : index
    %428 = vector.load %arg1[%c1_49, %c0_50, %c95_51] : memref<2x4x1152xf32, #tpu.memory_space<vmem>>, vector<1x4x1024xf32>
    %429 = vector.shape_cast %428 : vector<1x4x1024xf32> to vector<4x1024xf32>
    %430 = vector.extract_strided_slice %429 {offsets = [0, 0], sizes = [1, 1024], strides = [1, 1]} : vector<4x1024xf32> to vector<1x1024xf32>
    %431 = vector.extract_strided_slice %0 {offsets = [0, 2], sizes = [8, 1], strides = [1, 1]} : vector<8x36xf32> to vector<8x1xf32>
    %432 = vector.broadcast %430 : vector<1x1024xf32> to vector<8x1024xf32>
    %433 = vector.broadcast %431 : vector<8x1xf32> to vector<8x1024xf32>
    %434 = arith.mulf %432, %433 : vector<8x1024xf32>
    %435 = arith.addf %427, %434 : vector<8x1024xf32>
    %436 = vector.extract_strided_slice %429 {offsets = [1, 0], sizes = [1, 1024], strides = [1, 1]} : vector<4x1024xf32> to vector<1x1024xf32>
    %437 = vector.extract_strided_slice %0 {offsets = [0, 11], sizes = [8, 1], strides = [1, 1]} : vector<8x36xf32> to vector<8x1xf32>
    %438 = vector.broadcast %436 : vector<1x1024xf32> to vector<8x1024xf32>
    %439 = vector.broadcast %437 : vector<8x1xf32> to vector<8x1024xf32>
    %440 = arith.mulf %438, %439 : vector<8x1024xf32>
    %441 = arith.addf %435, %440 : vector<8x1024xf32>
    %442 = vector.extract_strided_slice %429 {offsets = [2, 0], sizes = [1, 1024], strides = [1, 1]} : vector<4x1024xf32> to vector<1x1024xf32>
    %443 = vector.extract_strided_slice %0 {offsets = [0, 20], sizes = [8, 1], strides = [1, 1]} : vector<8x36xf32> to vector<8x1xf32>
    %444 = vector.broadcast %442 : vector<1x1024xf32> to vector<8x1024xf32>
    %445 = vector.broadcast %443 : vector<8x1xf32> to vector<8x1024xf32>
    %446 = arith.mulf %444, %445 : vector<8x1024xf32>
    %447 = arith.addf %441, %446 : vector<8x1024xf32>
    %448 = vector.extract_strided_slice %429 {offsets = [3, 0], sizes = [1, 1024], strides = [1, 1]} : vector<4x1024xf32> to vector<1x1024xf32>
    %449 = vector.extract_strided_slice %0 {offsets = [0, 29], sizes = [8, 1], strides = [1, 1]} : vector<8x36xf32> to vector<8x1xf32>
    %450 = vector.broadcast %448 : vector<1x1024xf32> to vector<8x1024xf32>
    %451 = vector.broadcast %449 : vector<8x1xf32> to vector<8x1024xf32>
    %452 = arith.mulf %450, %451 : vector<8x1024xf32>
    %453 = arith.addf %447, %452 : vector<8x1024xf32>
    %c1_52 = arith.constant 1 : index
    %c0_53 = arith.constant 0 : index
    %c63_54 = arith.constant 63 : index
    %454 = vector.load %arg1[%c1_52, %c0_53, %c63_54] : memref<2x4x1152xf32, #tpu.memory_space<vmem>>, vector<1x4x1024xf32>
    %455 = vector.shape_cast %454 : vector<1x4x1024xf32> to vector<4x1024xf32>
    %456 = vector.extract_strided_slice %455 {offsets = [0, 0], sizes = [1, 1024], strides = [1, 1]} : vector<4x1024xf32> to vector<1x1024xf32>
    %457 = vector.extract_strided_slice %0 {offsets = [0, 5], sizes = [8, 1], strides = [1, 1]} : vector<8x36xf32> to vector<8x1xf32>
    %458 = vector.broadcast %456 : vector<1x1024xf32> to vector<8x1024xf32>
    %459 = vector.broadcast %457 : vector<8x1xf32> to vector<8x1024xf32>
    %460 = arith.mulf %458, %459 : vector<8x1024xf32>
    %461 = arith.addf %453, %460 : vector<8x1024xf32>
    %462 = vector.extract_strided_slice %455 {offsets = [1, 0], sizes = [1, 1024], strides = [1, 1]} : vector<4x1024xf32> to vector<1x1024xf32>
    %463 = vector.extract_strided_slice %0 {offsets = [0, 14], sizes = [8, 1], strides = [1, 1]} : vector<8x36xf32> to vector<8x1xf32>
    %464 = vector.broadcast %462 : vector<1x1024xf32> to vector<8x1024xf32>
    %465 = vector.broadcast %463 : vector<8x1xf32> to vector<8x1024xf32>
    %466 = arith.mulf %464, %465 : vector<8x1024xf32>
    %467 = arith.addf %461, %466 : vector<8x1024xf32>
    %468 = vector.extract_strided_slice %455 {offsets = [2, 0], sizes = [1, 1024], strides = [1, 1]} : vector<4x1024xf32> to vector<1x1024xf32>
    %469 = vector.extract_strided_slice %0 {offsets = [0, 23], sizes = [8, 1], strides = [1, 1]} : vector<8x36xf32> to vector<8x1xf32>
    %470 = vector.broadcast %468 : vector<1x1024xf32> to vector<8x1024xf32>
    %471 = vector.broadcast %469 : vector<8x1xf32> to vector<8x1024xf32>
    %472 = arith.mulf %470, %471 : vector<8x1024xf32>
    %473 = arith.addf %467, %472 : vector<8x1024xf32>
    %474 = vector.extract_strided_slice %455 {offsets = [3, 0], sizes = [1, 1024], strides = [1, 1]} : vector<4x1024xf32> to vector<1x1024xf32>
    %475 = vector.extract_strided_slice %0 {offsets = [0, 32], sizes = [8, 1], strides = [1, 1]} : vector<8x36xf32> to vector<8x1xf32>
    %476 = vector.broadcast %474 : vector<1x1024xf32> to vector<8x1024xf32>
    %477 = vector.broadcast %475 : vector<8x1xf32> to vector<8x1024xf32>
    %478 = arith.mulf %476, %477 : vector<8x1024xf32>
    %479 = arith.addf %473, %478 : vector<8x1024xf32>
    %c1_55 = arith.constant 1 : index
    %c0_56 = arith.constant 0 : index
    %c31_57 = arith.constant 31 : index
    %480 = vector.load %arg1[%c1_55, %c0_56, %c31_57] : memref<2x4x1152xf32, #tpu.memory_space<vmem>>, vector<1x4x1024xf32>
    %481 = vector.shape_cast %480 : vector<1x4x1024xf32> to vector<4x1024xf32>
    %482 = vector.extract_strided_slice %481 {offsets = [0, 0], sizes = [1, 1024], strides = [1, 1]} : vector<4x1024xf32> to vector<1x1024xf32>
    %483 = vector.extract_strided_slice %0 {offsets = [0, 8], sizes = [8, 1], strides = [1, 1]} : vector<8x36xf32> to vector<8x1xf32>
    %484 = vector.broadcast %482 : vector<1x1024xf32> to vector<8x1024xf32>
    %485 = vector.broadcast %483 : vector<8x1xf32> to vector<8x1024xf32>
    %486 = arith.mulf %484, %485 : vector<8x1024xf32>
    %487 = arith.addf %479, %486 : vector<8x1024xf32>
    %488 = vector.extract_strided_slice %481 {offsets = [1, 0], sizes = [1, 1024], strides = [1, 1]} : vector<4x1024xf32> to vector<1x1024xf32>
    %489 = vector.extract_strided_slice %0 {offsets = [0, 17], sizes = [8, 1], strides = [1, 1]} : vector<8x36xf32> to vector<8x1xf32>
    %490 = vector.broadcast %488 : vector<1x1024xf32> to vector<8x1024xf32>
    %491 = vector.broadcast %489 : vector<8x1xf32> to vector<8x1024xf32>
    %492 = arith.mulf %490, %491 : vector<8x1024xf32>
    %493 = arith.addf %487, %492 : vector<8x1024xf32>
    %494 = vector.extract_strided_slice %481 {offsets = [2, 0], sizes = [1, 1024], strides = [1, 1]} : vector<4x1024xf32> to vector<1x1024xf32>
    %495 = vector.extract_strided_slice %0 {offsets = [0, 26], sizes = [8, 1], strides = [1, 1]} : vector<8x36xf32> to vector<8x1xf32>
    %496 = vector.broadcast %494 : vector<1x1024xf32> to vector<8x1024xf32>
    %497 = vector.broadcast %495 : vector<8x1xf32> to vector<8x1024xf32>
    %498 = arith.mulf %496, %497 : vector<8x1024xf32>
    %499 = arith.addf %493, %498 : vector<8x1024xf32>
    %500 = vector.extract_strided_slice %481 {offsets = [3, 0], sizes = [1, 1024], strides = [1, 1]} : vector<4x1024xf32> to vector<1x1024xf32>
    %501 = vector.extract_strided_slice %0 {offsets = [0, 35], sizes = [8, 1], strides = [1, 1]} : vector<8x36xf32> to vector<8x1xf32>
    %502 = vector.broadcast %500 : vector<1x1024xf32> to vector<8x1024xf32>
    %503 = vector.broadcast %501 : vector<8x1xf32> to vector<8x1024xf32>
    %504 = arith.mulf %502, %503 : vector<8x1024xf32>
    %505 = arith.addf %499, %504 : vector<8x1024xf32>
    %cst_58 = arith.constant 0.000000e+00 : f32
    %506 = vector.broadcast %cst_58 : f32 to vector<8x1024xf32>
    %507 = arith.maximumf %505, %506 : vector<8x1024xf32>
    %c1_59 = arith.constant 1 : index
    %c0_60 = arith.constant 0 : index
    %c0_61 = arith.constant 0 : index
    %508 = vector.load %arg4[%c1_59, %c0_60, %c0_61] : memref<2x8x1024xf32, #tpu.memory_space<vmem>>, vector<1x8x1024xf32>
    %509 = vector.shape_cast %508 : vector<1x8x1024xf32> to vector<8x1024xf32>
    %510 = vector.shape_cast %507 : vector<8x1024xf32> to vector<1x8x1024xf32>
    tpu.vector_store %arg4[%c1_59, %c0_60, %c0_61], %510 {strides = array<i32>} : memref<2x8x1024xf32, #tpu.memory_space<vmem>>, vector<1x8x1024xf32>,
    return
  }
  func.func @transform_0(%arg0: i32) -> (i32, i32, i32) {
    %c0_i32 = arith.constant 0 : i32
    %c0_i32_0 = arith.constant 0 : i32
    %c0_i32_1 = arith.constant 0 : i32
    return %arg0, %c0_i32, %c0_i32_0 : i32, i32, i32
  }
  func.func @transform_1(%arg0: i32) -> (i32, i32) {
    %c0_i32 = arith.constant 0 : i32
    %c0_i32_0 = arith.constant 0 : i32
    %c0_i32_1 = arith.constant 0 : i32
    return %c0_i32, %c0_i32_0 : i32, i32
  }
  func.func @transform_2(%arg0: i32) -> (i32, i32) {
    %c0_i32 = arith.constant 0 : i32
    %c0_i32_0 = arith.constant 0 : i32
    %c0_i32_1 = arith.constant 0 : i32
    return %c0_i32, %c0_i32_0 : i32, i32
  }
  func.func @transform_3(%arg0: i32) -> (i32, i32, i32) {
    %c0_i32 = arith.constant 0 : i32
    %c0_i32_0 = arith.constant 0 : i32
    %c0_i32_1 = arith.constant 0 : i32
    return %arg0, %c0_i32, %c0_i32_0 : i32, i32, i32
  }
}

</mosaic_0001>

<llo_original>
// kernel: tpu_custom_call.1
$region0: #{tpu_custom_call.1}
  #allocation0 [shape = 'u32[]', space=smem, size = 0x4, offset = 0x4, fixed_abs, tag = 'smem constant byte address 0x4 - core index']
  #allocation1 [shape = 'u32[144,128]{1,0:T(1,128)}', space=vmem, size = 0x12000, scoped, tag = 'internal scratch']
  %s0 = inlined_call_operand.hbm [shape: f32[2,4,1152], index: 0, kind: input, shape index: {}]
  %s1 = inlined_call_operand.vmem [shape: f32[8,36], index: 1, kind: input, shape index: {}]
  %s2 = inlined_call_operand.vmem [shape: f32[8,1], index: 2, kind: input, shape index: {}]
  %s3 = inlined_call_operand.hbm [shape: f32[2,8,1024], index: 3, kind: output, shape index: {}]
  %s4 = sld [smem:[#allocation0]]
  $region26: #{tpu_custom_call.1} parent=0
    _
  %s6 = ssub.s32 1, %s4
  %s7 = scalar_select 0, %s6, %s4
  $region1: #{tpu_custom_call.1} parent=0
    #allocation2 [shape = 'u8[36864]{0}', space=vmem, size = 0x9000, scoped, tag = 'input window, operand 0, single buffered']
    #allocation3 [shape = 's32[1]{0}', space=sflag, size = 0x4, scoped, tag = 'scoped memory for tpu_custom_call.1']
    #allocation4 [shape = 's32[1]{0}', space=sflag, size = 0x4, scoped, tag = 'scoped memory for tpu_custom_call.1']
    #allocation5 [shape = 'u8[65536]{0}', space=vmem, size = 0x10000, scoped, tag = 'output window, operand 0, single buffered']
    %8 = vsyncpa [#allocation3], 0
    %9 = vsyncpa [#allocation4], 0
    // Predicated region
    $region2: #{tpu_custom_call.1} parent=1 // pred_check
      _
    $region3: #{tpu_custom_call.1} parent=1 // pred_check_branch
      %11 = sbr.rel (0) target = $region5
    $region4: #{tpu_custom_call.1} parent=1 // pred_region
      %s13 = ssub.s32 1152, 1152
      %14 = vsyncadd [#allocation3], %s13
      %s15 = sshll.u32 [#allocation2], 4
      %s16 = int_to_ptr.vmem [resolvable:$true] %s15
      %21 = dma.hbm_to_vmem [thread:$0]  %s0, 1152, %s16, [#allocation3], 576, 576, 36
    $region5: #{tpu_custom_call.1} parent=1 // pred_fallthru
      _
    // Predicated region
    $region6: #{tpu_custom_call.1} parent=1 // pred_check
      _
    $region7: #{tpu_custom_call.1} parent=1 // pred_check_branch
      %23 = sbr.rel (0) target = $region9
    $region8: #{tpu_custom_call.1} parent=1 // pred_region
      _
    $region9: #{tpu_custom_call.1} parent=1 // pred_fallthru
      _
    // Predicated region
    $region10: #{tpu_custom_call.1} parent=1 // pred_check
      _
    $region11: #{tpu_custom_call.1} parent=1 // pred_check_branch
      %25 = sbr.rel (0) target = $region13
    $region12: #{tpu_custom_call.1} parent=1 // pred_region
      _
    $region13: #{tpu_custom_call.1} parent=1 // pred_fallthru
      _
    // Predicated region
    $region14: #{tpu_custom_call.1} parent=1 // pred_check
      _
    $region15: #{tpu_custom_call.1} parent=1 // pred_check_branch
      %27 = sbr.rel (0) target = $region17
    $region16: #{tpu_custom_call.1} parent=1 // pred_region
      %28 = dma.done [#allocation3], 1152
    $region17: #{tpu_custom_call.1} parent=1 // pred_fallthru
      _
    %v29 = vld [vmem:[%s1] sm:$0xff]
    %v30 = vld [vmem:[%s2] sm:$0xff]
    %32 = vset.pattern.permute.xlu0 0
    %33 = vperm.xlu0 %32, %v30
    %v34 = vpop.permute.xlu0 %33
    %v36 = vlaneseq
    %v37 = vand.u32 %v36, 127
    %v38 = vadd.s32 %v37, 128
    %v39 = vadd.s32 %v37, 256
    %v40 = vadd.s32 %v37, 384
    %v41 = vadd.s32 %v37, 512
    %v42 = vadd.s32 %v37, 640
    %v43 = vadd.s32 %v37, 768
    %v44 = vadd.s32 %v37, 896
    %vm45 = vcmp.lt.s32.totalorder %v37, 0
    %v46 = vsub.s32 0, %v37
    %v47 = vsel %vm45, %v46, %v37
    %v48 = vshrl.u32 %v47, 5
    %v49 = vand.u32 %v47, 31
    %v50 = vsub.s32 0, %v49
    %v51 = vsel %vm45, %v50, %v49
    %vm52 = vcmp.lt.s32.totalorder %v38, 0
    %v53 = vsub.s32 0, %v38
    %v54 = vsel %vm52, %v53, %v38
    %v55 = vshrl.u32 %v54, 5
    %v56 = vand.u32 %v54, 31
    %v57 = vsub.s32 0, %v56
    %v58 = vsel %vm52, %v57, %v56
    %vm59 = vcmp.lt.s32.totalorder %v39, 0
    %v60 = vsub.s32 0, %v39
    %v61 = vsel %vm59, %v60, %v39
    %v62 = vshrl.u32 %v61, 5
    %v63 = vand.u32 %v61, 31
    %v64 = vsub.s32 0, %v63
    %v65 = vsel %vm59, %v64, %v63
    %vm66 = vcmp.lt.s32.totalorder %v40, 0
    %v67 = vsub.s32 0, %v40
    %v68 = vsel %vm66, %v67, %v40
    %v69 = vshrl.u32 %v68, 5
    %v70 = vand.u32 %v68, 31
    %v71 = vsub.s32 0, %v70
    %v72 = vsel %vm66, %v71, %v70
    %vm73 = vcmp.lt.s32.totalorder %v41, 0
    %v74 = vsub.s32 0, %v41
    %v75 = vsel %vm73, %v74, %v41
    %v76 = vshrl.u32 %v75, 5
    %v77 = vand.u32 %v75, 31
    %v78 = vsub.s32 0, %v77
    %v79 = vsel %vm73, %v78, %v77
    %vm80 = vcmp.lt.s32.totalorder %v42, 0
    %v81 = vsub.s32 0, %v42
    %v82 = vsel %vm80, %v81, %v42
    %v83 = vshrl.u32 %v82, 5
    %v84 = vand.u32 %v82, 31
    %v85 = vsub.s32 0, %v84
    %v86 = vsel %vm80, %v85, %v84
    %vm87 = vcmp.lt.s32.totalorder %v43, 0
    %v88 = vsub.s32 0, %v43
    %v89 = vsel %vm87, %v88, %v43
    %v90 = vshrl.u32 %v89, 5
    %v91 = vand.u32 %v89, 31
    %v92 = vsub.s32 0, %v91
    %v93 = vsel %vm87, %v92, %v91
    %vm94 = vcmp.lt.s32.totalorder %v44, 0
    %v95 = vsub.s32 0, %v44
    %v96 = vsel %vm94, %v95, %v44
    %v97 = vshrl.u32 %v96, 5
    %v98 = vand.u32 %v96, 31
    %v99 = vsub.s32 0, %v98
    %v100 = vsel %vm94, %v99, %v98
    %vm101 = vcmp.ne.s32.totalorder %v51, 0
    %vm102 = vcmp.ne.s32.totalorder %v58, 0
    %vm103 = vcmp.ne.s32.totalorder %v65, 0
    %vm104 = vcmp.ne.s32.totalorder %v72, 0
    %vm105 = vcmp.ne.s32.totalorder %v79, 0
    %vm106 = vcmp.ne.s32.totalorder %v86, 0
    %vm107 = vcmp.ne.s32.totalorder %v93, 0
    %vm108 = vcmp.ne.s32.totalorder %v100, 0
    %vm109 = vcmp.lt.s32.totalorder %v51, 0
    %vm110 = vcmp.lt.s32.totalorder %v58, 0
    %vm111 = vcmp.lt.s32.totalorder %v65, 0
    %vm112 = vcmp.lt.s32.totalorder %v72, 0
    %vm113 = vcmp.lt.s32.totalorder %v79, 0
    %vm114 = vcmp.lt.s32.totalorder %v86, 0
    %vm115 = vcmp.lt.s32.totalorder %v93, 0
    %vm116 = vcmp.lt.s32.totalorder %v100, 0
    %vm117 = vmand %vm109, %vm101
    %vm118 = vmand %vm110, %vm102
    %vm119 = vmand %vm111, %vm103
    %vm120 = vmand %vm112, %vm104
    %vm121 = vmand %vm113, %vm105
    %vm122 = vmand %vm114, %vm106
    %vm123 = vmand %vm115, %vm107
    %vm124 = vmand %vm116, %vm108
    %v125 = vadd.s32 %v51, 32
    %v126 = vadd.s32 %v58, 32
    %v127 = vadd.s32 %v65, 32
    %v128 = vadd.s32 %v72, 32
    %v129 = vadd.s32 %v79, 32
    %v130 = vadd.s32 %v86, 32
    %v131 = vadd.s32 %v93, 32
    %v132 = vadd.s32 %v100, 32
    %v133 = vsel %vm117, %v125, %v51
    %v134 = vsel %vm118, %v126, %v58
    %v135 = vsel %vm119, %v127, %v65
    %v136 = vsel %vm120, %v128, %v72
    %v137 = vsel %vm121, %v129, %v79
    %v138 = vsel %vm122, %v130, %v86
    %v139 = vsel %vm123, %v131, %v93
    %v140 = vsel %vm124, %v132, %v100
    %v141 = vld [vmem:[#allocation2] sm:$0xff]
    %v142 = vld [vmem:[#allocation2 + $0x8] sm:$0xff]
    %v143 = vld [vmem:[#allocation2 + $0x10] sm:$0xff]
    %v144 = vld [vmem:[#allocation2 + $0x18] sm:$0xff]
    %v145 = vld [vmem:[#allocation2 + $0x20] sm:$0xf]
    %v151 = vlaneseq
    %v152 = vshrl.u32 %v151, 7
    %v153 = vsub.s32 0, %v152
    %v154 = vrot.slane %v141, %v153
    %v155 = vlaneseq
    %v156 = vshrl.u32 %v155, 7
    %v157 = vsub.s32 4, %v156
    %v158 = vrot.slane %v141, %v157
    %v159 = vlaneseq
    %v160 = vshrl.u32 %v159, 7
    %v161 = vsub.s32 0, %v160
    %v162 = vrot.slane %v142, %v161
    %v163 = vlaneseq
    %v164 = vshrl.u32 %v163, 7
    %v165 = vsub.s32 4, %v164
    %v166 = vrot.slane %v142, %v165
    %v167 = vlaneseq
    %v168 = vshrl.u32 %v167, 7
    %v169 = vsub.s32 0, %v168
    %v170 = vrot.slane %v143, %v169
    %v171 = vlaneseq
    %v172 = vshrl.u32 %v171, 7
    %v173 = vsub.s32 4, %v172
    %v174 = vrot.slane %v143, %v173
    %v175 = vlaneseq
    %v176 = vshrl.u32 %v175, 7
    %v177 = vsub.s32 0, %v176
    %v178 = vrot.slane %v144, %v177
    %v179 = vlaneseq
    %v180 = vshrl.u32 %v179, 7
    %v181 = vsub.s32 4, %v180
    %v182 = vrot.slane %v144, %v181
    %v183 = vlaneseq
    %v184 = vshrl.u32 %v183, 7
    %v185 = vsub.s32 0, %v184
    %v186 = vrot.slane %v145, %v185
    %v196 = vlaneseq
    %v197 = vshrl.u32 %v196, 7
    %v198 = vsub.s32 0, %v197
    %v199 = vrot.slane %v154, %v198
    %v200 = vlaneseq
    %v201 = vshrl.u32 %v200, 7
    %v202 = vsub.s32 0, %v201
    %v203 = vrot.slane %v158, %v202
    %v204 = vlaneseq
    %v205 = vshrl.u32 %v204, 7
    %v206 = vsub.s32 0, %v205
    %v207 = vrot.slane %v162, %v206
    %v208 = vlaneseq
    %v209 = vshrl.u32 %v208, 7
    %v210 = vsub.s32 0, %v209
    %v211 = vrot.slane %v166, %v210
    %v212 = vlaneseq
    %v213 = vshrl.u32 %v212, 7
    %v214 = vsub.s32 0, %v213
    %v215 = vrot.slane %v170, %v214
    %v216 = vlaneseq
    %v217 = vshrl.u32 %v216, 7
    %v218 = vsub.s32 0, %v217
    %v219 = vrot.slane %v174, %v218
    %v220 = vlaneseq
    %v221 = vshrl.u32 %v220, 7
    %v222 = vsub.s32 0, %v221
    %v223 = vrot.slane %v178, %v222
    %v224 = vlaneseq
    %v225 = vshrl.u32 %v224, 7
    %v226 = vsub.s32 0, %v225
    %v227 = vrot.slane %v182, %v226
    %v228 = vlaneseq
    %v229 = vshrl.u32 %v228, 7
    %v230 = vsub.s32 0, %v229
    %v231 = vrot.slane %v186, %v230
    %233 = vset.pattern.permute.xlu0 0
    %234 = vperm.xlu0 %233, %v29
    %v235 = vpop.permute.xlu0 %234
    %v237 = vmul.f32 %v199, %v235
    %v238 = vmul.f32 %v203, %v235
    %v239 = vmul.f32 %v207, %v235
    %v240 = vmul.f32 %v211, %v235
    %v241 = vmul.f32 %v215, %v235
    %v242 = vmul.f32 %v219, %v235
    %v243 = vmul.f32 %v223, %v235
    %v244 = vmul.f32 %v227, %v235
    %v245 = vmul.f32 %v231, %v235
    %v246 = vadd.f32 %v237, 0.0
    %v247 = vadd.f32 %v238, 0.0
    %v248 = vadd.f32 %v239, 0.0
    %v249 = vadd.f32 %v240, 0.0
    %v250 = vadd.f32 %v241, 0.0
    %v251 = vadd.f32 %v242, 0.0
    %v252 = vadd.f32 %v243, 0.0
    %v253 = vadd.f32 %v244, 0.0
    %v254 = vadd.f32 %v245, 0.0
    %v255 = vlaneseq
    %v256 = vshrl.u32 %v255, 7
    %v257 = vsub.s32 1, %v256
    %v258 = vrot.slane %v141, %v257
    %v259 = vlaneseq
    %v260 = vshrl.u32 %v259, 7
    %v261 = vsub.s32 5, %v260
    %v262 = vrot.slane %v141, %v261
    %v263 = vlaneseq
    %v264 = vshrl.u32 %v263, 7
    %v265 = vsub.s32 1, %v264
    %v266 = vrot.slane %v142, %v265
    %v267 = vlaneseq
    %v268 = vshrl.u32 %v267, 7
    %v269 = vsub.s32 5, %v268
    %v270 = vrot.slane %v142, %v269
    %v271 = vlaneseq
    %v272 = vshrl.u32 %v271, 7
    %v273 = vsub.s32 1, %v272
    %v274 = vrot.slane %v143, %v273
    %v275 = vlaneseq
    %v276 = vshrl.u32 %v275, 7
    %v277 = vsub.s32 5, %v276
    %v278 = vrot.slane %v143, %v277
    %v279 = vlaneseq
    %v280 = vshrl.u32 %v279, 7
    %v281 = vsub.s32 1, %v280
    %v282 = vrot.slane %v144, %v281
    %v283 = vlaneseq
    %v284 = vshrl.u32 %v283, 7
    %v285 = vsub.s32 5, %v284
    %v286 = vrot.slane %v144, %v285
    %v287 = vlaneseq
    %v288 = vshrl.u32 %v287, 7
    %v289 = vsub.s32 1, %v288
    %v290 = vrot.slane %v145, %v289
    %v300 = vlaneseq
    %v301 = vshrl.u32 %v300, 7
    %v302 = vsub.s32 1, %v301
    %v303 = vrot.slane %v258, %v302
    %v304 = vlaneseq
    %v305 = vshrl.u32 %v304, 7
    %v306 = vsub.s32 1, %v305
    %v307 = vrot.slane %v262, %v306
    %v308 = vlaneseq
    %v309 = vshrl.u32 %v308, 7
    %v310 = vsub.s32 1, %v309
    %v311 = vrot.slane %v266, %v310
    %v312 = vlaneseq
    %v313 = vshrl.u32 %v312, 7
    %v314 = vsub.s32 1, %v313
    %v315 = vrot.slane %v270, %v314
    %v316 = vlaneseq
    %v317 = vshrl.u32 %v316, 7
    %v318 = vsub.s32 1, %v317
    %v319 = vrot.slane %v274, %v318
    %v320 = vlaneseq
    %v321 = vshrl.u32 %v320, 7
    %v322 = vsub.s32 1, %v321
    %v323 = vrot.slane %v278, %v322
    %v324 = vlaneseq
    %v325 = vshrl.u32 %v324, 7
    %v326 = vsub.s32 1, %v325
    %v327 = vrot.slane %v282, %v326
    %v328 = vlaneseq
    %v329 = vshrl.u32 %v328, 7
    %v330 = vsub.s32 1, %v329
    %v331 = vrot.slane %v286, %v330
    %v332 = vlaneseq
    %v333 = vshrl.u32 %v332, 7
    %v334 = vsub.s32 1, %v333
    %v335 = vrot.slane %v290, %v334
    %336 = vset.pattern.permute.xlu0 9
    %337 = vperm.xlu0 %336, %v29
    %v338 = vpop.permute.xlu0 %337
    %v340 = vmul.f32 %v303, %v338
    %v341 = vmul.f32 %v307, %v338
    %v342 = vmul.f32 %v311, %v338
    %v343 = vmul.f32 %v315, %v338
    %v344 = vmul.f32 %v319, %v338
    %v345 = vmul.f32 %v323, %v338
    %v346 = vmul.f32 %v327, %v338
    %v347 = vmul.f32 %v331, %v338
    %v348 = vmul.f32 %v335, %v338
    %v349 = vadd.f32 %v246, %v340
    %v350 = vadd.f32 %v247, %v341
    %v351 = vadd.f32 %v248, %v342
    %v352 = vadd.f32 %v249, %v343
    %v353 = vadd.f32 %v250, %v344
    %v354 = vadd.f32 %v251, %v345
    %v355 = vadd.f32 %v252, %v346
    %v356 = vadd.f32 %v253, %v347
    %v357 = vadd.f32 %v254, %v348
    %v358 = vlaneseq
    %v359 = vshrl.u32 %v358, 7
    %v360 = vsub.s32 2, %v359
    %v361 = vrot.slane %v141, %v360
    %v362 = vlaneseq
    %v363 = vshrl.u32 %v362, 7
    %v364 = vsub.s32 6, %v363
    %v365 = vrot.slane %v141, %v364
    %v366 = vlaneseq
    %v367 = vshrl.u32 %v366, 7
    %v368 = vsub.s32 2, %v367
    %v369 = vrot.slane %v142, %v368
    %v370 = vlaneseq
    %v371 = vshrl.u32 %v370, 7
    %v372 = vsub.s32 6, %v371
    %v373 = vrot.slane %v142, %v372
    %v374 = vlaneseq
    %v375 = vshrl.u32 %v374, 7
    %v376 = vsub.s32 2, %v375
    %v377 = vrot.slane %v143, %v376
    %v378 = vlaneseq
    %v379 = vshrl.u32 %v378, 7
    %v380 = vsub.s32 6, %v379
    %v381 = vrot.slane %v143, %v380
    %v382 = vlaneseq
    %v383 = vshrl.u32 %v382, 7
    %v384 = vsub.s32 2, %v383
    %v385 = vrot.slane %v144, %v384
    %v386 = vlaneseq
    %v387 = vshrl.u32 %v386, 7
    %v388 = vsub.s32 6, %v387
    %v389 = vrot.slane %v144, %v388
    %v390 = vlaneseq
    %v391 = vshrl.u32 %v390, 7
    %v392 = vsub.s32 2, %v391
    %v393 = vrot.slane %v145, %v392
    %v403 = vlaneseq
    %v404 = vshrl.u32 %v403, 7
    %v405 = vsub.s32 2, %v404
    %v406 = vrot.slane %v361, %v405
    %v407 = vlaneseq
    %v408 = vshrl.u32 %v407, 7
    %v409 = vsub.s32 2, %v408
    %v410 = vrot.slane %v365, %v409
    %v411 = vlaneseq
    %v412 = vshrl.u32 %v411, 7
    %v413 = vsub.s32 2, %v412
    %v414 = vrot.slane %v369, %v413
    %v415 = vlaneseq
    %v416 = vshrl.u32 %v415, 7
    %v417 = vsub.s32 2, %v416
    %v418 = vrot.slane %v373, %v417
    %v419 = vlaneseq
    %v420 = vshrl.u32 %v419, 7
    %v421 = vsub.s32 2, %v420
    %v422 = vrot.slane %v377, %v421
    %v423 = vlaneseq
    %v424 = vshrl.u32 %v423, 7
    %v425 = vsub.s32 2, %v424
    %v426 = vrot.slane %v381, %v425
    %v427 = vlaneseq
    %v428 = vshrl.u32 %v427, 7
    %v429 = vsub.s32 2, %v428
    %v430 = vrot.slane %v385, %v429
    %v431 = vlaneseq
    %v432 = vshrl.u32 %v431, 7
    %v433 = vsub.s32 2, %v432
    %v434 = vrot.slane %v389, %v433
    %v435 = vlaneseq
    %v436 = vshrl.u32 %v435, 7
    %v437 = vsub.s32 2, %v436
    %v438 = vrot.slane %v393, %v437
    %439 = vset.pattern.permute.xlu0 18
    %440 = vperm.xlu0 %439, %v29
    %v441 = vpop.permute.xlu0 %440
    %v443 = vmul.f32 %v406, %v441
    %v444 = vmul.f32 %v410, %v441
    %v445 = vmul.f32 %v414, %v441
    %v446 = vmul.f32 %v418, %v441
    %v447 = vmul.f32 %v422, %v441
    %v448 = vmul.f32 %v426, %v441
    %v449 = vmul.f32 %v430, %v441
    %v450 = vmul.f32 %v434, %v441
    %v451 = vmul.f32 %v438, %v441
    %v452 = vadd.f32 %v349, %v443
    %v453 = vadd.f32 %v350, %v444
    %v454 = vadd.f32 %v351, %v445
    %v455 = vadd.f32 %v352, %v446
    %v456 = vadd.f32 %v353, %v447
    %v457 = vadd.f32 %v354, %v448
    %v458 = vadd.f32 %v355, %v449
    %v459 = vadd.f32 %v356, %v450
    %v460 = vadd.f32 %v357, %v451
    %v461 = vlaneseq
    %v462 = vshrl.u32 %v461, 7
    %v463 = vsub.s32 3, %v462
    %v464 = vrot.slane %v141, %v463
    %v465 = vlaneseq
    %v466 = vshrl.u32 %v465, 7
    %v467 = vsub.s32 7, %v466
    %v468 = vrot.slane %v141, %v467
    %v469 = vlaneseq
    %v470 = vshrl.u32 %v469, 7
    %v471 = vsub.s32 3, %v470
    %v472 = vrot.slane %v142, %v471
    %v473 = vlaneseq
    %v474 = vshrl.u32 %v473, 7
    %v475 = vsub.s32 7, %v474
    %v476 = vrot.slane %v142, %v475
    %v477 = vlaneseq
    %v478 = vshrl.u32 %v477, 7
    %v479 = vsub.s32 3, %v478
    %v480 = vrot.slane %v143, %v479
    %v481 = vlaneseq
    %v482 = vshrl.u32 %v481, 7
    %v483 = vsub.s32 7, %v482
    %v484 = vrot.slane %v143, %v483
    %v485 = vlaneseq
    %v486 = vshrl.u32 %v485, 7
    %v487 = vsub.s32 3, %v486
    %v488 = vrot.slane %v144, %v487
    %v489 = vlaneseq
    %v490 = vshrl.u32 %v489, 7
    %v491 = vsub.s32 7, %v490
    %v492 = vrot.slane %v144, %v491
    %v493 = vlaneseq
    %v494 = vshrl.u32 %v493, 7
    %v495 = vsub.s32 3, %v494
    %v496 = vrot.slane %v145, %v495
    %v506 = vlaneseq
    %v507 = vshrl.u32 %v506, 7
    %v508 = vsub.s32 3, %v507
    %v509 = vrot.slane %v464, %v508
    %v510 = vlaneseq
    %v511 = vshrl.u32 %v510, 7
    %v512 = vsub.s32 3, %v511
    %v513 = vrot.slane %v468, %v512
    %v514 = vlaneseq
    %v515 = vshrl.u32 %v514, 7
    %v516 = vsub.s32 3, %v515
    %v517 = vrot.slane %v472, %v516
    %v518 = vlaneseq
    %v519 = vshrl.u32 %v518, 7
    %v520 = vsub.s32 3, %v519
    %v521 = vrot.slane %v476, %v520
    %v522 = vlaneseq
    %v523 = vshrl.u32 %v522, 7
    %v524 = vsub.s32 3, %v523
    %v525 = vrot.slane %v480, %v524
    %v526 = vlaneseq
    %v527 = vshrl.u32 %v526, 7
    %v528 = vsub.s32 3, %v527
    %v529 = vrot.slane %v484, %v528
    %v530 = vlaneseq
    %v531 = vshrl.u32 %v530, 7
    %v532 = vsub.s32 3, %v531
    %v533 = vrot.slane %v488, %v532
    %v534 = vlaneseq
    %v535 = vshrl.u32 %v534, 7
    %v536 = vsub.s32 3, %v535
    %v537 = vrot.slane %v492, %v536
    %v538 = vlaneseq
    %v539 = vshrl.u32 %v538, 7
    %v540 = vsub.s32 3, %v539
    %v541 = vrot.slane %v496, %v540
    %542 = vset.pattern.permute.xlu0 27
    %543 = vperm.xlu0 %542, %v29
    %v544 = vpop.permute.xlu0 %543
    %v546 = vmul.f32 %v509, %v544
    %v547 = vmul.f32 %v513, %v544
    %v548 = vmul.f32 %v517, %v544
    %v549 = vmul.f32 %v521, %v544
    %v550 = vmul.f32 %v525, %v544
    %v551 = vmul.f32 %v529, %v544
    %v552 = vmul.f32 %v533, %v544
    %v553 = vmul.f32 %v537, %v544
    %v554 = vmul.f32 %v541, %v544
    %v555 = vadd.f32 %v452, %v546
    %v556 = vadd.f32 %v453, %v547
    %v557 = vadd.f32 %v454, %v548
    %v558 = vadd.f32 %v455, %v549
    %v559 = vadd.f32 %v456, %v550
    %v560 = vadd.f32 %v457, %v551
    %v561 = vadd.f32 %v458, %v552
    %v562 = vadd.f32 %v459, %v553
    %v563 = vadd.f32 %v460, %v554
    %564 = vset.pattern.permute.xlu0 3
    %565 = vperm.xlu0 %564, %v29
    %v566 = vpop.permute.xlu0 %565
    %v568 = vmul.f32 %v199, %v566
    %v569 = vmul.f32 %v203, %v566
    %v570 = vmul.f32 %v207, %v566
    %v571 = vmul.f32 %v211, %v566
    %v572 = vmul.f32 %v215, %v566
    %v573 = vmul.f32 %v219, %v566
    %v574 = vmul.f32 %v223, %v566
    %v575 = vmul.f32 %v227, %v566
    %v576 = vmul.f32 %v231, %v566
    %586 = vrot.lane.b32.xlu0 %v568, 32
    %v587 = vpop.permute.xlu0 %586
    %588 = vrot.lane.b32.xlu0 %v569, 32
    %v589 = vpop.permute.xlu0 %588
    %590 = vrot.lane.b32.xlu0 %v570, 32
    %v591 = vpop.permute.xlu0 %590
    %592 = vrot.lane.b32.xlu0 %v571, 32
    %v593 = vpop.permute.xlu0 %592
    %594 = vrot.lane.b32.xlu0 %v572, 32
    %v595 = vpop.permute.xlu0 %594
    %596 = vrot.lane.b32.xlu0 %v573, 32
    %v597 = vpop.permute.xlu0 %596
    %598 = vrot.lane.b32.xlu0 %v574, 32
    %v599 = vpop.permute.xlu0 %598
    %600 = vrot.lane.b32.xlu0 %v575, 32
    %v601 = vpop.permute.xlu0 %600
    %602 = vrot.lane.b32.xlu0 %v576, 32
    %v603 = vpop.permute.xlu0 %602
    %vm604 = vcmask 261120
    %v605 = vsel %vm604, %v587, %v589
    %v606 = vsel %vm604, %v589, %v591
    %v607 = vsel %vm604, %v591, %v593
    %v608 = vsel %vm604, %v593, %v595
    %v609 = vsel %vm604, %v595, %v597
    %v610 = vsel %vm604, %v597, %v599
    %v611 = vsel %vm604, %v599, %v601
    %v612 = vsel %vm604, %v601, %v603
    %v622 = vadd.f32 %v555, %v587
    %v623 = vadd.f32 %v556, %v605
    %v624 = vadd.f32 %v557, %v606
    %v625 = vadd.f32 %v558, %v607
    %v626 = vadd.f32 %v559, %v608
    %v627 = vadd.f32 %v560, %v609
    %v628 = vadd.f32 %v561, %v610
    %v629 = vadd.f32 %v562, %v611
    %v630 = vadd.f32 %v563, %v612
    %631 = vset.pattern.permute.xlu0 12
    %632 = vperm.xlu0 %631, %v29
    %v633 = vpop.permute.xlu0 %632
    %v635 = vmul.f32 %v303, %v633
    %v636 = vmul.f32 %v307, %v633
    %v637 = vmul.f32 %v311, %v633
    %v638 = vmul.f32 %v315, %v633
    %v639 = vmul.f32 %v319, %v633
    %v640 = vmul.f32 %v323, %v633
    %v641 = vmul.f32 %v327, %v633
    %v642 = vmul.f32 %v331, %v633
    %v643 = vmul.f32 %v335, %v633
    %653 = vrot.lane.b32.xlu0 %v635, 32
    %v654 = vpop.permute.xlu0 %653
    %655 = vrot.lane.b32.xlu0 %v636, 32
    %v656 = vpop.permute.xlu0 %655
    %657 = vrot.lane.b32.xlu0 %v637, 32
    %v658 = vpop.permute.xlu0 %657
    %659 = vrot.lane.b32.xlu0 %v638, 32
    %v660 = vpop.permute.xlu0 %659
    %661 = vrot.lane.b32.xlu0 %v639, 32
    %v662 = vpop.permute.xlu0 %661
    %663 = vrot.lane.b32.xlu0 %v640, 32
    %v664 = vpop.permute.xlu0 %663
    %665 = vrot.lane.b32.xlu0 %v641, 32
    %v666 = vpop.permute.xlu0 %665
    %667 = vrot.lane.b32.xlu0 %v642, 32
    %v668 = vpop.permute.xlu0 %667
    %669 = vrot.lane.b32.xlu0 %v643, 32
    %v670 = vpop.permute.xlu0 %669
    %v671 = vsel %vm604, %v654, %v656
    %v672 = vsel %vm604, %v656, %v658
    %v673 = vsel %vm604, %v658, %v660
    %v674 = vsel %vm604, %v660, %v662
    %v675 = vsel %vm604, %v662, %v664
    %v676 = vsel %vm604, %v664, %v666
    %v677 = vsel %vm604, %v666, %v668
    %v678 = vsel %vm604, %v668, %v670
    %v688 = vadd.f32 %v622, %v654
    %v689 = vadd.f32 %v623, %v671
    %v690 = vadd.f32 %v624, %v672
    %v691 = vadd.f32 %v625, %v673
    %v692 = vadd.f32 %v626, %v674
    %v693 = vadd.f32 %v627, %v675
    %v694 = vadd.f32 %v628, %v676
    %v695 = vadd.f32 %v629, %v677
    %v696 = vadd.f32 %v630, %v678
    %697 = vset.pattern.permute.xlu0 21
    %698 = vperm.xlu0 %697, %v29
    %v699 = vpop.permute.xlu0 %698
    %v701 = vmul.f32 %v406, %v699
    %v702 = vmul.f32 %v410, %v699
    %v703 = vmul.f32 %v414, %v699
    %v704 = vmul.f32 %v418, %v699
    %v705 = vmul.f32 %v422, %v699
    %v706 = vmul.f32 %v426, %v699
    %v707 = vmul.f32 %v430, %v699
    %v708 = vmul.f32 %v434, %v699
    %v709 = vmul.f32 %v438, %v699
    %719 = vrot.lane.b32.xlu0 %v701, 32
    %v720 = vpop.permute.xlu0 %719
    %721 = vrot.lane.b32.xlu0 %v702, 32
    %v722 = vpop.permute.xlu0 %721
    %723 = vrot.lane.b32.xlu0 %v703, 32
    %v724 = vpop.permute.xlu0 %723
    %725 = vrot.lane.b32.xlu0 %v704, 32
    %v726 = vpop.permute.xlu0 %725
    %727 = vrot.lane.b32.xlu0 %v705, 32
    %v728 = vpop.permute.xlu0 %727
    %729 = vrot.lane.b32.xlu0 %v706, 32
    %v730 = vpop.permute.xlu0 %729
    %731 = vrot.lane.b32.xlu0 %v707, 32
    %v732 = vpop.permute.xlu0 %731
    %733 = vrot.lane.b32.xlu0 %v708, 32
    %v734 = vpop.permute.xlu0 %733
    %735 = vrot.lane.b32.xlu0 %v709, 32
    %v736 = vpop.permute.xlu0 %735
    %v737 = vsel %vm604, %v720, %v722
    %v738 = vsel %vm604, %v722, %v724
    %v739 = vsel %vm604, %v724, %v726
    %v740 = vsel %vm604, %v726, %v728
    %v741 = vsel %vm604, %v728, %v730
    %v742 = vsel %vm604, %v730, %v732
    %v743 = vsel %vm604, %v732, %v734
    %v744 = vsel %vm604, %v734, %v736
    %v754 = vadd.f32 %v688, %v720
    %v755 = vadd.f32 %v689, %v737
    %v756 = vadd.f32 %v690, %v738
    %v757 = vadd.f32 %v691, %v739
    %v758 = vadd.f32 %v692, %v740
    %v759 = vadd.f32 %v693, %v741
    %v760 = vadd.f32 %v694, %v742
    %v761 = vadd.f32 %v695, %v743
    %v762 = vadd.f32 %v696, %v744
    %763 = vset.pattern.permute.xlu0 30
    %764 = vperm.xlu0 %763, %v29
    %v765 = vpop.permute.xlu0 %764
    %v767 = vmul.f32 %v509, %v765
    %v768 = vmul.f32 %v513, %v765
    %v769 = vmul.f32 %v517, %v765
    %v770 = vmul.f32 %v521, %v765
    %v771 = vmul.f32 %v525, %v765
    %v772 = vmul.f32 %v529, %v765
    %v773 = vmul.f32 %v533, %v765
    %v774 = vmul.f32 %v537, %v765
    %v775 = vmul.f32 %v541, %v765
    %785 = vrot.lane.b32.xlu0 %v767, 32
    %v786 = vpop.permute.xlu0 %785
    %787 = vrot.lane.b32.xlu0 %v768, 32
    %v788 = vpop.permute.xlu0 %787
    %789 = vrot.lane.b32.xlu0 %v769, 32
    %v790 = vpop.permute.xlu0 %789
    %791 = vrot.lane.b32.xlu0 %v770, 32
    %v792 = vpop.permute.xlu0 %791
    %793 = vrot.lane.b32.xlu0 %v771, 32
    %v794 = vpop.permute.xlu0 %793
    %795 = vrot.lane.b32.xlu0 %v772, 32
    %v796 = vpop.permute.xlu0 %795
    %797 = vrot.lane.b32.xlu0 %v773, 32
    %v798 = vpop.permute.xlu0 %797
    %799 = vrot.lane.b32.xlu0 %v774, 32
    %v800 = vpop.permute.xlu0 %799
    %801 = vrot.lane.b32.xlu0 %v775, 32
    %v802 = vpop.permute.xlu0 %801
    %v803 = vsel %vm604, %v786, %v788
    %v804 = vsel %vm604, %v788, %v790
    %v805 = vsel %vm604, %v790, %v792
    %v806 = vsel %vm604, %v792, %v794
    %v807 = vsel %vm604, %v794, %v796
    %v808 = vsel %vm604, %v796, %v798
    %v809 = vsel %vm604, %v798, %v800
    %v810 = vsel %vm604, %v800, %v802
    %v820 = vadd.f32 %v754, %v786
    %v821 = vadd.f32 %v755, %v803
    %v822 = vadd.f32 %v756, %v804
    %v823 = vadd.f32 %v757, %v805
    %v824 = vadd.f32 %v758, %v806
    %v825 = vadd.f32 %v759, %v807
    %v826 = vadd.f32 %v760, %v808
    %v827 = vadd.f32 %v761, %v809
    %v828 = vadd.f32 %v762, %v810
    %829 = vset.pattern.permute.xlu0 6
    %830 = vperm.xlu0 %829, %v29
    %v831 = vpop.permute.xlu0 %830
    %v833 = vmul.f32 %v199, %v831
    %v834 = vmul.f32 %v203, %v831
    %v835 = vmul.f32 %v207, %v831
    %v836 = vmul.f32 %v211, %v831
    %v837 = vmul.f32 %v215, %v831
    %v838 = vmul.f32 %v219, %v831
    %v839 = vmul.f32 %v223, %v831
    %v840 = vmul.f32 %v227, %v831
    %v841 = vmul.f32 %v231, %v831
    %851 = vrot.lane.b32.xlu0 %v833, 64
    %v852 = vpop.permute.xlu0 %851
    %853 = vrot.lane.b32.xlu0 %v834, 64
    %v854 = vpop.permute.xlu0 %853
    %855 = vrot.lane.b32.xlu0 %v835, 64
    %v856 = vpop.permute.xlu0 %855
    %857 = vrot.lane.b32.xlu0 %v836, 64
    %v858 = vpop.permute.xlu0 %857
    %859 = vrot.lane.b32.xlu0 %v837, 64
    %v860 = vpop.permute.xlu0 %859
    %861 = vrot.lane.b32.xlu0 %v838, 64
    %v862 = vpop.permute.xlu0 %861
    %863 = vrot.lane.b32.xlu0 %v839, 64
    %v864 = vpop.permute.xlu0 %863
    %865 = vrot.lane.b32.xlu0 %v840, 64
    %v866 = vpop.permute.xlu0 %865
    %867 = vrot.lane.b32.xlu0 %v841, 64
    %v868 = vpop.permute.xlu0 %867
    %vm869 = vcmask 523264
    %v870 = vsel %vm869, %v852, %v854
    %v871 = vsel %vm869, %v854, %v856
    %v872 = vsel %vm869, %v856, %v858
    %v873 = vsel %vm869, %v858, %v860
    %v874 = vsel %vm869, %v860, %v862
    %v875 = vsel %vm869, %v862, %v864
    %v876 = vsel %vm869, %v864, %v866
    %v877 = vsel %vm869, %v866, %v868
    %v887 = vadd.f32 %v820, %v852
    %v888 = vadd.f32 %v821, %v870
    %v889 = vadd.f32 %v822, %v871
    %v890 = vadd.f32 %v823, %v872
    %v891 = vadd.f32 %v824, %v873
    %v892 = vadd.f32 %v825, %v874
    %v893 = vadd.f32 %v826, %v875
    %v894 = vadd.f32 %v827, %v876
    %v895 = vadd.f32 %v828, %v877
    %896 = vset.pattern.permute.xlu0 15
    %897 = vperm.xlu0 %896, %v29
    %v898 = vpop.permute.xlu0 %897
    %v900 = vmul.f32 %v303, %v898
    %v901 = vmul.f32 %v307, %v898
    %v902 = vmul.f32 %v311, %v898
    %v903 = vmul.f32 %v315, %v898
    %v904 = vmul.f32 %v319, %v898
    %v905 = vmul.f32 %v323, %v898
    %v906 = vmul.f32 %v327, %v898
    %v907 = vmul.f32 %v331, %v898
    %v908 = vmul.f32 %v335, %v898
    %918 = vrot.lane.b32.xlu0 %v900, 64
    %v919 = vpop.permute.xlu0 %918
    %920 = vrot.lane.b32.xlu0 %v901, 64
    %v921 = vpop.permute.xlu0 %920
    %922 = vrot.lane.b32.xlu0 %v902, 64
    %v923 = vpop.permute.xlu0 %922
    %924 = vrot.lane.b32.xlu0 %v903, 64
    %v925 = vpop.permute.xlu0 %924
    %926 = vrot.lane.b32.xlu0 %v904, 64
    %v927 = vpop.permute.xlu0 %926
    %928 = vrot.lane.b32.xlu0 %v905, 64
    %v929 = vpop.permute.xlu0 %928
    %930 = vrot.lane.b32.xlu0 %v906, 64
    %v931 = vpop.permute.xlu0 %930
    %932 = vrot.lane.b32.xlu0 %v907, 64
    %v933 = vpop.permute.xlu0 %932
    %934 = vrot.lane.b32.xlu0 %v908, 64
    %v935 = vpop.permute.xlu0 %934
    %v936 = vsel %vm869, %v919, %v921
    %v937 = vsel %vm869, %v921, %v923
    %v938 = vsel %vm869, %v923, %v925
    %v939 = vsel %vm869, %v925, %v927
    %v940 = vsel %vm869, %v927, %v929
    %v941 = vsel %vm869, %v929, %v931
    %v942 = vsel %vm869, %v931, %v933
    %v943 = vsel %vm869, %v933, %v935
    %v953 = vadd.f32 %v887, %v919
    %v954 = vadd.f32 %v888, %v936
    %v955 = vadd.f32 %v889, %v937
    %v956 = vadd.f32 %v890, %v938
    %v957 = vadd.f32 %v891, %v939
    %v958 = vadd.f32 %v892, %v940
    %v959 = vadd.f32 %v893, %v941
    %v960 = vadd.f32 %v894, %v942
    %v961 = vadd.f32 %v895, %v943
    %962 = vset.pattern.permute.xlu0 24
    %963 = vperm.xlu0 %962, %v29
    %v964 = vpop.permute.xlu0 %963
    %v966 = vmul.f32 %v406, %v964
    %v967 = vmul.f32 %v410, %v964
    %v968 = vmul.f32 %v414, %v964
    %v969 = vmul.f32 %v418, %v964
    %v970 = vmul.f32 %v422, %v964
    %v971 = vmul.f32 %v426, %v964
    %v972 = vmul.f32 %v430, %v964
    %v973 = vmul.f32 %v434, %v964
    %v974 = vmul.f32 %v438, %v964
    %984 = vrot.lane.b32.xlu0 %v966, 64
    %v985 = vpop.permute.xlu0 %984
    %986 = vrot.lane.b32.xlu0 %v967, 64
    %v987 = vpop.permute.xlu0 %986
    %988 = vrot.lane.b32.xlu0 %v968, 64
    %v989 = vpop.permute.xlu0 %988
    %990 = vrot.lane.b32.xlu0 %v969, 64
    %v991 = vpop.permute.xlu0 %990
    %992 = vrot.lane.b32.xlu0 %v970, 64
    %v993 = vpop.permute.xlu0 %992
    %994 = vrot.lane.b32.xlu0 %v971, 64
    %v995 = vpop.permute.xlu0 %994
    %996 = vrot.lane.b32.xlu0 %v972, 64
    %v997 = vpop.permute.xlu0 %996
    %998 = vrot.lane.b32.xlu0 %v973, 64
    %v999 = vpop.permute.xlu0 %998
    %1000 = vrot.lane.b32.xlu0 %v974, 64
    %v1001 = vpop.permute.xlu0 %1000
    %v1002 = vsel %vm869, %v985, %v987
    %v1003 = vsel %vm869, %v987, %v989
    %v1004 = vsel %vm869, %v989, %v991
    %v1005 = vsel %vm869, %v991, %v993
    %v1006 = vsel %vm869, %v993, %v995
    %v1007 = vsel %vm869, %v995, %v997
    %v1008 = vsel %vm869, %v997, %v999
    %v1009 = vsel %vm869, %v999, %v1001
    %v1019 = vadd.f32 %v953, %v985
    %v1020 = vadd.f32 %v954, %v1002
    %v1021 = vadd.f32 %v955, %v1003
    %v1022 = vadd.f32 %v956, %v1004
    %v1023 = vadd.f32 %v957, %v1005
    %v1024 = vadd.f32 %v958, %v1006
    %v1025 = vadd.f32 %v959, %v1007
    %v1026 = vadd.f32 %v960, %v1008
    %v1027 = vadd.f32 %v961, %v1009
    %1028 = vset.pattern.permute.xlu0 33
    %1029 = vperm.xlu0 %1028, %v29
    %v1030 = vpop.permute.xlu0 %1029
    %v1032 = vmul.f32 %v509, %v1030
    %v1033 = vmul.f32 %v513, %v1030
    %v1034 = vmul.f32 %v517, %v1030
    %v1035 = vmul.f32 %v521, %v1030
    %v1036 = vmul.f32 %v525, %v1030
    %v1037 = vmul.f32 %v529, %v1030
    %v1038 = vmul.f32 %v533, %v1030
    %v1039 = vmul.f32 %v537, %v1030
    %v1040 = vmul.f32 %v541, %v1030
    %1050 = vrot.lane.b32.xlu0 %v1032, 64
    %v1051 = vpop.permute.xlu0 %1050
    %1052 = vrot.lane.b32.xlu0 %v1033, 64
    %v1053 = vpop.permute.xlu0 %1052
    %1054 = vrot.lane.b32.xlu0 %v1034, 64
    %v1055 = vpop.permute.xlu0 %1054
    %1056 = vrot.lane.b32.xlu0 %v1035, 64
    %v1057 = vpop.permute.xlu0 %1056
    %1058 = vrot.lane.b32.xlu0 %v1036, 64
    %v1059 = vpop.permute.xlu0 %1058
    %1060 = vrot.lane.b32.xlu0 %v1037, 64
    %v1061 = vpop.permute.xlu0 %1060
    %1062 = vrot.lane.b32.xlu0 %v1038, 64
    %v1063 = vpop.permute.xlu0 %1062
    %1064 = vrot.lane.b32.xlu0 %v1039, 64
    %v1065 = vpop.permute.xlu0 %1064
    %1066 = vrot.lane.b32.xlu0 %v1040, 64
    %v1067 = vpop.permute.xlu0 %1066
    %v1068 = vsel %vm869, %v1051, %v1053
    %v1069 = vsel %vm869, %v1053, %v1055
    %v1070 = vsel %vm869, %v1055, %v1057
    %v1071 = vsel %vm869, %v1057, %v1059
    %v1072 = vsel %vm869, %v1059, %v1061
    %v1073 = vsel %vm869, %v1061, %v1063
    %v1074 = vsel %vm869, %v1063, %v1065
    %v1075 = vsel %vm869, %v1065, %v1067
    %v1085 = vadd.f32 %v1019, %v1051
    %v1086 = vadd.f32 %v1020, %v1068
    %v1087 = vadd.f32 %v1021, %v1069
    %v1088 = vadd.f32 %v1022, %v1070
    %v1089 = vadd.f32 %v1023, %v1071
    %v1090 = vadd.f32 %v1024, %v1072
    %v1091 = vadd.f32 %v1025, %v1073
    %v1092 = vadd.f32 %v1026, %v1074
    %v1093 = vadd.f32 %v1027, %v1075
    %vm1094 = vcmp.lt.s32.totalorder %v133, 31
    %vm1095 = vcmp.lt.s32.totalorder %v134, 31
    %vm1096 = vcmp.lt.s32.totalorder %v135, 31
    %vm1097 = vcmp.lt.s32.totalorder %v136, 31
    %vm1098 = vcmp.lt.s32.totalorder %v137, 31
    %vm1099 = vcmp.lt.s32.totalorder %v138, 31
    %vm1100 = vcmp.lt.s32.totalorder %v139, 31
    %vm1101 = vcmp.lt.s32.totalorder %v140, 31
    %1111 = vrot.lane.b32.xlu0 %v1085, 31
    %v1112 = vpop.permute.xlu0 %1111
    %1113 = vrot.lane.b32.xlu0 %v1086, 31
    %v1114 = vpop.permute.xlu0 %1113
    %1115 = vrot.lane.b32.xlu0 %v1087, 31
    %v1116 = vpop.permute.xlu0 %1115
    %1117 = vrot.lane.b32.xlu0 %v1088, 31
    %v1118 = vpop.permute.xlu0 %1117
    %1119 = vrot.lane.b32.xlu0 %v1089, 31
    %v1120 = vpop.permute.xlu0 %1119
    %1121 = vrot.lane.b32.xlu0 %v1090, 31
    %v1122 = vpop.permute.xlu0 %1121
    %1123 = vrot.lane.b32.xlu0 %v1091, 31
    %v1124 = vpop.permute.xlu0 %1123
    %1125 = vrot.lane.b32.xlu0 %v1092, 31
    %v1126 = vpop.permute.xlu0 %1125
    %1127 = vrot.lane.b32.xlu0 %v1093, 31
    %v1128 = vpop.permute.xlu0 %1127
    %vm1129 = vcmask 252928
    %v1130 = vsel %vm1129, %v1112, %v1114
    %v1131 = vsel %vm1129, %v1114, %v1116
    %v1132 = vsel %vm1129, %v1116, %v1118
    %v1133 = vsel %vm1129, %v1118, %v1120
    %v1134 = vsel %vm1129, %v1120, %v1122
    %v1135 = vsel %vm1129, %v1122, %v1124
    %v1136 = vsel %vm1129, %v1124, %v1126
    %v1137 = vsel %vm1129, %v1126, %v1128
    %v1146 = vsel %vm1094, %v1130, 0.0
    %v1147 = vsel %vm1095, %v1131, 0.0
    %v1148 = vsel %vm1096, %v1132, 0.0
    %v1149 = vsel %vm1097, %v1133, 0.0
    %v1150 = vsel %vm1098, %v1134, 0.0
    %v1151 = vsel %vm1099, %v1135, 0.0
    %v1152 = vsel %vm1100, %v1136, 0.0
    %v1153 = vsel %vm1101, %v1137, 0.0
    %v1154 = vadd.f32 %v34, %v1146
    %v1155 = vadd.f32 %v34, %v1147
    %v1156 = vadd.f32 %v34, %v1148
    %v1157 = vadd.f32 %v34, %v1149
    %v1158 = vadd.f32 %v34, %v1150
    %v1159 = vadd.f32 %v34, %v1151
    %v1160 = vadd.f32 %v34, %v1152
    %v1161 = vadd.f32 %v34, %v1153
    %1162 = vset.pattern.permute.xlu0 1
    %1163 = vperm.xlu0 %1162, %v29
    %v1164 = vpop.permute.xlu0 %1163
    %v1166 = vmul.f32 %v199, %v1164
    %v1167 = vmul.f32 %v203, %v1164
    %v1168 = vmul.f32 %v207, %v1164
    %v1169 = vmul.f32 %v211, %v1164
    %v1170 = vmul.f32 %v215, %v1164
    %v1171 = vmul.f32 %v219, %v1164
    %v1172 = vmul.f32 %v223, %v1164
    %v1173 = vmul.f32 %v227, %v1164
    %v1174 = vmul.f32 %v231, %v1164
    %1184 = vrot.lane.b32.xlu0 %v1166, 32
    %v1185 = vpop.permute.xlu0 %1184
    %1186 = vrot.lane.b32.xlu0 %v1167, 32
    %v1187 = vpop.permute.xlu0 %1186
    %1188 = vrot.lane.b32.xlu0 %v1168, 32
    %v1189 = vpop.permute.xlu0 %1188
    %1190 = vrot.lane.b32.xlu0 %v1169, 32
    %v1191 = vpop.permute.xlu0 %1190
    %1192 = vrot.lane.b32.xlu0 %v1170, 32
    %v1193 = vpop.permute.xlu0 %1192
    %1194 = vrot.lane.b32.xlu0 %v1171, 32
    %v1195 = vpop.permute.xlu0 %1194
    %1196 = vrot.lane.b32.xlu0 %v1172, 32
    %v1197 = vpop.permute.xlu0 %1196
    %1198 = vrot.lane.b32.xlu0 %v1173, 32
    %v1199 = vpop.permute.xlu0 %1198
    %1200 = vrot.lane.b32.xlu0 %v1174, 32
    %v1201 = vpop.permute.xlu0 %1200
    %v1202 = vsel %vm604, %v1185, %v1187
    %v1203 = vsel %vm604, %v1187, %v1189
    %v1204 = vsel %vm604, %v1189, %v1191
    %v1205 = vsel %vm604, %v1191, %v1193
    %v1206 = vsel %vm604, %v1193, %v1195
    %v1207 = vsel %vm604, %v1195, %v1197
    %v1208 = vsel %vm604, %v1197, %v1199
    %v1209 = vsel %vm604, %v1199, %v1201
    %v1218 = vadd.f32 %v1154, %v1202
    %v1219 = vadd.f32 %v1155, %v1203
    %v1220 = vadd.f32 %v1156, %v1204
    %v1221 = vadd.f32 %v1157, %v1205
    %v1222 = vadd.f32 %v1158, %v1206
    %v1223 = vadd.f32 %v1159, %v1207
    %v1224 = vadd.f32 %v1160, %v1208
    %v1225 = vadd.f32 %v1161, %v1209
    %1226 = vset.pattern.permute.xlu0 10
    %1227 = vperm.xlu0 %1226, %v29
    %v1228 = vpop.permute.xlu0 %1227
    %v1230 = vmul.f32 %v303, %v1228
    %v1231 = vmul.f32 %v307, %v1228
    %v1232 = vmul.f32 %v311, %v1228
    %v1233 = vmul.f32 %v315, %v1228
    %v1234 = vmul.f32 %v319, %v1228
    %v1235 = vmul.f32 %v323, %v1228
    %v1236 = vmul.f32 %v327, %v1228
    %v1237 = vmul.f32 %v331, %v1228
    %v1238 = vmul.f32 %v335, %v1228
    %1248 = vrot.lane.b32.xlu0 %v1230, 32
    %v1249 = vpop.permute.xlu0 %1248
    %1250 = vrot.lane.b32.xlu0 %v1231, 32
    %v1251 = vpop.permute.xlu0 %1250
    %1252 = vrot.lane.b32.xlu0 %v1232, 32
    %v1253 = vpop.permute.xlu0 %1252
    %1254 = vrot.lane.b32.xlu0 %v1233, 32
    %v1255 = vpop.permute.xlu0 %1254
    %1256 = vrot.lane.b32.xlu0 %v1234, 32
    %v1257 = vpop.permute.xlu0 %1256
    %1258 = vrot.lane.b32.xlu0 %v1235, 32
    %v1259 = vpop.permute.xlu0 %1258
    %1260 = vrot.lane.b32.xlu0 %v1236, 32
    %v1261 = vpop.permute.xlu0 %1260
    %1262 = vrot.lane.b32.xlu0 %v1237, 32
    %v1263 = vpop.permute.xlu0 %1262
    %1264 = vrot.lane.b32.xlu0 %v1238, 32
    %v1265 = vpop.permute.xlu0 %1264
    %v1266 = vsel %vm604, %v1249, %v1251
    %v1267 = vsel %vm604, %v1251, %v1253
    %v1268 = vsel %vm604, %v1253, %v1255
    %v1269 = vsel %vm604, %v1255, %v1257
    %v1270 = vsel %vm604, %v1257, %v1259
    %v1271 = vsel %vm604, %v1259, %v1261
    %v1272 = vsel %vm604, %v1261, %v1263
    %v1273 = vsel %vm604, %v1263, %v1265
    %v1282 = vadd.f32 %v1218, %v1266
    %v1283 = vadd.f32 %v1219, %v1267
    %v1284 = vadd.f32 %v1220, %v1268
    %v1285 = vadd.f32 %v1221, %v1269
    %v1286 = vadd.f32 %v1222, %v1270
    %v1287 = vadd.f32 %v1223, %v1271
    %v1288 = vadd.f32 %v1224, %v1272
    %v1289 = vadd.f32 %v1225, %v1273
    %1290 = vset.pattern.permute.xlu0 19
    %1291 = vperm.xlu0 %1290, %v29
    %v1292 = vpop.permute.xlu0 %1291
    %v1294 = vmul.f32 %v406, %v1292
    %v1295 = vmul.f32 %v410, %v1292
    %v1296 = vmul.f32 %v414, %v1292
    %v1297 = vmul.f32 %v418, %v1292
    %v1298 = vmul.f32 %v422, %v1292
    %v1299 = vmul.f32 %v426, %v1292
    %v1300 = vmul.f32 %v430, %v1292
    %v1301 = vmul.f32 %v434, %v1292
    %v1302 = vmul.f32 %v438, %v1292
    %1312 = vrot.lane.b32.xlu0 %v1294, 32
    %v1313 = vpop.permute.xlu0 %1312
    %1314 = vrot.lane.b32.xlu0 %v1295, 32
    %v1315 = vpop.permute.xlu0 %1314
    %1316 = vrot.lane.b32.xlu0 %v1296, 32
    %v1317 = vpop.permute.xlu0 %1316
    %1318 = vrot.lane.b32.xlu0 %v1297, 32
    %v1319 = vpop.permute.xlu0 %1318
    %1320 = vrot.lane.b32.xlu0 %v1298, 32
    %v1321 = vpop.permute.xlu0 %1320
    %1322 = vrot.lane.b32.xlu0 %v1299, 32
    %v1323 = vpop.permute.xlu0 %1322
    %1324 = vrot.lane.b32.xlu0 %v1300, 32
    %v1325 = vpop.permute.xlu0 %1324
    %1326 = vrot.lane.b32.xlu0 %v1301, 32
    %v1327 = vpop.permute.xlu0 %1326
    %1328 = vrot.lane.b32.xlu0 %v1302, 32
    %v1329 = vpop.permute.xlu0 %1328
    %v1330 = vsel %vm604, %v1313, %v1315
    %v1331 = vsel %vm604, %v1315, %v1317
    %v1332 = vsel %vm604, %v1317, %v1319
    %v1333 = vsel %vm604, %v1319, %v1321
    %v1334 = vsel %vm604, %v1321, %v1323
    %v1335 = vsel %vm604, %v1323, %v1325
    %v1336 = vsel %vm604, %v1325, %v1327
    %v1337 = vsel %vm604, %v1327, %v1329
    %v1346 = vadd.f32 %v1282, %v1330
    %v1347 = vadd.f32 %v1283, %v1331
    %v1348 = vadd.f32 %v1284, %v1332
    %v1349 = vadd.f32 %v1285, %v1333
    %v1350 = vadd.f32 %v1286, %v1334
    %v1351 = vadd.f32 %v1287, %v1335
    %v1352 = vadd.f32 %v1288, %v1336
    %v1353 = vadd.f32 %v1289, %v1337
    %1354 = vset.pattern.permute.xlu0 28
    %1355 = vperm.xlu0 %1354, %v29
    %v1356 = vpop.permute.xlu0 %1355
    %v1358 = vmul.f32 %v509, %v1356
    %v1359 = vmul.f32 %v513, %v1356
    %v1360 = vmul.f32 %v517, %v1356
    %v1361 = vmul.f32 %v521, %v1356
    %v1362 = vmul.f32 %v525, %v1356
    %v1363 = vmul.f32 %v529, %v1356
    %v1364 = vmul.f32 %v533, %v1356
    %v1365 = vmul.f32 %v537, %v1356
    %v1366 = vmul.f32 %v541, %v1356
    %1376 = vrot.lane.b32.xlu0 %v1358, 32
    %v1377 = vpop.permute.xlu0 %1376
    %1378 = vrot.lane.b32.xlu0 %v1359, 32
    %v1379 = vpop.permute.xlu0 %1378
    %1380 = vrot.lane.b32.xlu0 %v1360, 32
    %v1381 = vpop.permute.xlu0 %1380
    %1382 = vrot.lane.b32.xlu0 %v1361, 32
    %v1383 = vpop.permute.xlu0 %1382
    %1384 = vrot.lane.b32.xlu0 %v1362, 32
    %v1385 = vpop.permute.xlu0 %1384
    %1386 = vrot.lane.b32.xlu0 %v1363, 32
    %v1387 = vpop.permute.xlu0 %1386
    %1388 = vrot.lane.b32.xlu0 %v1364, 32
    %v1389 = vpop.permute.xlu0 %1388
    %1390 = vrot.lane.b32.xlu0 %v1365, 32
    %v1391 = vpop.permute.xlu0 %1390
    %1392 = vrot.lane.b32.xlu0 %v1366, 32
    %v1393 = vpop.permute.xlu0 %1392
    %v1394 = vsel %vm604, %v1377, %v1379
    %v1395 = vsel %vm604, %v1379, %v1381
    %v1396 = vsel %vm604, %v1381, %v1383
    %v1397 = vsel %vm604, %v1383, %v1385
    %v1398 = vsel %vm604, %v1385, %v1387
    %v1399 = vsel %vm604, %v1387, %v1389
    %v1400 = vsel %vm604, %v1389, %v1391
    %v1401 = vsel %vm604, %v1391, %v1393
    %v1410 = vadd.f32 %v1346, %v1394
    %v1411 = vadd.f32 %v1347, %v1395
    %v1412 = vadd.f32 %v1348, %v1396
    %v1413 = vadd.f32 %v1349, %v1397
    %v1414 = vadd.f32 %v1350, %v1398
    %v1415 = vadd.f32 %v1351, %v1399
    %v1416 = vadd.f32 %v1352, %v1400
    %v1417 = vadd.f32 %v1353, %v1401
    %1418 = vset.pattern.permute.xlu0 4
    %1419 = vperm.xlu0 %1418, %v29
    %v1420 = vpop.permute.xlu0 %1419
    %v1422 = vmul.f32 %v199, %v1420
    %v1423 = vmul.f32 %v203, %v1420
    %v1424 = vmul.f32 %v207, %v1420
    %v1425 = vmul.f32 %v211, %v1420
    %v1426 = vmul.f32 %v215, %v1420
    %v1427 = vmul.f32 %v219, %v1420
    %v1428 = vmul.f32 %v223, %v1420
    %v1429 = vmul.f32 %v227, %v1420
    %v1430 = vmul.f32 %v231, %v1420
    %1440 = vrot.lane.b32.xlu0 %v1422, 64
    %v1441 = vpop.permute.xlu0 %1440
    %1442 = vrot.lane.b32.xlu0 %v1423, 64
    %v1443 = vpop.permute.xlu0 %1442
    %1444 = vrot.lane.b32.xlu0 %v1424, 64
    %v1445 = vpop.permute.xlu0 %1444
    %1446 = vrot.lane.b32.xlu0 %v1425, 64
    %v1447 = vpop.permute.xlu0 %1446
    %1448 = vrot.lane.b32.xlu0 %v1426, 64
    %v1449 = vpop.permute.xlu0 %1448
    %1450 = vrot.lane.b32.xlu0 %v1427, 64
    %v1451 = vpop.permute.xlu0 %1450
    %1452 = vrot.lane.b32.xlu0 %v1428, 64
    %v1453 = vpop.permute.xlu0 %1452
    %1454 = vrot.lane.b32.xlu0 %v1429, 64
    %v1455 = vpop.permute.xlu0 %1454
    %1456 = vrot.lane.b32.xlu0 %v1430, 64
    %v1457 = vpop.permute.xlu0 %1456
    %v1458 = vsel %vm869, %v1441, %v1443
    %v1459 = vsel %vm869, %v1443, %v1445
    %v1460 = vsel %vm869, %v1445, %v1447
    %v1461 = vsel %vm869, %v1447, %v1449
    %v1462 = vsel %vm869, %v1449, %v1451
    %v1463 = vsel %vm869, %v1451, %v1453
    %v1464 = vsel %vm869, %v1453, %v1455
    %v1465 = vsel %vm869, %v1455, %v1457
    %v1474 = vadd.f32 %v1410, %v1458
    %v1475 = vadd.f32 %v1411, %v1459
    %v1476 = vadd.f32 %v1412, %v1460
    %v1477 = vadd.f32 %v1413, %v1461
    %v1478 = vadd.f32 %v1414, %v1462
    %v1479 = vadd.f32 %v1415, %v1463
    %v1480 = vadd.f32 %v1416, %v1464
    %v1481 = vadd.f32 %v1417, %v1465
    %1482 = vset.pattern.permute.xlu0 13
    %1483 = vperm.xlu0 %1482, %v29
    %v1484 = vpop.permute.xlu0 %1483
    %v1486 = vmul.f32 %v303, %v1484
    %v1487 = vmul.f32 %v307, %v1484
    %v1488 = vmul.f32 %v311, %v1484
    %v1489 = vmul.f32 %v315, %v1484
    %v1490 = vmul.f32 %v319, %v1484
    %v1491 = vmul.f32 %v323, %v1484
    %v1492 = vmul.f32 %v327, %v1484
    %v1493 = vmul.f32 %v331, %v1484
    %v1494 = vmul.f32 %v335, %v1484
    %1504 = vrot.lane.b32.xlu0 %v1486, 64
    %v1505 = vpop.permute.xlu0 %1504
    %1506 = vrot.lane.b32.xlu0 %v1487, 64
    %v1507 = vpop.permute.xlu0 %1506
    %1508 = vrot.lane.b32.xlu0 %v1488, 64
    %v1509 = vpop.permute.xlu0 %1508
    %1510 = vrot.lane.b32.xlu0 %v1489, 64
    %v1511 = vpop.permute.xlu0 %1510
    %1512 = vrot.lane.b32.xlu0 %v1490, 64
    %v1513 = vpop.permute.xlu0 %1512
    %1514 = vrot.lane.b32.xlu0 %v1491, 64
    %v1515 = vpop.permute.xlu0 %1514
    %1516 = vrot.lane.b32.xlu0 %v1492, 64
    %v1517 = vpop.permute.xlu0 %1516
    %1518 = vrot.lane.b32.xlu0 %v1493, 64
    %v1519 = vpop.permute.xlu0 %1518
    %1520 = vrot.lane.b32.xlu0 %v1494, 64
    %v1521 = vpop.permute.xlu0 %1520
    %v1522 = vsel %vm869, %v1505, %v1507
    %v1523 = vsel %vm869, %v1507, %v1509
    %v1524 = vsel %vm869, %v1509, %v1511
    %v1525 = vsel %vm869, %v1511, %v1513
    %v1526 = vsel %vm869, %v1513, %v1515
    %v1527 = vsel %vm869, %v1515, %v1517
    %v1528 = vsel %vm869, %v1517, %v1519
    %v1529 = vsel %vm869, %v1519, %v1521
    %v1538 = vadd.f32 %v1474, %v1522
    %v1539 = vadd.f32 %v1475, %v1523
    %v1540 = vadd.f32 %v1476, %v1524
    %v1541 = vadd.f32 %v1477, %v1525
    %v1542 = vadd.f32 %v1478, %v1526
    %v1543 = vadd.f32 %v1479, %v1527
    %v1544 = vadd.f32 %v1480, %v1528
    %v1545 = vadd.f32 %v1481, %v1529
    %1546 = vset.pattern.permute.xlu0 22
    %1547 = vperm.xlu0 %1546, %v29
    %v1548 = vpop.permute.xlu0 %1547
    %v1550 = vmul.f32 %v406, %v1548
    %v1551 = vmul.f32 %v410, %v1548
    %v1552 = vmul.f32 %v414, %v1548
    %v1553 = vmul.f32 %v418, %v1548
    %v1554 = vmul.f32 %v422, %v1548
    %v1555 = vmul.f32 %v426, %v1548
    %v1556 = vmul.f32 %v430, %v1548
    %v1557 = vmul.f32 %v434, %v1548
    %v1558 = vmul.f32 %v438, %v1548
    %1568 = vrot.lane.b32.xlu0 %v1550, 64
    %v1569 = vpop.permute.xlu0 %1568
    %1570 = vrot.lane.b32.xlu0 %v1551, 64
    %v1571 = vpop.permute.xlu0 %1570
    %1572 = vrot.lane.b32.xlu0 %v1552, 64
    %v1573 = vpop.permute.xlu0 %1572
    %1574 = vrot.lane.b32.xlu0 %v1553, 64
    %v1575 = vpop.permute.xlu0 %1574
    %1576 = vrot.lane.b32.xlu0 %v1554, 64
    %v1577 = vpop.permute.xlu0 %1576
    %1578 = vrot.lane.b32.xlu0 %v1555, 64
    %v1579 = vpop.permute.xlu0 %1578
    %1580 = vrot.lane.b32.xlu0 %v1556, 64
    %v1581 = vpop.permute.xlu0 %1580
    %1582 = vrot.lane.b32.xlu0 %v1557, 64
    %v1583 = vpop.permute.xlu0 %1582
    %1584 = vrot.lane.b32.xlu0 %v1558, 64
    %v1585 = vpop.permute.xlu0 %1584
    %v1586 = vsel %vm869, %v1569, %v1571
    %v1587 = vsel %vm869, %v1571, %v1573
    %v1588 = vsel %vm869, %v1573, %v1575
    %v1589 = vsel %vm869, %v1575, %v1577
    %v1590 = vsel %vm869, %v1577, %v1579
    %v1591 = vsel %vm869, %v1579, %v1581
    %v1592 = vsel %vm869, %v1581, %v1583
    %v1593 = vsel %vm869, %v1583, %v1585
    %v1602 = vadd.f32 %v1538, %v1586
    %v1603 = vadd.f32 %v1539, %v1587
    %v1604 = vadd.f32 %v1540, %v1588
    %v1605 = vadd.f32 %v1541, %v1589
    %v1606 = vadd.f32 %v1542, %v1590
    %v1607 = vadd.f32 %v1543, %v1591
    %v1608 = vadd.f32 %v1544, %v1592
    %v1609 = vadd.f32 %v1545, %v1593
    %1610 = vset.pattern.permute.xlu0 31
    %1611 = vperm.xlu0 %1610, %v29
    %v1612 = vpop.permute.xlu0 %1611
    %v1614 = vmul.f32 %v509, %v1612
    %v1615 = vmul.f32 %v513, %v1612
    %v1616 = vmul.f32 %v517, %v1612
    %v1617 = vmul.f32 %v521, %v1612
    %v1618 = vmul.f32 %v525, %v1612
    %v1619 = vmul.f32 %v529, %v1612
    %v1620 = vmul.f32 %v533, %v1612
    %v1621 = vmul.f32 %v537, %v1612
    %v1622 = vmul.f32 %v541, %v1612
    %1632 = vrot.lane.b32.xlu0 %v1614, 64
    %v1633 = vpop.permute.xlu0 %1632
    %1634 = vrot.lane.b32.xlu0 %v1615, 64
    %v1635 = vpop.permute.xlu0 %1634
    %1636 = vrot.lane.b32.xlu0 %v1616, 64
    %v1637 = vpop.permute.xlu0 %1636
    %1638 = vrot.lane.b32.xlu0 %v1617, 64
    %v1639 = vpop.permute.xlu0 %1638
    %1640 = vrot.lane.b32.xlu0 %v1618, 64
    %v1641 = vpop.permute.xlu0 %1640
    %1642 = vrot.lane.b32.xlu0 %v1619, 64
    %v1643 = vpop.permute.xlu0 %1642
    %1644 = vrot.lane.b32.xlu0 %v1620, 64
    %v1645 = vpop.permute.xlu0 %1644
    %1646 = vrot.lane.b32.xlu0 %v1621, 64
    %v1647 = vpop.permute.xlu0 %1646
    %1648 = vrot.lane.b32.xlu0 %v1622, 64
    %v1649 = vpop.permute.xlu0 %1648
    %v1650 = vsel %vm869, %v1633, %v1635
    %v1651 = vsel %vm869, %v1635, %v1637
    %v1652 = vsel %vm869, %v1637, %v1639
    %v1653 = vsel %vm869, %v1639, %v1641
    %v1654 = vsel %vm869, %v1641, %v1643
    %v1655 = vsel %vm869, %v1643, %v1645
    %v1656 = vsel %vm869, %v1645, %v1647
    %v1657 = vsel %vm869, %v1647, %v1649
    %v1666 = vadd.f32 %v1602, %v1650
    %v1667 = vadd.f32 %v1603, %v1651
    %v1668 = vadd.f32 %v1604, %v1652
    %v1669 = vadd.f32 %v1605, %v1653
    %v1670 = vadd.f32 %v1606, %v1654
    %v1671 = vadd.f32 %v1607, %v1655
    %v1672 = vadd.f32 %v1608, %v1656
    %v1673 = vadd.f32 %v1609, %v1657
    %1674 = vset.pattern.permute.xlu0 7
    %1675 = vperm.xlu0 %1674, %v29
    %v1676 = vpop.permute.xlu0 %1675
    %v1678 = vmul.f32 %v199, %v1676
    %v1679 = vmul.f32 %v203, %v1676
    %v1680 = vmul.f32 %v207, %v1676
    %v1681 = vmul.f32 %v211, %v1676
    %v1682 = vmul.f32 %v215, %v1676
    %v1683 = vmul.f32 %v219, %v1676
    %v1684 = vmul.f32 %v223, %v1676
    %v1685 = vmul.f32 %v227, %v1676
    %v1686 = vmul.f32 %v231, %v1676
    %1696 = vrot.lane.b32.xlu0 %v1678, 96
    %v1697 = vpop.permute.xlu0 %1696
    %1698 = vrot.lane.b32.xlu0 %v1679, 96
    %v1699 = vpop.permute.xlu0 %1698
    %1700 = vrot.lane.b32.xlu0 %v1680, 96
    %v1701 = vpop.permute.xlu0 %1700
    %1702 = vrot.lane.b32.xlu0 %v1681, 96
    %v1703 = vpop.permute.xlu0 %1702
    %1704 = vrot.lane.b32.xlu0 %v1682, 96
    %v1705 = vpop.permute.xlu0 %1704
    %1706 = vrot.lane.b32.xlu0 %v1683, 96
    %v1707 = vpop.permute.xlu0 %1706
    %1708 = vrot.lane.b32.xlu0 %v1684, 96
    %v1709 = vpop.permute.xlu0 %1708
    %1710 = vrot.lane.b32.xlu0 %v1685, 96
    %v1711 = vpop.permute.xlu0 %1710
    %1712 = vrot.lane.b32.xlu0 %v1686, 96
    %v1713 = vpop.permute.xlu0 %1712
    %vm1714 = vcmask 785408
    %v1715 = vsel %vm1714, %v1697, %v1699
    %v1716 = vsel %vm1714, %v1699, %v1701
    %v1717 = vsel %vm1714, %v1701, %v1703
    %v1718 = vsel %vm1714, %v1703, %v1705
    %v1719 = vsel %vm1714, %v1705, %v1707
    %v1720 = vsel %vm1714, %v1707, %v1709
    %v1721 = vsel %vm1714, %v1709, %v1711
    %v1722 = vsel %vm1714, %v1711, %v1713
    %v1731 = vadd.f32 %v1666, %v1715
    %v1732 = vadd.f32 %v1667, %v1716
    %v1733 = vadd.f32 %v1668, %v1717
    %v1734 = vadd.f32 %v1669, %v1718
    %v1735 = vadd.f32 %v1670, %v1719
    %v1736 = vadd.f32 %v1671, %v1720
    %v1737 = vadd.f32 %v1672, %v1721
    %v1738 = vadd.f32 %v1673, %v1722
    %1739 = vset.pattern.permute.xlu0 16
    %1740 = vperm.xlu0 %1739, %v29
    %v1741 = vpop.permute.xlu0 %1740
    %v1743 = vmul.f32 %v303, %v1741
    %v1744 = vmul.f32 %v307, %v1741
    %v1745 = vmul.f32 %v311, %v1741
    %v1746 = vmul.f32 %v315, %v1741
    %v1747 = vmul.f32 %v319, %v1741
    %v1748 = vmul.f32 %v323, %v1741
    %v1749 = vmul.f32 %v327, %v1741
    %v1750 = vmul.f32 %v331, %v1741
    %v1751 = vmul.f32 %v335, %v1741
    %1761 = vrot.lane.b32.xlu0 %v1743, 96
    %v1762 = vpop.permute.xlu0 %1761
    %1763 = vrot.lane.b32.xlu0 %v1744, 96
    %v1764 = vpop.permute.xlu0 %1763
    %1765 = vrot.lane.b32.xlu0 %v1745, 96
    %v1766 = vpop.permute.xlu0 %1765
    %1767 = vrot.lane.b32.xlu0 %v1746, 96
    %v1768 = vpop.permute.xlu0 %1767
    %1769 = vrot.lane.b32.xlu0 %v1747, 96
    %v1770 = vpop.permute.xlu0 %1769
    %1771 = vrot.lane.b32.xlu0 %v1748, 96
    %v1772 = vpop.permute.xlu0 %1771
    %1773 = vrot.lane.b32.xlu0 %v1749, 96
    %v1774 = vpop.permute.xlu0 %1773
    %1775 = vrot.lane.b32.xlu0 %v1750, 96
    %v1776 = vpop.permute.xlu0 %1775
    %1777 = vrot.lane.b32.xlu0 %v1751, 96
    %v1778 = vpop.permute.xlu0 %1777
    %v1779 = vsel %vm1714, %v1762, %v1764
    %v1780 = vsel %vm1714, %v1764, %v1766
    %v1781 = vsel %vm1714, %v1766, %v1768
    %v1782 = vsel %vm1714, %v1768, %v1770
    %v1783 = vsel %vm1714, %v1770, %v1772
    %v1784 = vsel %vm1714, %v1772, %v1774
    %v1785 = vsel %vm1714, %v1774, %v1776
    %v1786 = vsel %vm1714, %v1776, %v1778
    %v1795 = vadd.f32 %v1731, %v1779
    %v1796 = vadd.f32 %v1732, %v1780
    %v1797 = vadd.f32 %v1733, %v1781
    %v1798 = vadd.f32 %v1734, %v1782
    %v1799 = vadd.f32 %v1735, %v1783
    %v1800 = vadd.f32 %v1736, %v1784
    %v1801 = vadd.f32 %v1737, %v1785
    %v1802 = vadd.f32 %v1738, %v1786
    %1803 = vset.pattern.permute.xlu0 25
    %1804 = vperm.xlu0 %1803, %v29
    %v1805 = vpop.permute.xlu0 %1804
    %v1807 = vmul.f32 %v406, %v1805
    %v1808 = vmul.f32 %v410, %v1805
    %v1809 = vmul.f32 %v414, %v1805
    %v1810 = vmul.f32 %v418, %v1805
    %v1811 = vmul.f32 %v422, %v1805
    %v1812 = vmul.f32 %v426, %v1805
    %v1813 = vmul.f32 %v430, %v1805
    %v1814 = vmul.f32 %v434, %v1805
    %v1815 = vmul.f32 %v438, %v1805
    %1825 = vrot.lane.b32.xlu0 %v1807, 96
    %v1826 = vpop.permute.xlu0 %1825
    %1827 = vrot.lane.b32.xlu0 %v1808, 96
    %v1828 = vpop.permute.xlu0 %1827
    %1829 = vrot.lane.b32.xlu0 %v1809, 96
    %v1830 = vpop.permute.xlu0 %1829
    %1831 = vrot.lane.b32.xlu0 %v1810, 96
    %v1832 = vpop.permute.xlu0 %1831
    %1833 = vrot.lane.b32.xlu0 %v1811, 96
    %v1834 = vpop.permute.xlu0 %1833
    %1835 = vrot.lane.b32.xlu0 %v1812, 96
    %v1836 = vpop.permute.xlu0 %1835
    %1837 = vrot.lane.b32.xlu0 %v1813, 96
    %v1838 = vpop.permute.xlu0 %1837
    %1839 = vrot.lane.b32.xlu0 %v1814, 96
    %v1840 = vpop.permute.xlu0 %1839
    %1841 = vrot.lane.b32.xlu0 %v1815, 96
    %v1842 = vpop.permute.xlu0 %1841
    %v1843 = vsel %vm1714, %v1826, %v1828
    %v1844 = vsel %vm1714, %v1828, %v1830
    %v1845 = vsel %vm1714, %v1830, %v1832
    %v1846 = vsel %vm1714, %v1832, %v1834
    %v1847 = vsel %vm1714, %v1834, %v1836
    %v1848 = vsel %vm1714, %v1836, %v1838
    %v1849 = vsel %vm1714, %v1838, %v1840
    %v1850 = vsel %vm1714, %v1840, %v1842
    %v1859 = vadd.f32 %v1795, %v1843
    %v1860 = vadd.f32 %v1796, %v1844
    %v1861 = vadd.f32 %v1797, %v1845
    %v1862 = vadd.f32 %v1798, %v1846
    %v1863 = vadd.f32 %v1799, %v1847
    %v1864 = vadd.f32 %v1800, %v1848
    %v1865 = vadd.f32 %v1801, %v1849
    %v1866 = vadd.f32 %v1802, %v1850
    %1867 = vset.pattern.permute.xlu0 34
    %1868 = vperm.xlu0 %1867, %v29
    %v1869 = vpop.permute.xlu0 %1868
    %v1871 = vmul.f32 %v509, %v1869
    %v1872 = vmul.f32 %v513, %v1869
    %v1873 = vmul.f32 %v517, %v1869
    %v1874 = vmul.f32 %v521, %v1869
    %v1875 = vmul.f32 %v525, %v1869
    %v1876 = vmul.f32 %v529, %v1869
    %v1877 = vmul.f32 %v533, %v1869
    %v1878 = vmul.f32 %v537, %v1869
    %v1879 = vmul.f32 %v541, %v1869
    %1889 = vrot.lane.b32.xlu0 %v1871, 96
    %v1890 = vpop.permute.xlu0 %1889
    %1891 = vrot.lane.b32.xlu0 %v1872, 96
    %v1892 = vpop.permute.xlu0 %1891
    %1893 = vrot.lane.b32.xlu0 %v1873, 96
    %v1894 = vpop.permute.xlu0 %1893
    %1895 = vrot.lane.b32.xlu0 %v1874, 96
    %v1896 = vpop.permute.xlu0 %1895
    %1897 = vrot.lane.b32.xlu0 %v1875, 96
    %v1898 = vpop.permute.xlu0 %1897
    %1899 = vrot.lane.b32.xlu0 %v1876, 96
    %v1900 = vpop.permute.xlu0 %1899
    %1901 = vrot.lane.b32.xlu0 %v1877, 96
    %v1902 = vpop.permute.xlu0 %1901
    %1903 = vrot.lane.b32.xlu0 %v1878, 96
    %v1904 = vpop.permute.xlu0 %1903
    %1905 = vrot.lane.b32.xlu0 %v1879, 96
    %v1906 = vpop.permute.xlu0 %1905
    %v1907 = vsel %vm1714, %v1890, %v1892
    %v1908 = vsel %vm1714, %v1892, %v1894
    %v1909 = vsel %vm1714, %v1894, %v1896
    %v1910 = vsel %vm1714, %v1896, %v1898
    %v1911 = vsel %vm1714, %v1898, %v1900
    %v1912 = vsel %vm1714, %v1900, %v1902
    %v1913 = vsel %vm1714, %v1902, %v1904
    %v1914 = vsel %vm1714, %v1904, %v1906
    %v1923 = vadd.f32 %v1859, %v1907
    %v1924 = vadd.f32 %v1860, %v1908
    %v1925 = vadd.f32 %v1861, %v1909
    %v1926 = vadd.f32 %v1862, %v1910
    %v1927 = vadd.f32 %v1863, %v1911
    %v1928 = vadd.f32 %v1864, %v1912
    %v1929 = vadd.f32 %v1865, %v1913
    %v1930 = vadd.f32 %v1866, %v1914
    %1931 = vset.pattern.permute.xlu0 2
    %1932 = vperm.xlu0 %1931, %v29
    %v1933 = vpop.permute.xlu0 %1932
    %v1935 = vmul.f32 %v199, %v1933
    %v1936 = vmul.f32 %v203, %v1933
    %v1937 = vmul.f32 %v207, %v1933
    %v1938 = vmul.f32 %v211, %v1933
    %v1939 = vmul.f32 %v215, %v1933
    %v1940 = vmul.f32 %v219, %v1933
    %v1941 = vmul.f32 %v223, %v1933
    %v1942 = vmul.f32 %v227, %v1933
    %v1943 = vmul.f32 %v231, %v1933
    %1953 = vrot.lane.b32.xlu0 %v1935, 33
    %v1954 = vpop.permute.xlu0 %1953
    %1955 = vrot.lane.b32.xlu0 %v1936, 33
    %v1956 = vpop.permute.xlu0 %1955
    %1957 = vrot.lane.b32.xlu0 %v1937, 33
    %v1958 = vpop.permute.xlu0 %1957
    %1959 = vrot.lane.b32.xlu0 %v1938, 33
    %v1960 = vpop.permute.xlu0 %1959
    %1961 = vrot.lane.b32.xlu0 %v1939, 33
    %v1962 = vpop.permute.xlu0 %1961
    %1963 = vrot.lane.b32.xlu0 %v1940, 33
    %v1964 = vpop.permute.xlu0 %1963
    %1965 = vrot.lane.b32.xlu0 %v1941, 33
    %v1966 = vpop.permute.xlu0 %1965
    %1967 = vrot.lane.b32.xlu0 %v1942, 33
    %v1968 = vpop.permute.xlu0 %1967
    %1969 = vrot.lane.b32.xlu0 %v1943, 33
    %v1970 = vpop.permute.xlu0 %1969
    %vm1971 = vcmask 269312
    %v1972 = vsel %vm1971, %v1954, %v1956
    %v1973 = vsel %vm1971, %v1956, %v1958
    %v1974 = vsel %vm1971, %v1958, %v1960
    %v1975 = vsel %vm1971, %v1960, %v1962
    %v1976 = vsel %vm1971, %v1962, %v1964
    %v1977 = vsel %vm1971, %v1964, %v1966
    %v1978 = vsel %vm1971, %v1966, %v1968
    %v1979 = vsel %vm1971, %v1968, %v1970
    %v1988 = vadd.f32 %v1923, %v1972
    %v1989 = vadd.f32 %v1924, %v1973
    %v1990 = vadd.f32 %v1925, %v1974
    %v1991 = vadd.f32 %v1926, %v1975
    %v1992 = vadd.f32 %v1927, %v1976
    %v1993 = vadd.f32 %v1928, %v1977
    %v1994 = vadd.f32 %v1929, %v1978
    %v1995 = vadd.f32 %v1930, %v1979
    %1996 = vset.pattern.permute.xlu0 11
    %1997 = vperm.xlu0 %1996, %v29
    %v1998 = vpop.permute.xlu0 %1997
    %v2000 = vmul.f32 %v303, %v1998
    %v2001 = vmul.f32 %v307, %v1998
    %v2002 = vmul.f32 %v311, %v1998
    %v2003 = vmul.f32 %v315, %v1998
    %v2004 = vmul.f32 %v319, %v1998
    %v2005 = vmul.f32 %v323, %v1998
    %v2006 = vmul.f32 %v327, %v1998
    %v2007 = vmul.f32 %v331, %v1998
    %v2008 = vmul.f32 %v335, %v1998
    %2018 = vrot.lane.b32.xlu0 %v2000, 33
    %v2019 = vpop.permute.xlu0 %2018
    %2020 = vrot.lane.b32.xlu0 %v2001, 33
    %v2021 = vpop.permute.xlu0 %2020
    %2022 = vrot.lane.b32.xlu0 %v2002, 33
    %v2023 = vpop.permute.xlu0 %2022
    %2024 = vrot.lane.b32.xlu0 %v2003, 33
    %v2025 = vpop.permute.xlu0 %2024
    %2026 = vrot.lane.b32.xlu0 %v2004, 33
    %v2027 = vpop.permute.xlu0 %2026
    %2028 = vrot.lane.b32.xlu0 %v2005, 33
    %v2029 = vpop.permute.xlu0 %2028
    %2030 = vrot.lane.b32.xlu0 %v2006, 33
    %v2031 = vpop.permute.xlu0 %2030
    %2032 = vrot.lane.b32.xlu0 %v2007, 33
    %v2033 = vpop.permute.xlu0 %2032
    %2034 = vrot.lane.b32.xlu0 %v2008, 33
    %v2035 = vpop.permute.xlu0 %2034
    %v2036 = vsel %vm1971, %v2019, %v2021
    %v2037 = vsel %vm1971, %v2021, %v2023
    %v2038 = vsel %vm1971, %v2023, %v2025
    %v2039 = vsel %vm1971, %v2025, %v2027
    %v2040 = vsel %vm1971, %v2027, %v2029
    %v2041 = vsel %vm1971, %v2029, %v2031
    %v2042 = vsel %vm1971, %v2031, %v2033
    %v2043 = vsel %vm1971, %v2033, %v2035
    %v2052 = vadd.f32 %v1988, %v2036
    %v2053 = vadd.f32 %v1989, %v2037
    %v2054 = vadd.f32 %v1990, %v2038
    %v2055 = vadd.f32 %v1991, %v2039
    %v2056 = vadd.f32 %v1992, %v2040
    %v2057 = vadd.f32 %v1993, %v2041
    %v2058 = vadd.f32 %v1994, %v2042
    %v2059 = vadd.f32 %v1995, %v2043
    %2060 = vset.pattern.permute.xlu0 20
    %2061 = vperm.xlu0 %2060, %v29
    %v2062 = vpop.permute.xlu0 %2061
    %v2064 = vmul.f32 %v406, %v2062
    %v2065 = vmul.f32 %v410, %v2062
    %v2066 = vmul.f32 %v414, %v2062
    %v2067 = vmul.f32 %v418, %v2062
    %v2068 = vmul.f32 %v422, %v2062
    %v2069 = vmul.f32 %v426, %v2062
    %v2070 = vmul.f32 %v430, %v2062
    %v2071 = vmul.f32 %v434, %v2062
    %v2072 = vmul.f32 %v438, %v2062
    %2082 = vrot.lane.b32.xlu0 %v2064, 33
    %v2083 = vpop.permute.xlu0 %2082
    %2084 = vrot.lane.b32.xlu0 %v2065, 33
    %v2085 = vpop.permute.xlu0 %2084
    %2086 = vrot.lane.b32.xlu0 %v2066, 33
    %v2087 = vpop.permute.xlu0 %2086
    %2088 = vrot.lane.b32.xlu0 %v2067, 33
    %v2089 = vpop.permute.xlu0 %2088
    %2090 = vrot.lane.b32.xlu0 %v2068, 33
    %v2091 = vpop.permute.xlu0 %2090
    %2092 = vrot.lane.b32.xlu0 %v2069, 33
    %v2093 = vpop.permute.xlu0 %2092
    %2094 = vrot.lane.b32.xlu0 %v2070, 33
    %v2095 = vpop.permute.xlu0 %2094
    %2096 = vrot.lane.b32.xlu0 %v2071, 33
    %v2097 = vpop.permute.xlu0 %2096
    %2098 = vrot.lane.b32.xlu0 %v2072, 33
    %v2099 = vpop.permute.xlu0 %2098
    %v2100 = vsel %vm1971, %v2083, %v2085
    %v2101 = vsel %vm1971, %v2085, %v2087
    %v2102 = vsel %vm1971, %v2087, %v2089
    %v2103 = vsel %vm1971, %v2089, %v2091
    %v2104 = vsel %vm1971, %v2091, %v2093
    %v2105 = vsel %vm1971, %v2093, %v2095
    %v2106 = vsel %vm1971, %v2095, %v2097
    %v2107 = vsel %vm1971, %v2097, %v2099
    %v2116 = vadd.f32 %v2052, %v2100
    %v2117 = vadd.f32 %v2053, %v2101
    %v2118 = vadd.f32 %v2054, %v2102
    %v2119 = vadd.f32 %v2055, %v2103
    %v2120 = vadd.f32 %v2056, %v2104
    %v2121 = vadd.f32 %v2057, %v2105
    %v2122 = vadd.f32 %v2058, %v2106
    %v2123 = vadd.f32 %v2059, %v2107
    %2124 = vset.pattern.permute.xlu0 29
    %2125 = vperm.xlu0 %2124, %v29
    %v2126 = vpop.permute.xlu0 %2125
    %v2128 = vmul.f32 %v509, %v2126
    %v2129 = vmul.f32 %v513, %v2126
    %v2130 = vmul.f32 %v517, %v2126
    %v2131 = vmul.f32 %v521, %v2126
    %v2132 = vmul.f32 %v525, %v2126
    %v2133 = vmul.f32 %v529, %v2126
    %v2134 = vmul.f32 %v533, %v2126
    %v2135 = vmul.f32 %v537, %v2126
    %v2136 = vmul.f32 %v541, %v2126
    %2146 = vrot.lane.b32.xlu0 %v2128, 33
    %v2147 = vpop.permute.xlu0 %2146
    %2148 = vrot.lane.b32.xlu0 %v2129, 33
    %v2149 = vpop.permute.xlu0 %2148
    %2150 = vrot.lane.b32.xlu0 %v2130, 33
    %v2151 = vpop.permute.xlu0 %2150
    %2152 = vrot.lane.b32.xlu0 %v2131, 33
    %v2153 = vpop.permute.xlu0 %2152
    %2154 = vrot.lane.b32.xlu0 %v2132, 33
    %v2155 = vpop.permute.xlu0 %2154
    %2156 = vrot.lane.b32.xlu0 %v2133, 33
    %v2157 = vpop.permute.xlu0 %2156
    %2158 = vrot.lane.b32.xlu0 %v2134, 33
    %v2159 = vpop.permute.xlu0 %2158
    %2160 = vrot.lane.b32.xlu0 %v2135, 33
    %v2161 = vpop.permute.xlu0 %2160
    %2162 = vrot.lane.b32.xlu0 %v2136, 33
    %v2163 = vpop.permute.xlu0 %2162
    %v2164 = vsel %vm1971, %v2147, %v2149
    %v2165 = vsel %vm1971, %v2149, %v2151
    %v2166 = vsel %vm1971, %v2151, %v2153
    %v2167 = vsel %vm1971, %v2153, %v2155
    %v2168 = vsel %vm1971, %v2155, %v2157
    %v2169 = vsel %vm1971, %v2157, %v2159
    %v2170 = vsel %vm1971, %v2159, %v2161
    %v2171 = vsel %vm1971, %v2161, %v2163
    %v2180 = vadd.f32 %v2116, %v2164
    %v2181 = vadd.f32 %v2117, %v2165
    %v2182 = vadd.f32 %v2118, %v2166
    %v2183 = vadd.f32 %v2119, %v2167
    %v2184 = vadd.f32 %v2120, %v2168
    %v2185 = vadd.f32 %v2121, %v2169
    %v2186 = vadd.f32 %v2122, %v2170
    %v2187 = vadd.f32 %v2123, %v2171
    %2188 = vset.pattern.permute.xlu0 5
    %2189 = vperm.xlu0 %2188, %v29
    %v2190 = vpop.permute.xlu0 %2189
    %v2192 = vmul.f32 %v199, %v2190
    %v2193 = vmul.f32 %v203, %v2190
    %v2194 = vmul.f32 %v207, %v2190
    %v2195 = vmul.f32 %v211, %v2190
    %v2196 = vmul.f32 %v215, %v2190
    %v2197 = vmul.f32 %v219, %v2190
    %v2198 = vmul.f32 %v223, %v2190
    %v2199 = vmul.f32 %v227, %v2190
    %v2200 = vmul.f32 %v231, %v2190
    %2210 = vrot.lane.b32.xlu0 %v2192, 65
    %v2211 = vpop.permute.xlu0 %2210
    %2212 = vrot.lane.b32.xlu0 %v2193, 65
    %v2213 = vpop.permute.xlu0 %2212
    %2214 = vrot.lane.b32.xlu0 %v2194, 65
    %v2215 = vpop.permute.xlu0 %2214
    %2216 = vrot.lane.b32.xlu0 %v2195, 65
    %v2217 = vpop.permute.xlu0 %2216
    %2218 = vrot.lane.b32.xlu0 %v2196, 65
    %v2219 = vpop.permute.xlu0 %2218
    %2220 = vrot.lane.b32.xlu0 %v2197, 65
    %v2221 = vpop.permute.xlu0 %2220
    %2222 = vrot.lane.b32.xlu0 %v2198, 65
    %v2223 = vpop.permute.xlu0 %2222
    %2224 = vrot.lane.b32.xlu0 %v2199, 65
    %v2225 = vpop.permute.xlu0 %2224
    %2226 = vrot.lane.b32.xlu0 %v2200, 65
    %v2227 = vpop.permute.xlu0 %2226
    %vm2228 = vcmask 531456
    %v2229 = vsel %vm2228, %v2211, %v2213
    %v2230 = vsel %vm2228, %v2213, %v2215
    %v2231 = vsel %vm2228, %v2215, %v2217
    %v2232 = vsel %vm2228, %v2217, %v2219
    %v2233 = vsel %vm2228, %v2219, %v2221
    %v2234 = vsel %vm2228, %v2221, %v2223
    %v2235 = vsel %vm2228, %v2223, %v2225
    %v2236 = vsel %vm2228, %v2225, %v2227
    %v2245 = vadd.f32 %v2180, %v2229
    %v2246 = vadd.f32 %v2181, %v2230
    %v2247 = vadd.f32 %v2182, %v2231
    %v2248 = vadd.f32 %v2183, %v2232
    %v2249 = vadd.f32 %v2184, %v2233
    %v2250 = vadd.f32 %v2185, %v2234
    %v2251 = vadd.f32 %v2186, %v2235
    %v2252 = vadd.f32 %v2187, %v2236
    %2253 = vset.pattern.permute.xlu0 14
    %2254 = vperm.xlu0 %2253, %v29
    %v2255 = vpop.permute.xlu0 %2254
    %v2257 = vmul.f32 %v303, %v2255
    %v2258 = vmul.f32 %v307, %v2255
    %v2259 = vmul.f32 %v311, %v2255
    %v2260 = vmul.f32 %v315, %v2255
    %v2261 = vmul.f32 %v319, %v2255
    %v2262 = vmul.f32 %v323, %v2255
    %v2263 = vmul.f32 %v327, %v2255
    %v2264 = vmul.f32 %v331, %v2255
    %v2265 = vmul.f32 %v335, %v2255
    %2275 = vrot.lane.b32.xlu0 %v2257, 65
    %v2276 = vpop.permute.xlu0 %2275
    %2277 = vrot.lane.b32.xlu0 %v2258, 65
    %v2278 = vpop.permute.xlu0 %2277
    %2279 = vrot.lane.b32.xlu0 %v2259, 65
    %v2280 = vpop.permute.xlu0 %2279
    %2281 = vrot.lane.b32.xlu0 %v2260, 65
    %v2282 = vpop.permute.xlu0 %2281
    %2283 = vrot.lane.b32.xlu0 %v2261, 65
    %v2284 = vpop.permute.xlu0 %2283
    %2285 = vrot.lane.b32.xlu0 %v2262, 65
    %v2286 = vpop.permute.xlu0 %2285
    %2287 = vrot.lane.b32.xlu0 %v2263, 65
    %v2288 = vpop.permute.xlu0 %2287
    %2289 = vrot.lane.b32.xlu0 %v2264, 65
    %v2290 = vpop.permute.xlu0 %2289
    %2291 = vrot.lane.b32.xlu0 %v2265, 65
    %v2292 = vpop.permute.xlu0 %2291
    %v2293 = vsel %vm2228, %v2276, %v2278
    %v2294 = vsel %vm2228, %v2278, %v2280
    %v2295 = vsel %vm2228, %v2280, %v2282
    %v2296 = vsel %vm2228, %v2282, %v2284
    %v2297 = vsel %vm2228, %v2284, %v2286
    %v2298 = vsel %vm2228, %v2286, %v2288
    %v2299 = vsel %vm2228, %v2288, %v2290
    %v2300 = vsel %vm2228, %v2290, %v2292
    %v2309 = vadd.f32 %v2245, %v2293
    %v2310 = vadd.f32 %v2246, %v2294
    %v2311 = vadd.f32 %v2247, %v2295
    %v2312 = vadd.f32 %v2248, %v2296
    %v2313 = vadd.f32 %v2249, %v2297
    %v2314 = vadd.f32 %v2250, %v2298
    %v2315 = vadd.f32 %v2251, %v2299
    %v2316 = vadd.f32 %v2252, %v2300
    %2317 = vset.pattern.permute.xlu0 23
    %2318 = vperm.xlu0 %2317, %v29
    %v2319 = vpop.permute.xlu0 %2318
    %v2321 = vmul.f32 %v406, %v2319
    %v2322 = vmul.f32 %v410, %v2319
    %v2323 = vmul.f32 %v414, %v2319
    %v2324 = vmul.f32 %v418, %v2319
    %v2325 = vmul.f32 %v422, %v2319
    %v2326 = vmul.f32 %v426, %v2319
    %v2327 = vmul.f32 %v430, %v2319
    %v2328 = vmul.f32 %v434, %v2319
    %v2329 = vmul.f32 %v438, %v2319
    %2339 = vrot.lane.b32.xlu0 %v2321, 65
    %v2340 = vpop.permute.xlu0 %2339
    %2341 = vrot.lane.b32.xlu0 %v2322, 65
    %v2342 = vpop.permute.xlu0 %2341
    %2343 = vrot.lane.b32.xlu0 %v2323, 65
    %v2344 = vpop.permute.xlu0 %2343
    %2345 = vrot.lane.b32.xlu0 %v2324, 65
    %v2346 = vpop.permute.xlu0 %2345
    %2347 = vrot.lane.b32.xlu0 %v2325, 65
    %v2348 = vpop.permute.xlu0 %2347
    %2349 = vrot.lane.b32.xlu0 %v2326, 65
    %v2350 = vpop.permute.xlu0 %2349
    %2351 = vrot.lane.b32.xlu0 %v2327, 65
    %v2352 = vpop.permute.xlu0 %2351
    %2353 = vrot.lane.b32.xlu0 %v2328, 65
    %v2354 = vpop.permute.xlu0 %2353
    %2355 = vrot.lane.b32.xlu0 %v2329, 65
    %v2356 = vpop.permute.xlu0 %2355
    %v2357 = vsel %vm2228, %v2340, %v2342
    %v2358 = vsel %vm2228, %v2342, %v2344
    %v2359 = vsel %vm2228, %v2344, %v2346
    %v2360 = vsel %vm2228, %v2346, %v2348
    %v2361 = vsel %vm2228, %v2348, %v2350
    %v2362 = vsel %vm2228, %v2350, %v2352
    %v2363 = vsel %vm2228, %v2352, %v2354
    %v2364 = vsel %vm2228, %v2354, %v2356
    %v2373 = vadd.f32 %v2309, %v2357
    %v2374 = vadd.f32 %v2310, %v2358
    %v2375 = vadd.f32 %v2311, %v2359
    %v2376 = vadd.f32 %v2312, %v2360
    %v2377 = vadd.f32 %v2313, %v2361
    %v2378 = vadd.f32 %v2314, %v2362
    %v2379 = vadd.f32 %v2315, %v2363
    %v2380 = vadd.f32 %v2316, %v2364
    %2381 = vset.pattern.permute.xlu0 32
    %2382 = vperm.xlu0 %2381, %v29
    %v2383 = vpop.permute.xlu0 %2382
    %v2385 = vmul.f32 %v509, %v2383
    %v2386 = vmul.f32 %v513, %v2383
    %v2387 = vmul.f32 %v517, %v2383
    %v2388 = vmul.f32 %v521, %v2383
    %v2389 = vmul.f32 %v525, %v2383
    %v2390 = vmul.f32 %v529, %v2383
    %v2391 = vmul.f32 %v533, %v2383
    %v2392 = vmul.f32 %v537, %v2383
    %v2393 = vmul.f32 %v541, %v2383
    %2403 = vrot.lane.b32.xlu0 %v2385, 65
    %v2404 = vpop.permute.xlu0 %2403
    %2405 = vrot.lane.b32.xlu0 %v2386, 65
    %v2406 = vpop.permute.xlu0 %2405
    %2407 = vrot.lane.b32.xlu0 %v2387, 65
    %v2408 = vpop.permute.xlu0 %2407
    %2409 = vrot.lane.b32.xlu0 %v2388, 65
    %v2410 = vpop.permute.xlu0 %2409
    %2411 = vrot.lane.b32.xlu0 %v2389, 65
    %v2412 = vpop.permute.xlu0 %2411
    %2413 = vrot.lane.b32.xlu0 %v2390, 65
    %v2414 = vpop.permute.xlu0 %2413
    %2415 = vrot.lane.b32.xlu0 %v2391, 65
    %v2416 = vpop.permute.xlu0 %2415
    %2417 = vrot.lane.b32.xlu0 %v2392, 65
    %v2418 = vpop.permute.xlu0 %2417
    %2419 = vrot.lane.b32.xlu0 %v2393, 65
    %v2420 = vpop.permute.xlu0 %2419
    %v2421 = vsel %vm2228, %v2404, %v2406
    %v2422 = vsel %vm2228, %v2406, %v2408
    %v2423 = vsel %vm2228, %v2408, %v2410
    %v2424 = vsel %vm2228, %v2410, %v2412
    %v2425 = vsel %vm2228, %v2412, %v2414
    %v2426 = vsel %vm2228, %v2414, %v2416
    %v2427 = vsel %vm2228, %v2416, %v2418
    %v2428 = vsel %vm2228, %v2418, %v2420
    %v2437 = vadd.f32 %v2373, %v2421
    %v2438 = vadd.f32 %v2374, %v2422
    %v2439 = vadd.f32 %v2375, %v2423
    %v2440 = vadd.f32 %v2376, %v2424
    %v2441 = vadd.f32 %v2377, %v2425
    %v2442 = vadd.f32 %v2378, %v2426
    %v2443 = vadd.f32 %v2379, %v2427
    %v2444 = vadd.f32 %v2380, %v2428
    %2445 = vset.pattern.permute.xlu0 8
    %2446 = vperm.xlu0 %2445, %v29
    %v2447 = vpop.permute.xlu0 %2446
    %v2449 = vmul.f32 %v199, %v2447
    %v2450 = vmul.f32 %v203, %v2447
    %v2451 = vmul.f32 %v207, %v2447
    %v2452 = vmul.f32 %v211, %v2447
    %v2453 = vmul.f32 %v215, %v2447
    %v2454 = vmul.f32 %v219, %v2447
    %v2455 = vmul.f32 %v223, %v2447
    %v2456 = vmul.f32 %v227, %v2447
    %v2457 = vmul.f32 %v231, %v2447
    %2467 = vrot.lane.b32.xlu0 %v2449, 97
    %v2468 = vpop.permute.xlu0 %2467
    %2469 = vrot.lane.b32.xlu0 %v2450, 97
    %v2470 = vpop.permute.xlu0 %2469
    %2471 = vrot.lane.b32.xlu0 %v2451, 97
    %v2472 = vpop.permute.xlu0 %2471
    %2473 = vrot.lane.b32.xlu0 %v2452, 97
    %v2474 = vpop.permute.xlu0 %2473
    %2475 = vrot.lane.b32.xlu0 %v2453, 97
    %v2476 = vpop.permute.xlu0 %2475
    %2477 = vrot.lane.b32.xlu0 %v2454, 97
    %v2478 = vpop.permute.xlu0 %2477
    %2479 = vrot.lane.b32.xlu0 %v2455, 97
    %v2480 = vpop.permute.xlu0 %2479
    %2481 = vrot.lane.b32.xlu0 %v2456, 97
    %v2482 = vpop.permute.xlu0 %2481
    %2483 = vrot.lane.b32.xlu0 %v2457, 97
    %v2484 = vpop.permute.xlu0 %2483
    %vm2485 = vcmask 793600
    %v2486 = vsel %vm2485, %v2468, %v2470
    %v2487 = vsel %vm2485, %v2470, %v2472
    %v2488 = vsel %vm2485, %v2472, %v2474
    %v2489 = vsel %vm2485, %v2474, %v2476
    %v2490 = vsel %vm2485, %v2476, %v2478
    %v2491 = vsel %vm2485, %v2478, %v2480
    %v2492 = vsel %vm2485, %v2480, %v2482
    %v2493 = vsel %vm2485, %v2482, %v2484
    %v2502 = vadd.f32 %v2437, %v2486
    %v2503 = vadd.f32 %v2438, %v2487
    %v2504 = vadd.f32 %v2439, %v2488
    %v2505 = vadd.f32 %v2440, %v2489
    %v2506 = vadd.f32 %v2441, %v2490
    %v2507 = vadd.f32 %v2442, %v2491
    %v2508 = vadd.f32 %v2443, %v2492
    %v2509 = vadd.f32 %v2444, %v2493
    %2510 = vset.pattern.permute.xlu0 17
    %2511 = vperm.xlu0 %2510, %v29
    %v2512 = vpop.permute.xlu0 %2511
    %v2514 = vmul.f32 %v303, %v2512
    %v2515 = vmul.f32 %v307, %v2512
    %v2516 = vmul.f32 %v311, %v2512
    %v2517 = vmul.f32 %v315, %v2512
    %v2518 = vmul.f32 %v319, %v2512
    %v2519 = vmul.f32 %v323, %v2512
    %v2520 = vmul.f32 %v327, %v2512
    %v2521 = vmul.f32 %v331, %v2512
    %v2522 = vmul.f32 %v335, %v2512
    %2532 = vrot.lane.b32.xlu0 %v2514, 97
    %v2533 = vpop.permute.xlu0 %2532
    %2534 = vrot.lane.b32.xlu0 %v2515, 97
    %v2535 = vpop.permute.xlu0 %2534
    %2536 = vrot.lane.b32.xlu0 %v2516, 97
    %v2537 = vpop.permute.xlu0 %2536
    %2538 = vrot.lane.b32.xlu0 %v2517, 97
    %v2539 = vpop.permute.xlu0 %2538
    %2540 = vrot.lane.b32.xlu0 %v2518, 97
    %v2541 = vpop.permute.xlu0 %2540
    %2542 = vrot.lane.b32.xlu0 %v2519, 97
    %v2543 = vpop.permute.xlu0 %2542
    %2544 = vrot.lane.b32.xlu0 %v2520, 97
    %v2545 = vpop.permute.xlu0 %2544
    %2546 = vrot.lane.b32.xlu0 %v2521, 97
    %v2547 = vpop.permute.xlu0 %2546
    %2548 = vrot.lane.b32.xlu0 %v2522, 97
    %v2549 = vpop.permute.xlu0 %2548
    %v2550 = vsel %vm2485, %v2533, %v2535
    %v2551 = vsel %vm2485, %v2535, %v2537
    %v2552 = vsel %vm2485, %v2537, %v2539
    %v2553 = vsel %vm2485, %v2539, %v2541
    %v2554 = vsel %vm2485, %v2541, %v2543
    %v2555 = vsel %vm2485, %v2543, %v2545
    %v2556 = vsel %vm2485, %v2545, %v2547
    %v2557 = vsel %vm2485, %v2547, %v2549
    %v2566 = vadd.f32 %v2502, %v2550
    %v2567 = vadd.f32 %v2503, %v2551
    %v2568 = vadd.f32 %v2504, %v2552
    %v2569 = vadd.f32 %v2505, %v2553
    %v2570 = vadd.f32 %v2506, %v2554
    %v2571 = vadd.f32 %v2507, %v2555
    %v2572 = vadd.f32 %v2508, %v2556
    %v2573 = vadd.f32 %v2509, %v2557
    %2574 = vset.pattern.permute.xlu0 26
    %2575 = vperm.xlu0 %2574, %v29
    %v2576 = vpop.permute.xlu0 %2575
    %v2578 = vmul.f32 %v406, %v2576
    %v2579 = vmul.f32 %v410, %v2576
    %v2580 = vmul.f32 %v414, %v2576
    %v2581 = vmul.f32 %v418, %v2576
    %v2582 = vmul.f32 %v422, %v2576
    %v2583 = vmul.f32 %v426, %v2576
    %v2584 = vmul.f32 %v430, %v2576
    %v2585 = vmul.f32 %v434, %v2576
    %v2586 = vmul.f32 %v438, %v2576
    %2596 = vrot.lane.b32.xlu0 %v2578, 97
    %v2597 = vpop.permute.xlu0 %2596
    %2598 = vrot.lane.b32.xlu0 %v2579, 97
    %v2599 = vpop.permute.xlu0 %2598
    %2600 = vrot.lane.b32.xlu0 %v2580, 97
    %v2601 = vpop.permute.xlu0 %2600
    %2602 = vrot.lane.b32.xlu0 %v2581, 97
    %v2603 = vpop.permute.xlu0 %2602
    %2604 = vrot.lane.b32.xlu0 %v2582, 97
    %v2605 = vpop.permute.xlu0 %2604
    %2606 = vrot.lane.b32.xlu0 %v2583, 97
    %v2607 = vpop.permute.xlu0 %2606
    %2608 = vrot.lane.b32.xlu0 %v2584, 97
    %v2609 = vpop.permute.xlu0 %2608
    %2610 = vrot.lane.b32.xlu0 %v2585, 97
    %v2611 = vpop.permute.xlu0 %2610
    %2612 = vrot.lane.b32.xlu0 %v2586, 97
    %v2613 = vpop.permute.xlu0 %2612
    %v2614 = vsel %vm2485, %v2597, %v2599
    %v2615 = vsel %vm2485, %v2599, %v2601
    %v2616 = vsel %vm2485, %v2601, %v2603
    %v2617 = vsel %vm2485, %v2603, %v2605
    %v2618 = vsel %vm2485, %v2605, %v2607
    %v2619 = vsel %vm2485, %v2607, %v2609
    %v2620 = vsel %vm2485, %v2609, %v2611
    %v2621 = vsel %vm2485, %v2611, %v2613
    %v2630 = vadd.f32 %v2566, %v2614
    %v2631 = vadd.f32 %v2567, %v2615
    %v2632 = vadd.f32 %v2568, %v2616
    %v2633 = vadd.f32 %v2569, %v2617
    %v2634 = vadd.f32 %v2570, %v2618
    %v2635 = vadd.f32 %v2571, %v2619
    %v2636 = vadd.f32 %v2572, %v2620
    %v2637 = vadd.f32 %v2573, %v2621
    %2638 = vset.pattern.permute.xlu0 35
    %2639 = vperm.xlu0 %2638, %v29
    %v2640 = vpop.permute.xlu0 %2639
    %v2642 = vmul.f32 %v509, %v2640
    %v2643 = vmul.f32 %v513, %v2640
    %v2644 = vmul.f32 %v517, %v2640
    %v2645 = vmul.f32 %v521, %v2640
    %v2646 = vmul.f32 %v525, %v2640
    %v2647 = vmul.f32 %v529, %v2640
    %v2648 = vmul.f32 %v533, %v2640
    %v2649 = vmul.f32 %v537, %v2640
    %v2650 = vmul.f32 %v541, %v2640
    %2660 = vrot.lane.b32.xlu0 %v2642, 97
    %v2661 = vpop.permute.xlu0 %2660
    %2662 = vrot.lane.b32.xlu0 %v2643, 97
    %v2663 = vpop.permute.xlu0 %2662
    %2664 = vrot.lane.b32.xlu0 %v2644, 97
    %v2665 = vpop.permute.xlu0 %2664
    %2666 = vrot.lane.b32.xlu0 %v2645, 97
    %v2667 = vpop.permute.xlu0 %2666
    %2668 = vrot.lane.b32.xlu0 %v2646, 97
    %v2669 = vpop.permute.xlu0 %2668
    %2670 = vrot.lane.b32.xlu0 %v2647, 97
    %v2671 = vpop.permute.xlu0 %2670
    %2672 = vrot.lane.b32.xlu0 %v2648, 97
    %v2673 = vpop.permute.xlu0 %2672
    %2674 = vrot.lane.b32.xlu0 %v2649, 97
    %v2675 = vpop.permute.xlu0 %2674
    %2676 = vrot.lane.b32.xlu0 %v2650, 97
    %v2677 = vpop.permute.xlu0 %2676
    %v2678 = vsel %vm2485, %v2661, %v2663
    %v2679 = vsel %vm2485, %v2663, %v2665
    %v2680 = vsel %vm2485, %v2665, %v2667
    %v2681 = vsel %vm2485, %v2667, %v2669
    %v2682 = vsel %vm2485, %v2669, %v2671
    %v2683 = vsel %vm2485, %v2671, %v2673
    %v2684 = vsel %vm2485, %v2673, %v2675
    %v2685 = vsel %vm2485, %v2675, %v2677
    %v2694 = vadd.f32 %v2630, %v2678
    %v2695 = vadd.f32 %v2631, %v2679
    %v2696 = vadd.f32 %v2632, %v2680
    %v2697 = vadd.f32 %v2633, %v2681
    %v2698 = vadd.f32 %v2634, %v2682
    %v2699 = vadd.f32 %v2635, %v2683
    %v2700 = vadd.f32 %v2636, %v2684
    %v2701 = vadd.f32 %v2637, %v2685
    %v2702 = vmax.f32 %v2694, 0.0
    %v2703 = vmax.f32 %v2695, 0.0
    %v2704 = vmax.f32 %v2696, 0.0
    %v2705 = vmax.f32 %v2697, 0.0
    %v2706 = vmax.f32 %v2698, 0.0
    %v2707 = vmax.f32 %v2699, 0.0
    %v2708 = vmax.f32 %v2700, 0.0
    %v2709 = vmax.f32 %v2701, 0.0
    %2710 = vst [vmem:[#allocation5] sm:$0xff] %v2702
    %2711 = vst [vmem:[#allocation5 + $0x8] sm:$0xff] %v2703
    %2712 = vst [vmem:[#allocation5 + $0x10] sm:$0xff] %v2704
    %2713 = vst [vmem:[#allocation5 + $0x18] sm:$0xff] %v2705
    %2714 = vst [vmem:[#allocation5 + $0x20] sm:$0xff] %v2706
    %2715 = vst [vmem:[#allocation5 + $0x28] sm:$0xff] %v2707
    %2716 = vst [vmem:[#allocation5 + $0x30] sm:$0xff] %v2708
    %2717 = vst [vmem:[#allocation5 + $0x38] sm:$0xff] %v2709
    %s2718 = scalar_lea.vmem [#allocation2], 36
    %v2719 = vld [vmem:[%s2718] sm:$0xff]
    %v2720 = vld [vmem:[%s2718 + $0x8] sm:$0xff]
    %v2721 = vld [vmem:[%s2718 + $0x10] sm:$0xff]
    %v2722 = vld [vmem:[%s2718 + $0x18] sm:$0xff]
    %v2723 = vld [vmem:[%s2718 + $0x20] sm:$0xf]
    %v2729 = vlaneseq
    %v2730 = vshrl.u32 %v2729, 7
    %v2731 = vsub.s32 0, %v2730
    %v2732 = vrot.slane %v2719, %v2731
    %v2733 = vlaneseq
    %v2734 = vshrl.u32 %v2733, 7
    %v2735 = vsub.s32 4, %v2734
    %v2736 = vrot.slane %v2719, %v2735
    %v2737 = vlaneseq
    %v2738 = vshrl.u32 %v2737, 7
    %v2739 = vsub.s32 0, %v2738
    %v2740 = vrot.slane %v2720, %v2739
    %v2741 = vlaneseq
    %v2742 = vshrl.u32 %v2741, 7
    %v2743 = vsub.s32 4, %v2742
    %v2744 = vrot.slane %v2720, %v2743
    %v2745 = vlaneseq
    %v2746 = vshrl.u32 %v2745, 7
    %v2747 = vsub.s32 0, %v2746
    %v2748 = vrot.slane %v2721, %v2747
    %v2749 = vlaneseq
    %v2750 = vshrl.u32 %v2749, 7
    %v2751 = vsub.s32 4, %v2750
    %v2752 = vrot.slane %v2721, %v2751
    %v2753 = vlaneseq
    %v2754 = vshrl.u32 %v2753, 7
    %v2755 = vsub.s32 0, %v2754
    %v2756 = vrot.slane %v2722, %v2755
    %v2757 = vlaneseq
    %v2758 = vshrl.u32 %v2757, 7
    %v2759 = vsub.s32 4, %v2758
    %v2760 = vrot.slane %v2722, %v2759
    %v2761 = vlaneseq
    %v2762 = vshrl.u32 %v2761, 7
    %v2763 = vsub.s32 0, %v2762
    %v2764 = vrot.slane %v2723, %v2763
    %v2774 = vlaneseq
    %v2775 = vshrl.u32 %v2774, 7
    %v2776 = vsub.s32 0, %v2775
    %v2777 = vrot.slane %v2732, %v2776
    %v2778 = vlaneseq
    %v2779 = vshrl.u32 %v2778, 7
    %v2780 = vsub.s32 0, %v2779
    %v2781 = vrot.slane %v2736, %v2780
    %v2782 = vlaneseq
    %v2783 = vshrl.u32 %v2782, 7
    %v2784 = vsub.s32 0, %v2783
    %v2785 = vrot.slane %v2740, %v2784
    %v2786 = vlaneseq
    %v2787 = vshrl.u32 %v2786, 7
    %v2788 = vsub.s32 0, %v2787
    %v2789 = vrot.slane %v2744, %v2788
    %v2790 = vlaneseq
    %v2791 = vshrl.u32 %v2790, 7
    %v2792 = vsub.s32 0, %v2791
    %v2793 = vrot.slane %v2748, %v2792
    %v2794 = vlaneseq
    %v2795 = vshrl.u32 %v2794, 7
    %v2796 = vsub.s32 0, %v2795
    %v2797 = vrot.slane %v2752, %v2796
    %v2798 = vlaneseq
    %v2799 = vshrl.u32 %v2798, 7
    %v2800 = vsub.s32 0, %v2799
    %v2801 = vrot.slane %v2756, %v2800
    %v2802 = vlaneseq
    %v2803 = vshrl.u32 %v2802, 7
    %v2804 = vsub.s32 0, %v2803
    %v2805 = vrot.slane %v2760, %v2804
    %v2806 = vlaneseq
    %v2807 = vshrl.u32 %v2806, 7
    %v2808 = vsub.s32 0, %v2807
    %v2809 = vrot.slane %v2764, %v2808
    %v2810 = vmul.f32 %v2777, %v235
    %v2811 = vmul.f32 %v2781, %v235
    %v2812 = vmul.f32 %v2785, %v235
    %v2813 = vmul.f32 %v2789, %v235
    %v2814 = vmul.f32 %v2793, %v235
    %v2815 = vmul.f32 %v2797, %v235
    %v2816 = vmul.f32 %v2801, %v235
    %v2817 = vmul.f32 %v2805, %v235
    %v2818 = vmul.f32 %v2809, %v235
    %v2819 = vadd.f32 %v2810, 0.0
    %v2820 = vadd.f32 %v2811, 0.0
    %v2821 = vadd.f32 %v2812, 0.0
    %v2822 = vadd.f32 %v2813, 0.0
    %v2823 = vadd.f32 %v2814, 0.0
    %v2824 = vadd.f32 %v2815, 0.0
    %v2825 = vadd.f32 %v2816, 0.0
    %v2826 = vadd.f32 %v2817, 0.0
    %v2827 = vadd.f32 %v2818, 0.0
    %v2828 = vlaneseq
    %v2829 = vshrl.u32 %v2828, 7
    %v2830 = vsub.s32 1, %v2829
    %v2831 = vrot.slane %v2719, %v2830
    %v2832 = vlaneseq
    %v2833 = vshrl.u32 %v2832, 7
    %v2834 = vsub.s32 5, %v2833
    %v2835 = vrot.slane %v2719, %v2834
    %v2836 = vlaneseq
    %v2837 = vshrl.u32 %v2836, 7
    %v2838 = vsub.s32 1, %v2837
    %v2839 = vrot.slane %v2720, %v2838
    %v2840 = vlaneseq
    %v2841 = vshrl.u32 %v2840, 7
    %v2842 = vsub.s32 5, %v2841
    %v2843 = vrot.slane %v2720, %v2842
    %v2844 = vlaneseq
    %v2845 = vshrl.u32 %v2844, 7
    %v2846 = vsub.s32 1, %v2845
    %v2847 = vrot.slane %v2721, %v2846
    %v2848 = vlaneseq
    %v2849 = vshrl.u32 %v2848, 7
    %v2850 = vsub.s32 5, %v2849
    %v2851 = vrot.slane %v2721, %v2850
    %v2852 = vlaneseq
    %v2853 = vshrl.u32 %v2852, 7
    %v2854 = vsub.s32 1, %v2853
    %v2855 = vrot.slane %v2722, %v2854
    %v2856 = vlaneseq
    %v2857 = vshrl.u32 %v2856, 7
    %v2858 = vsub.s32 5, %v2857
    %v2859 = vrot.slane %v2722, %v2858
    %v2860 = vlaneseq
    %v2861 = vshrl.u32 %v2860, 7
    %v2862 = vsub.s32 1, %v2861
    %v2863 = vrot.slane %v2723, %v2862
    %v2873 = vlaneseq
    %v2874 = vshrl.u32 %v2873, 7
    %v2875 = vsub.s32 1, %v2874
    %v2876 = vrot.slane %v2831, %v2875
    %v2877 = vlaneseq
    %v2878 = vshrl.u32 %v2877, 7
    %v2879 = vsub.s32 1, %v2878
    %v2880 = vrot.slane %v2835, %v2879
    %v2881 = vlaneseq
    %v2882 = vshrl.u32 %v2881, 7
    %v2883 = vsub.s32 1, %v2882
    %v2884 = vrot.slane %v2839, %v2883
    %v2885 = vlaneseq
    %v2886 = vshrl.u32 %v2885, 7
    %v2887 = vsub.s32 1, %v2886
    %v2888 = vrot.slane %v2843, %v2887
    %v2889 = vlaneseq
    %v2890 = vshrl.u32 %v2889, 7
    %v2891 = vsub.s32 1, %v2890
    %v2892 = vrot.slane %v2847, %v2891
    %v2893 = vlaneseq
    %v2894 = vshrl.u32 %v2893, 7
    %v2895 = vsub.s32 1, %v2894
    %v2896 = vrot.slane %v2851, %v2895
    %v2897 = vlaneseq
    %v2898 = vshrl.u32 %v2897, 7
    %v2899 = vsub.s32 1, %v2898
    %v2900 = vrot.slane %v2855, %v2899
    %v2901 = vlaneseq
    %v2902 = vshrl.u32 %v2901, 7
    %v2903 = vsub.s32 1, %v2902
    %v2904 = vrot.slane %v2859, %v2903
    %v2905 = vlaneseq
    %v2906 = vshrl.u32 %v2905, 7
    %v2907 = vsub.s32 1, %v2906
    %v2908 = vrot.slane %v2863, %v2907
    %v2909 = vmul.f32 %v2876, %v338
    %v2910 = vmul.f32 %v2880, %v338
    %v2911 = vmul.f32 %v2884, %v338
    %v2912 = vmul.f32 %v2888, %v338
    %v2913 = vmul.f32 %v2892, %v338
    %v2914 = vmul.f32 %v2896, %v338
    %v2915 = vmul.f32 %v2900, %v338
    %v2916 = vmul.f32 %v2904, %v338
    %v2917 = vmul.f32 %v2908, %v338
    %v2918 = vadd.f32 %v2819, %v2909
    %v2919 = vadd.f32 %v2820, %v2910
    %v2920 = vadd.f32 %v2821, %v2911
    %v2921 = vadd.f32 %v2822, %v2912
    %v2922 = vadd.f32 %v2823, %v2913
    %v2923 = vadd.f32 %v2824, %v2914
    %v2924 = vadd.f32 %v2825, %v2915
    %v2925 = vadd.f32 %v2826, %v2916
    %v2926 = vadd.f32 %v2827, %v2917
    %v2927 = vlaneseq
    %v2928 = vshrl.u32 %v2927, 7
    %v2929 = vsub.s32 2, %v2928
    %v2930 = vrot.slane %v2719, %v2929
    %v2931 = vlaneseq
    %v2932 = vshrl.u32 %v2931, 7
    %v2933 = vsub.s32 6, %v2932
    %v2934 = vrot.slane %v2719, %v2933
    %v2935 = vlaneseq
    %v2936 = vshrl.u32 %v2935, 7
    %v2937 = vsub.s32 2, %v2936
    %v2938 = vrot.slane %v2720, %v2937
    %v2939 = vlaneseq
    %v2940 = vshrl.u32 %v2939, 7
    %v2941 = vsub.s32 6, %v2940
    %v2942 = vrot.slane %v2720, %v2941
    %v2943 = vlaneseq
    %v2944 = vshrl.u32 %v2943, 7
    %v2945 = vsub.s32 2, %v2944
    %v2946 = vrot.slane %v2721, %v2945
    %v2947 = vlaneseq
    %v2948 = vshrl.u32 %v2947, 7
    %v2949 = vsub.s32 6, %v2948
    %v2950 = vrot.slane %v2721, %v2949
    %v2951 = vlaneseq
    %v2952 = vshrl.u32 %v2951, 7
    %v2953 = vsub.s32 2, %v2952
    %v2954 = vrot.slane %v2722, %v2953
    %v2955 = vlaneseq
    %v2956 = vshrl.u32 %v2955, 7
    %v2957 = vsub.s32 6, %v2956
    %v2958 = vrot.slane %v2722, %v2957
    %v2959 = vlaneseq
    %v2960 = vshrl.u32 %v2959, 7
    %v2961 = vsub.s32 2, %v2960
    %v2962 = vrot.slane %v2723, %v2961
    %v2972 = vlaneseq
    %v2973 = vshrl.u32 %v2972, 7
    %v2974 = vsub.s32 2, %v2973
    %v2975 = vrot.slane %v2930, %v2974
    %v2976 = vlaneseq
    %v2977 = vshrl.u32 %v2976, 7
    %v2978 = vsub.s32 2, %v2977
    %v2979 = vrot.slane %v2934, %v2978
    %v2980 = vlaneseq
    %v2981 = vshrl.u32 %v2980, 7
    %v2982 = vsub.s32 2, %v2981
    %v2983 = vrot.slane %v2938, %v2982
    %v2984 = vlaneseq
    %v2985 = vshrl.u32 %v2984, 7
    %v2986 = vsub.s32 2, %v2985
    %v2987 = vrot.slane %v2942, %v2986
    %v2988 = vlaneseq
    %v2989 = vshrl.u32 %v2988, 7
    %v2990 = vsub.s32 2, %v2989
    %v2991 = vrot.slane %v2946, %v2990
    %v2992 = vlaneseq
    %v2993 = vshrl.u32 %v2992, 7
    %v2994 = vsub.s32 2, %v2993
    %v2995 = vrot.slane %v2950, %v2994
    %v2996 = vlaneseq
    %v2997 = vshrl.u32 %v2996, 7
    %v2998 = vsub.s32 2, %v2997
    %v2999 = vrot.slane %v2954, %v2998
    %v3000 = vlaneseq
    %v3001 = vshrl.u32 %v3000, 7
    %v3002 = vsub.s32 2, %v3001
    %v3003 = vrot.slane %v2958, %v3002
    %v3004 = vlaneseq
    %v3005 = vshrl.u32 %v3004, 7
    %v3006 = vsub.s32 2, %v3005
    %v3007 = vrot.slane %v2962, %v3006
    %v3008 = vmul.f32 %v2975, %v441
    %v3009 = vmul.f32 %v2979, %v441
    %v3010 = vmul.f32 %v2983, %v441
    %v3011 = vmul.f32 %v2987, %v441
    %v3012 = vmul.f32 %v2991, %v441
    %v3013 = vmul.f32 %v2995, %v441
    %v3014 = vmul.f32 %v2999, %v441
    %v3015 = vmul.f32 %v3003, %v441
    %v3016 = vmul.f32 %v3007, %v441
    %v3017 = vadd.f32 %v2918, %v3008
    %v3018 = vadd.f32 %v2919, %v3009
    %v3019 = vadd.f32 %v2920, %v3010
    %v3020 = vadd.f32 %v2921, %v3011
    %v3021 = vadd.f32 %v2922, %v3012
    %v3022 = vadd.f32 %v2923, %v3013
    %v3023 = vadd.f32 %v2924, %v3014
    %v3024 = vadd.f32 %v2925, %v3015
    %v3025 = vadd.f32 %v2926, %v3016
    %v3026 = vlaneseq
    %v3027 = vshrl.u32 %v3026, 7
    %v3028 = vsub.s32 3, %v3027
    %v3029 = vrot.slane %v2719, %v3028
    %v3030 = vlaneseq
    %v3031 = vshrl.u32 %v3030, 7
    %v3032 = vsub.s32 7, %v3031
    %v3033 = vrot.slane %v2719, %v3032
    %v3034 = vlaneseq
    %v3035 = vshrl.u32 %v3034, 7
    %v3036 = vsub.s32 3, %v3035
    %v3037 = vrot.slane %v2720, %v3036
    %v3038 = vlaneseq
    %v3039 = vshrl.u32 %v3038, 7
    %v3040 = vsub.s32 7, %v3039
    %v3041 = vrot.slane %v2720, %v3040
    %v3042 = vlaneseq
    %v3043 = vshrl.u32 %v3042, 7
    %v3044 = vsub.s32 3, %v3043
    %v3045 = vrot.slane %v2721, %v3044
    %v3046 = vlaneseq
    %v3047 = vshrl.u32 %v3046, 7
    %v3048 = vsub.s32 7, %v3047
    %v3049 = vrot.slane %v2721, %v3048
    %v3050 = vlaneseq
    %v3051 = vshrl.u32 %v3050, 7
    %v3052 = vsub.s32 3, %v3051
    %v3053 = vrot.slane %v2722, %v3052
    %v3054 = vlaneseq
    %v3055 = vshrl.u32 %v3054, 7
    %v3056 = vsub.s32 7, %v3055
    %v3057 = vrot.slane %v2722, %v3056
    %v3058 = vlaneseq
    %v3059 = vshrl.u32 %v3058, 7
    %v3060 = vsub.s32 3, %v3059
    %v3061 = vrot.slane %v2723, %v3060
    %v3071 = vlaneseq
    %v3072 = vshrl.u32 %v3071, 7
    %v3073 = vsub.s32 3, %v3072
    %v3074 = vrot.slane %v3029, %v3073
    %v3075 = vlaneseq
    %v3076 = vshrl.u32 %v3075, 7
    %v3077 = vsub.s32 3, %v3076
    %v3078 = vrot.slane %v3033, %v3077
    %v3079 = vlaneseq
    %v3080 = vshrl.u32 %v3079, 7
    %v3081 = vsub.s32 3, %v3080
    %v3082 = vrot.slane %v3037, %v3081
    %v3083 = vlaneseq
    %v3084 = vshrl.u32 %v3083, 7
    %v3085 = vsub.s32 3, %v3084
    %v3086 = vrot.slane %v3041, %v3085
    %v3087 = vlaneseq
    %v3088 = vshrl.u32 %v3087, 7
    %v3089 = vsub.s32 3, %v3088
    %v3090 = vrot.slane %v3045, %v3089
    %v3091 = vlaneseq
    %v3092 = vshrl.u32 %v3091, 7
    %v3093 = vsub.s32 3, %v3092
    %v3094 = vrot.slane %v3049, %v3093
    %v3095 = vlaneseq
    %v3096 = vshrl.u32 %v3095, 7
    %v3097 = vsub.s32 3, %v3096
    %v3098 = vrot.slane %v3053, %v3097
    %v3099 = vlaneseq
    %v3100 = vshrl.u32 %v3099, 7
    %v3101 = vsub.s32 3, %v3100
    %v3102 = vrot.slane %v3057, %v3101
    %v3103 = vlaneseq
    %v3104 = vshrl.u32 %v3103, 7
    %v3105 = vsub.s32 3, %v3104
    %v3106 = vrot.slane %v3061, %v3105
    %v3107 = vmul.f32 %v3074, %v544
    %v3108 = vmul.f32 %v3078, %v544
    %v3109 = vmul.f32 %v3082, %v544
    %v3110 = vmul.f32 %v3086, %v544
    %v3111 = vmul.f32 %v3090, %v544
    %v3112 = vmul.f32 %v3094, %v544
    %v3113 = vmul.f32 %v3098, %v544
    %v3114 = vmul.f32 %v3102, %v544
    %v3115 = vmul.f32 %v3106, %v544
    %v3116 = vadd.f32 %v3017, %v3107
    %v3117 = vadd.f32 %v3018, %v3108
    %v3118 = vadd.f32 %v3019, %v3109
    %v3119 = vadd.f32 %v3020, %v3110
    %v3120 = vadd.f32 %v3021, %v3111
    %v3121 = vadd.f32 %v3022, %v3112
    %v3122 = vadd.f32 %v3023, %v3113
    %v3123 = vadd.f32 %v3024, %v3114
    %v3124 = vadd.f32 %v3025, %v3115
    %v3125 = vmul.f32 %v2777, %v566
    %v3126 = vmul.f32 %v2781, %v566
    %v3127 = vmul.f32 %v2785, %v566
    %v3128 = vmul.f32 %v2789, %v566
    %v3129 = vmul.f32 %v2793, %v566
    %v3130 = vmul.f32 %v2797, %v566
    %v3131 = vmul.f32 %v2801, %v566
    %v3132 = vmul.f32 %v2805, %v566
    %v3133 = vmul.f32 %v2809, %v566
    %3143 = vrot.lane.b32.xlu0 %v3125, 32
    %v3144 = vpop.permute.xlu0 %3143
    %3145 = vrot.lane.b32.xlu0 %v3126, 32
    %v3146 = vpop.permute.xlu0 %3145
    %3147 = vrot.lane.b32.xlu0 %v3127, 32
    %v3148 = vpop.permute.xlu0 %3147
    %3149 = vrot.lane.b32.xlu0 %v3128, 32
    %v3150 = vpop.permute.xlu0 %3149
    %3151 = vrot.lane.b32.xlu0 %v3129, 32
    %v3152 = vpop.permute.xlu0 %3151
    %3153 = vrot.lane.b32.xlu0 %v3130, 32
    %v3154 = vpop.permute.xlu0 %3153
    %3155 = vrot.lane.b32.xlu0 %v3131, 32
    %v3156 = vpop.permute.xlu0 %3155
    %3157 = vrot.lane.b32.xlu0 %v3132, 32
    %v3158 = vpop.permute.xlu0 %3157
    %3159 = vrot.lane.b32.xlu0 %v3133, 32
    %v3160 = vpop.permute.xlu0 %3159
    %v3161 = vsel %vm604, %v3144, %v3146
    %v3162 = vsel %vm604, %v3146, %v3148
    %v3163 = vsel %vm604, %v3148, %v3150
    %v3164 = vsel %vm604, %v3150, %v3152
    %v3165 = vsel %vm604, %v3152, %v3154
    %v3166 = vsel %vm604, %v3154, %v3156
    %v3167 = vsel %vm604, %v3156, %v3158
    %v3168 = vsel %vm604, %v3158, %v3160
    %v3178 = vadd.f32 %v3116, %v3144
    %v3179 = vadd.f32 %v3117, %v3161
    %v3180 = vadd.f32 %v3118, %v3162
    %v3181 = vadd.f32 %v3119, %v3163
    %v3182 = vadd.f32 %v3120, %v3164
    %v3183 = vadd.f32 %v3121, %v3165
    %v3184 = vadd.f32 %v3122, %v3166
    %v3185 = vadd.f32 %v3123, %v3167
    %v3186 = vadd.f32 %v3124, %v3168
    %v3187 = vmul.f32 %v2876, %v633
    %v3188 = vmul.f32 %v2880, %v633
    %v3189 = vmul.f32 %v2884, %v633
    %v3190 = vmul.f32 %v2888, %v633
    %v3191 = vmul.f32 %v2892, %v633
    %v3192 = vmul.f32 %v2896, %v633
    %v3193 = vmul.f32 %v2900, %v633
    %v3194 = vmul.f32 %v2904, %v633
    %v3195 = vmul.f32 %v2908, %v633
    %3205 = vrot.lane.b32.xlu0 %v3187, 32
    %v3206 = vpop.permute.xlu0 %3205
    %3207 = vrot.lane.b32.xlu0 %v3188, 32
    %v3208 = vpop.permute.xlu0 %3207
    %3209 = vrot.lane.b32.xlu0 %v3189, 32
    %v3210 = vpop.permute.xlu0 %3209
    %3211 = vrot.lane.b32.xlu0 %v3190, 32
    %v3212 = vpop.permute.xlu0 %3211
    %3213 = vrot.lane.b32.xlu0 %v3191, 32
    %v3214 = vpop.permute.xlu0 %3213
    %3215 = vrot.lane.b32.xlu0 %v3192, 32
    %v3216 = vpop.permute.xlu0 %3215
    %3217 = vrot.lane.b32.xlu0 %v3193, 32
    %v3218 = vpop.permute.xlu0 %3217
    %3219 = vrot.lane.b32.xlu0 %v3194, 32
    %v3220 = vpop.permute.xlu0 %3219
    %3221 = vrot.lane.b32.xlu0 %v3195, 32
    %v3222 = vpop.permute.xlu0 %3221
    %v3223 = vsel %vm604, %v3206, %v3208
    %v3224 = vsel %vm604, %v3208, %v3210
    %v3225 = vsel %vm604, %v3210, %v3212
    %v3226 = vsel %vm604, %v3212, %v3214
    %v3227 = vsel %vm604, %v3214, %v3216
    %v3228 = vsel %vm604, %v3216, %v3218
    %v3229 = vsel %vm604, %v3218, %v3220
    %v3230 = vsel %vm604, %v3220, %v3222
    %v3240 = vadd.f32 %v3178, %v3206
    %v3241 = vadd.f32 %v3179, %v3223
    %v3242 = vadd.f32 %v3180, %v3224
    %v3243 = vadd.f32 %v3181, %v3225
    %v3244 = vadd.f32 %v3182, %v3226
    %v3245 = vadd.f32 %v3183, %v3227
    %v3246 = vadd.f32 %v3184, %v3228
    %v3247 = vadd.f32 %v3185, %v3229
    %v3248 = vadd.f32 %v3186, %v3230
    %v3249 = vmul.f32 %v2975, %v699
    %v3250 = vmul.f32 %v2979, %v699
    %v3251 = vmul.f32 %v2983, %v699
    %v3252 = vmul.f32 %v2987, %v699
    %v3253 = vmul.f32 %v2991, %v699
    %v3254 = vmul.f32 %v2995, %v699
    %v3255 = vmul.f32 %v2999, %v699
    %v3256 = vmul.f32 %v3003, %v699
    %v3257 = vmul.f32 %v3007, %v699
    %3267 = vrot.lane.b32.xlu0 %v3249, 32
    %v3268 = vpop.permute.xlu0 %3267
    %3269 = vrot.lane.b32.xlu0 %v3250, 32
    %v3270 = vpop.permute.xlu0 %3269
    %3271 = vrot.lane.b32.xlu0 %v3251, 32
    %v3272 = vpop.permute.xlu0 %3271
    %3273 = vrot.lane.b32.xlu0 %v3252, 32
    %v3274 = vpop.permute.xlu0 %3273
    %3275 = vrot.lane.b32.xlu0 %v3253, 32
    %v3276 = vpop.permute.xlu0 %3275
    %3277 = vrot.lane.b32.xlu0 %v3254, 32
    %v3278 = vpop.permute.xlu0 %3277
    %3279 = vrot.lane.b32.xlu0 %v3255, 32
    %v3280 = vpop.permute.xlu0 %3279
    %3281 = vrot.lane.b32.xlu0 %v3256, 32
    %v3282 = vpop.permute.xlu0 %3281
    %3283 = vrot.lane.b32.xlu0 %v3257, 32
    %v3284 = vpop.permute.xlu0 %3283
    %v3285 = vsel %vm604, %v3268, %v3270
    %v3286 = vsel %vm604, %v3270, %v3272
    %v3287 = vsel %vm604, %v3272, %v3274
    %v3288 = vsel %vm604, %v3274, %v3276
    %v3289 = vsel %vm604, %v3276, %v3278
    %v3290 = vsel %vm604, %v3278, %v3280
    %v3291 = vsel %vm604, %v3280, %v3282
    %v3292 = vsel %vm604, %v3282, %v3284
    %v3302 = vadd.f32 %v3240, %v3268
    %v3303 = vadd.f32 %v3241, %v3285
    %v3304 = vadd.f32 %v3242, %v3286
    %v3305 = vadd.f32 %v3243, %v3287
    %v3306 = vadd.f32 %v3244, %v3288
    %v3307 = vadd.f32 %v3245, %v3289
    %v3308 = vadd.f32 %v3246, %v3290
    %v3309 = vadd.f32 %v3247, %v3291
    %v3310 = vadd.f32 %v3248, %v3292
    %v3311 = vmul.f32 %v3074, %v765
    %v3312 = vmul.f32 %v3078, %v765
    %v3313 = vmul.f32 %v3082, %v765
    %v3314 = vmul.f32 %v3086, %v765
    %v3315 = vmul.f32 %v3090, %v765
    %v3316 = vmul.f32 %v3094, %v765
    %v3317 = vmul.f32 %v3098, %v765
    %v3318 = vmul.f32 %v3102, %v765
    %v3319 = vmul.f32 %v3106, %v765
    %3329 = vrot.lane.b32.xlu0 %v3311, 32
    %v3330 = vpop.permute.xlu0 %3329
    %3331 = vrot.lane.b32.xlu0 %v3312, 32
    %v3332 = vpop.permute.xlu0 %3331
    %3333 = vrot.lane.b32.xlu0 %v3313, 32
    %v3334 = vpop.permute.xlu0 %3333
    %3335 = vrot.lane.b32.xlu0 %v3314, 32
    %v3336 = vpop.permute.xlu0 %3335
    %3337 = vrot.lane.b32.xlu0 %v3315, 32
    %v3338 = vpop.permute.xlu0 %3337
    %3339 = vrot.lane.b32.xlu0 %v3316, 32
    %v3340 = vpop.permute.xlu0 %3339
    %3341 = vrot.lane.b32.xlu0 %v3317, 32
    %v3342 = vpop.permute.xlu0 %3341
    %3343 = vrot.lane.b32.xlu0 %v3318, 32
    %v3344 = vpop.permute.xlu0 %3343
    %3345 = vrot.lane.b32.xlu0 %v3319, 32
    %v3346 = vpop.permute.xlu0 %3345
    %v3347 = vsel %vm604, %v3330, %v3332
    %v3348 = vsel %vm604, %v3332, %v3334
    %v3349 = vsel %vm604, %v3334, %v3336
    %v3350 = vsel %vm604, %v3336, %v3338
    %v3351 = vsel %vm604, %v3338, %v3340
    %v3352 = vsel %vm604, %v3340, %v3342
    %v3353 = vsel %vm604, %v3342, %v3344
    %v3354 = vsel %vm604, %v3344, %v3346
    %v3364 = vadd.f32 %v3302, %v3330
    %v3365 = vadd.f32 %v3303, %v3347
    %v3366 = vadd.f32 %v3304, %v3348
    %v3367 = vadd.f32 %v3305, %v3349
    %v3368 = vadd.f32 %v3306, %v3350
    %v3369 = vadd.f32 %v3307, %v3351
    %v3370 = vadd.f32 %v3308, %v3352
    %v3371 = vadd.f32 %v3309, %v3353
    %v3372 = vadd.f32 %v3310, %v3354
    %v3373 = vmul.f32 %v2777, %v831
    %v3374 = vmul.f32 %v2781, %v831
    %v3375 = vmul.f32 %v2785, %v831
    %v3376 = vmul.f32 %v2789, %v831
    %v3377 = vmul.f32 %v2793, %v831
    %v3378 = vmul.f32 %v2797, %v831
    %v3379 = vmul.f32 %v2801, %v831
    %v3380 = vmul.f32 %v2805, %v831
    %v3381 = vmul.f32 %v2809, %v831
    %3391 = vrot.lane.b32.xlu0 %v3373, 64
    %v3392 = vpop.permute.xlu0 %3391
    %3393 = vrot.lane.b32.xlu0 %v3374, 64
    %v3394 = vpop.permute.xlu0 %3393
    %3395 = vrot.lane.b32.xlu0 %v3375, 64
    %v3396 = vpop.permute.xlu0 %3395
    %3397 = vrot.lane.b32.xlu0 %v3376, 64
    %v3398 = vpop.permute.xlu0 %3397
    %3399 = vrot.lane.b32.xlu0 %v3377, 64
    %v3400 = vpop.permute.xlu0 %3399
    %3401 = vrot.lane.b32.xlu0 %v3378, 64
    %v3402 = vpop.permute.xlu0 %3401
    %3403 = vrot.lane.b32.xlu0 %v3379, 64
    %v3404 = vpop.permute.xlu0 %3403
    %3405 = vrot.lane.b32.xlu0 %v3380, 64
    %v3406 = vpop.permute.xlu0 %3405
    %3407 = vrot.lane.b32.xlu0 %v3381, 64
    %v3408 = vpop.permute.xlu0 %3407
    %v3409 = vsel %vm869, %v3392, %v3394
    %v3410 = vsel %vm869, %v3394, %v3396
    %v3411 = vsel %vm869, %v3396, %v3398
    %v3412 = vsel %vm869, %v3398, %v3400
    %v3413 = vsel %vm869, %v3400, %v3402
    %v3414 = vsel %vm869, %v3402, %v3404
    %v3415 = vsel %vm869, %v3404, %v3406
    %v3416 = vsel %vm869, %v3406, %v3408
    %v3426 = vadd.f32 %v3364, %v3392
    %v3427 = vadd.f32 %v3365, %v3409
    %v3428 = vadd.f32 %v3366, %v3410
    %v3429 = vadd.f32 %v3367, %v3411
    %v3430 = vadd.f32 %v3368, %v3412
    %v3431 = vadd.f32 %v3369, %v3413
    %v3432 = vadd.f32 %v3370, %v3414
    %v3433 = vadd.f32 %v3371, %v3415
    %v3434 = vadd.f32 %v3372, %v3416
    %v3435 = vmul.f32 %v2876, %v898
    %v3436 = vmul.f32 %v2880, %v898
    %v3437 = vmul.f32 %v2884, %v898
    %v3438 = vmul.f32 %v2888, %v898
    %v3439 = vmul.f32 %v2892, %v898
    %v3440 = vmul.f32 %v2896, %v898
    %v3441 = vmul.f32 %v2900, %v898
    %v3442 = vmul.f32 %v2904, %v898
    %v3443 = vmul.f32 %v2908, %v898
    %3453 = vrot.lane.b32.xlu0 %v3435, 64
    %v3454 = vpop.permute.xlu0 %3453
    %3455 = vrot.lane.b32.xlu0 %v3436, 64
    %v3456 = vpop.permute.xlu0 %3455
    %3457 = vrot.lane.b32.xlu0 %v3437, 64
    %v3458 = vpop.permute.xlu0 %3457
    %3459 = vrot.lane.b32.xlu0 %v3438, 64
    %v3460 = vpop.permute.xlu0 %3459
    %3461 = vrot.lane.b32.xlu0 %v3439, 64
    %v3462 = vpop.permute.xlu0 %3461
    %3463 = vrot.lane.b32.xlu0 %v3440, 64
    %v3464 = vpop.permute.xlu0 %3463
    %3465 = vrot.lane.b32.xlu0 %v3441, 64
    %v3466 = vpop.permute.xlu0 %3465
    %3467 = vrot.lane.b32.xlu0 %v3442, 64
    %v3468 = vpop.permute.xlu0 %3467
    %3469 = vrot.lane.b32.xlu0 %v3443, 64
    %v3470 = vpop.permute.xlu0 %3469
    %v3471 = vsel %vm869, %v3454, %v3456
    %v3472 = vsel %vm869, %v3456, %v3458
    %v3473 = vsel %vm869, %v3458, %v3460
    %v3474 = vsel %vm869, %v3460, %v3462
    %v3475 = vsel %vm869, %v3462, %v3464
    %v3476 = vsel %vm869, %v3464, %v3466
    %v3477 = vsel %vm869, %v3466, %v3468
    %v3478 = vsel %vm869, %v3468, %v3470
    %v3488 = vadd.f32 %v3426, %v3454
    %v3489 = vadd.f32 %v3427, %v3471
    %v3490 = vadd.f32 %v3428, %v3472
    %v3491 = vadd.f32 %v3429, %v3473
    %v3492 = vadd.f32 %v3430, %v3474
    %v3493 = vadd.f32 %v3431, %v3475
    %v3494 = vadd.f32 %v3432, %v3476
    %v3495 = vadd.f32 %v3433, %v3477
    %v3496 = vadd.f32 %v3434, %v3478
    %v3497 = vmul.f32 %v2975, %v964
    %v3498 = vmul.f32 %v2979, %v964
    %v3499 = vmul.f32 %v2983, %v964
    %v3500 = vmul.f32 %v2987, %v964
    %v3501 = vmul.f32 %v2991, %v964
    %v3502 = vmul.f32 %v2995, %v964
    %v3503 = vmul.f32 %v2999, %v964
    %v3504 = vmul.f32 %v3003, %v964
    %v3505 = vmul.f32 %v3007, %v964
    %3515 = vrot.lane.b32.xlu0 %v3497, 64
    %v3516 = vpop.permute.xlu0 %3515
    %3517 = vrot.lane.b32.xlu0 %v3498, 64
    %v3518 = vpop.permute.xlu0 %3517
    %3519 = vrot.lane.b32.xlu0 %v3499, 64
    %v3520 = vpop.permute.xlu0 %3519
    %3521 = vrot.lane.b32.xlu0 %v3500, 64
    %v3522 = vpop.permute.xlu0 %3521
    %3523 = vrot.lane.b32.xlu0 %v3501, 64
    %v3524 = vpop.permute.xlu0 %3523
    %3525 = vrot.lane.b32.xlu0 %v3502, 64
    %v3526 = vpop.permute.xlu0 %3525
    %3527 = vrot.lane.b32.xlu0 %v3503, 64
    %v3528 = vpop.permute.xlu0 %3527
    %3529 = vrot.lane.b32.xlu0 %v3504, 64
    %v3530 = vpop.permute.xlu0 %3529
    %3531 = vrot.lane.b32.xlu0 %v3505, 64
    %v3532 = vpop.permute.xlu0 %3531
    %v3533 = vsel %vm869, %v3516, %v3518
    %v3534 = vsel %vm869, %v3518, %v3520
    %v3535 = vsel %vm869, %v3520, %v3522
    %v3536 = vsel %vm869, %v3522, %v3524
    %v3537 = vsel %vm869, %v3524, %v3526
    %v3538 = vsel %vm869, %v3526, %v3528
    %v3539 = vsel %vm869, %v3528, %v3530
    %v3540 = vsel %vm869, %v3530, %v3532
    %v3550 = vadd.f32 %v3488, %v3516
    %v3551 = vadd.f32 %v3489, %v3533
    %v3552 = vadd.f32 %v3490, %v3534
    %v3553 = vadd.f32 %v3491, %v3535
    %v3554 = vadd.f32 %v3492, %v3536
    %v3555 = vadd.f32 %v3493, %v3537
    %v3556 = vadd.f32 %v3494, %v3538
    %v3557 = vadd.f32 %v3495, %v3539
    %v3558 = vadd.f32 %v3496, %v3540
    %v3559 = vmul.f32 %v3074, %v1030
    %v3560 = vmul.f32 %v3078, %v1030
    %v3561 = vmul.f32 %v3082, %v1030
    %v3562 = vmul.f32 %v3086, %v1030
    %v3563 = vmul.f32 %v3090, %v1030
    %v3564 = vmul.f32 %v3094, %v1030
    %v3565 = vmul.f32 %v3098, %v1030
    %v3566 = vmul.f32 %v3102, %v1030
    %v3567 = vmul.f32 %v3106, %v1030
    %3577 = vrot.lane.b32.xlu0 %v3559, 64
    %v3578 = vpop.permute.xlu0 %3577
    %3579 = vrot.lane.b32.xlu0 %v3560, 64
    %v3580 = vpop.permute.xlu0 %3579
    %3581 = vrot.lane.b32.xlu0 %v3561, 64
    %v3582 = vpop.permute.xlu0 %3581
    %3583 = vrot.lane.b32.xlu0 %v3562, 64
    %v3584 = vpop.permute.xlu0 %3583
    %3585 = vrot.lane.b32.xlu0 %v3563, 64
    %v3586 = vpop.permute.xlu0 %3585
    %3587 = vrot.lane.b32.xlu0 %v3564, 64
    %v3588 = vpop.permute.xlu0 %3587
    %3589 = vrot.lane.b32.xlu0 %v3565, 64
    %v3590 = vpop.permute.xlu0 %3589
    %3591 = vrot.lane.b32.xlu0 %v3566, 64
    %v3592 = vpop.permute.xlu0 %3591
    %3593 = vrot.lane.b32.xlu0 %v3567, 64
    %v3594 = vpop.permute.xlu0 %3593
    %v3595 = vsel %vm869, %v3578, %v3580
    %v3596 = vsel %vm869, %v3580, %v3582
    %v3597 = vsel %vm869, %v3582, %v3584
    %v3598 = vsel %vm869, %v3584, %v3586
    %v3599 = vsel %vm869, %v3586, %v3588
    %v3600 = vsel %vm869, %v3588, %v3590
    %v3601 = vsel %vm869, %v3590, %v3592
    %v3602 = vsel %vm869, %v3592, %v3594
    %v3612 = vadd.f32 %v3550, %v3578
    %v3613 = vadd.f32 %v3551, %v3595
    %v3614 = vadd.f32 %v3552, %v3596
    %v3615 = vadd.f32 %v3553, %v3597
    %v3616 = vadd.f32 %v3554, %v3598
    %v3617 = vadd.f32 %v3555, %v3599
    %v3618 = vadd.f32 %v3556, %v3600
    %v3619 = vadd.f32 %v3557, %v3601
    %v3620 = vadd.f32 %v3558, %v3602
    %3630 = vrot.lane.b32.xlu0 %v3612, 31
    %v3631 = vpop.permute.xlu0 %3630
    %3632 = vrot.lane.b32.xlu0 %v3613, 31
    %v3633 = vpop.permute.xlu0 %3632
    %3634 = vrot.lane.b32.xlu0 %v3614, 31
    %v3635 = vpop.permute.xlu0 %3634
    %3636 = vrot.lane.b32.xlu0 %v3615, 31
    %v3637 = vpop.permute.xlu0 %3636
    %3638 = vrot.lane.b32.xlu0 %v3616, 31
    %v3639 = vpop.permute.xlu0 %3638
    %3640 = vrot.lane.b32.xlu0 %v3617, 31
    %v3641 = vpop.permute.xlu0 %3640
    %3642 = vrot.lane.b32.xlu0 %v3618, 31
    %v3643 = vpop.permute.xlu0 %3642
    %3644 = vrot.lane.b32.xlu0 %v3619, 31
    %v3645 = vpop.permute.xlu0 %3644
    %3646 = vrot.lane.b32.xlu0 %v3620, 31
    %v3647 = vpop.permute.xlu0 %3646
    %v3648 = vsel %vm1129, %v3631, %v3633
    %v3649 = vsel %vm1129, %v3633, %v3635
    %v3650 = vsel %vm1129, %v3635, %v3637
    %v3651 = vsel %vm1129, %v3637, %v3639
    %v3652 = vsel %vm1129, %v3639, %v3641
    %v3653 = vsel %vm1129, %v3641, %v3643
    %v3654 = vsel %vm1129, %v3643, %v3645
    %v3655 = vsel %vm1129, %v3645, %v3647
    %v3664 = vsel %vm1094, %v3648, 0.0
    %v3665 = vsel %vm1095, %v3649, 0.0
    %v3666 = vsel %vm1096, %v3650, 0.0
    %v3667 = vsel %vm1097, %v3651, 0.0
    %v3668 = vsel %vm1098, %v3652, 0.0
    %v3669 = vsel %vm1099, %v3653, 0.0
    %v3670 = vsel %vm1100, %v3654, 0.0
    %v3671 = vsel %vm1101, %v3655, 0.0
    %v3672 = vadd.f32 %v34, %v3664
    %v3673 = vadd.f32 %v34, %v3665
    %v3674 = vadd.f32 %v34, %v3666
    %v3675 = vadd.f32 %v34, %v3667
    %v3676 = vadd.f32 %v34, %v3668
    %v3677 = vadd.f32 %v34, %v3669
    %v3678 = vadd.f32 %v34, %v3670
    %v3679 = vadd.f32 %v34, %v3671
    %v3680 = vmul.f32 %v2777, %v1164
    %v3681 = vmul.f32 %v2781, %v1164
    %v3682 = vmul.f32 %v2785, %v1164
    %v3683 = vmul.f32 %v2789, %v1164
    %v3684 = vmul.f32 %v2793, %v1164
    %v3685 = vmul.f32 %v2797, %v1164
    %v3686 = vmul.f32 %v2801, %v1164
    %v3687 = vmul.f32 %v2805, %v1164
    %v3688 = vmul.f32 %v2809, %v1164
    %3698 = vrot.lane.b32.xlu0 %v3680, 32
    %v3699 = vpop.permute.xlu0 %3698
    %3700 = vrot.lane.b32.xlu0 %v3681, 32
    %v3701 = vpop.permute.xlu0 %3700
    %3702 = vrot.lane.b32.xlu0 %v3682, 32
    %v3703 = vpop.permute.xlu0 %3702
    %3704 = vrot.lane.b32.xlu0 %v3683, 32
    %v3705 = vpop.permute.xlu0 %3704
    %3706 = vrot.lane.b32.xlu0 %v3684, 32
    %v3707 = vpop.permute.xlu0 %3706
    %3708 = vrot.lane.b32.xlu0 %v3685, 32
    %v3709 = vpop.permute.xlu0 %3708
    %3710 = vrot.lane.b32.xlu0 %v3686, 32
    %v3711 = vpop.permute.xlu0 %3710
    %3712 = vrot.lane.b32.xlu0 %v3687, 32
    %v3713 = vpop.permute.xlu0 %3712
    %3714 = vrot.lane.b32.xlu0 %v3688, 32
    %v3715 = vpop.permute.xlu0 %3714
    %v3716 = vsel %vm604, %v3699, %v3701
    %v3717 = vsel %vm604, %v3701, %v3703
    %v3718 = vsel %vm604, %v3703, %v3705
    %v3719 = vsel %vm604, %v3705, %v3707
    %v3720 = vsel %vm604, %v3707, %v3709
    %v3721 = vsel %vm604, %v3709, %v3711
    %v3722 = vsel %vm604, %v3711, %v3713
    %v3723 = vsel %vm604, %v3713, %v3715
    %v3732 = vadd.f32 %v3672, %v3716
    %v3733 = vadd.f32 %v3673, %v3717
    %v3734 = vadd.f32 %v3674, %v3718
    %v3735 = vadd.f32 %v3675, %v3719
    %v3736 = vadd.f32 %v3676, %v3720
    %v3737 = vadd.f32 %v3677, %v3721
    %v3738 = vadd.f32 %v3678, %v3722
    %v3739 = vadd.f32 %v3679, %v3723
    %v3740 = vmul.f32 %v2876, %v1228
    %v3741 = vmul.f32 %v2880, %v1228
    %v3742 = vmul.f32 %v2884, %v1228
    %v3743 = vmul.f32 %v2888, %v1228
    %v3744 = vmul.f32 %v2892, %v1228
    %v3745 = vmul.f32 %v2896, %v1228
    %v3746 = vmul.f32 %v2900, %v1228
    %v3747 = vmul.f32 %v2904, %v1228
    %v3748 = vmul.f32 %v2908, %v1228
    %3758 = vrot.lane.b32.xlu0 %v3740, 32
    %v3759 = vpop.permute.xlu0 %3758
    %3760 = vrot.lane.b32.xlu0 %v3741, 32
    %v3761 = vpop.permute.xlu0 %3760
    %3762 = vrot.lane.b32.xlu0 %v3742, 32
    %v3763 = vpop.permute.xlu0 %3762
    %3764 = vrot.lane.b32.xlu0 %v3743, 32
    %v3765 = vpop.permute.xlu0 %3764
    %3766 = vrot.lane.b32.xlu0 %v3744, 32
    %v3767 = vpop.permute.xlu0 %3766
    %3768 = vrot.lane.b32.xlu0 %v3745, 32
    %v3769 = vpop.permute.xlu0 %3768
    %3770 = vrot.lane.b32.xlu0 %v3746, 32
    %v3771 = vpop.permute.xlu0 %3770
    %3772 = vrot.lane.b32.xlu0 %v3747, 32
    %v3773 = vpop.permute.xlu0 %3772
    %3774 = vrot.lane.b32.xlu0 %v3748, 32
    %v3775 = vpop.permute.xlu0 %3774
    %v3776 = vsel %vm604, %v3759, %v3761
    %v3777 = vsel %vm604, %v3761, %v3763
    %v3778 = vsel %vm604, %v3763, %v3765
    %v3779 = vsel %vm604, %v3765, %v3767
    %v3780 = vsel %vm604, %v3767, %v3769
    %v3781 = vsel %vm604, %v3769, %v3771
    %v3782 = vsel %vm604, %v3771, %v3773
    %v3783 = vsel %vm604, %v3773, %v3775
    %v3792 = vadd.f32 %v3732, %v3776
    %v3793 = vadd.f32 %v3733, %v3777
    %v3794 = vadd.f32 %v3734, %v3778
    %v3795 = vadd.f32 %v3735, %v3779
    %v3796 = vadd.f32 %v3736, %v3780
    %v3797 = vadd.f32 %v3737, %v3781
    %v3798 = vadd.f32 %v3738, %v3782
    %v3799 = vadd.f32 %v3739, %v3783
    %v3800 = vmul.f32 %v2975, %v1292
    %v3801 = vmul.f32 %v2979, %v1292
    %v3802 = vmul.f32 %v2983, %v1292
    %v3803 = vmul.f32 %v2987, %v1292
    %v3804 = vmul.f32 %v2991, %v1292
    %v3805 = vmul.f32 %v2995, %v1292
    %v3806 = vmul.f32 %v2999, %v1292
    %v3807 = vmul.f32 %v3003, %v1292
    %v3808 = vmul.f32 %v3007, %v1292
    %3818 = vrot.lane.b32.xlu0 %v3800, 32
    %v3819 = vpop.permute.xlu0 %3818
    %3820 = vrot.lane.b32.xlu0 %v3801, 32
    %v3821 = vpop.permute.xlu0 %3820
    %3822 = vrot.lane.b32.xlu0 %v3802, 32
    %v3823 = vpop.permute.xlu0 %3822
    %3824 = vrot.lane.b32.xlu0 %v3803, 32
    %v3825 = vpop.permute.xlu0 %3824
    %3826 = vrot.lane.b32.xlu0 %v3804, 32
    %v3827 = vpop.permute.xlu0 %3826
    %3828 = vrot.lane.b32.xlu0 %v3805, 32
    %v3829 = vpop.permute.xlu0 %3828
    %3830 = vrot.lane.b32.xlu0 %v3806, 32
    %v3831 = vpop.permute.xlu0 %3830
    %3832 = vrot.lane.b32.xlu0 %v3807, 32
    %v3833 = vpop.permute.xlu0 %3832
    %3834 = vrot.lane.b32.xlu0 %v3808, 32
    %v3835 = vpop.permute.xlu0 %3834
    %v3836 = vsel %vm604, %v3819, %v3821
    %v3837 = vsel %vm604, %v3821, %v3823
    %v3838 = vsel %vm604, %v3823, %v3825
    %v3839 = vsel %vm604, %v3825, %v3827
    %v3840 = vsel %vm604, %v3827, %v3829
    %v3841 = vsel %vm604, %v3829, %v3831
    %v3842 = vsel %vm604, %v3831, %v3833
    %v3843 = vsel %vm604, %v3833, %v3835
    %v3852 = vadd.f32 %v3792, %v3836
    %v3853 = vadd.f32 %v3793, %v3837
    %v3854 = vadd.f32 %v3794, %v3838
    %v3855 = vadd.f32 %v3795, %v3839
    %v3856 = vadd.f32 %v3796, %v3840
    %v3857 = vadd.f32 %v3797, %v3841
    %v3858 = vadd.f32 %v3798, %v3842
    %v3859 = vadd.f32 %v3799, %v3843
    %v3860 = vmul.f32 %v3074, %v1356
    %v3861 = vmul.f32 %v3078, %v1356
    %v3862 = vmul.f32 %v3082, %v1356
    %v3863 = vmul.f32 %v3086, %v1356
    %v3864 = vmul.f32 %v3090, %v1356
    %v3865 = vmul.f32 %v3094, %v1356
    %v3866 = vmul.f32 %v3098, %v1356
    %v3867 = vmul.f32 %v3102, %v1356
    %v3868 = vmul.f32 %v3106, %v1356
    %3878 = vrot.lane.b32.xlu0 %v3860, 32
    %v3879 = vpop.permute.xlu0 %3878
    %3880 = vrot.lane.b32.xlu0 %v3861, 32
    %v3881 = vpop.permute.xlu0 %3880
    %3882 = vrot.lane.b32.xlu0 %v3862, 32
    %v3883 = vpop.permute.xlu0 %3882
    %3884 = vrot.lane.b32.xlu0 %v3863, 32
    %v3885 = vpop.permute.xlu0 %3884
    %3886 = vrot.lane.b32.xlu0 %v3864, 32
    %v3887 = vpop.permute.xlu0 %3886
    %3888 = vrot.lane.b32.xlu0 %v3865, 32
    %v3889 = vpop.permute.xlu0 %3888
    %3890 = vrot.lane.b32.xlu0 %v3866, 32
    %v3891 = vpop.permute.xlu0 %3890
    %3892 = vrot.lane.b32.xlu0 %v3867, 32
    %v3893 = vpop.permute.xlu0 %3892
    %3894 = vrot.lane.b32.xlu0 %v3868, 32
    %v3895 = vpop.permute.xlu0 %3894
    %v3896 = vsel %vm604, %v3879, %v3881
    %v3897 = vsel %vm604, %v3881, %v3883
    %v3898 = vsel %vm604, %v3883, %v3885
    %v3899 = vsel %vm604, %v3885, %v3887
    %v3900 = vsel %vm604, %v3887, %v3889
    %v3901 = vsel %vm604, %v3889, %v3891
    %v3902 = vsel %vm604, %v3891, %v3893
    %v3903 = vsel %vm604, %v3893, %v3895
    %v3912 = vadd.f32 %v3852, %v3896
    %v3913 = vadd.f32 %v3853, %v3897
    %v3914 = vadd.f32 %v3854, %v3898
    %v3915 = vadd.f32 %v3855, %v3899
    %v3916 = vadd.f32 %v3856, %v3900
    %v3917 = vadd.f32 %v3857, %v3901
    %v3918 = vadd.f32 %v3858, %v3902
    %v3919 = vadd.f32 %v3859, %v3903
    %v3920 = vmul.f32 %v2777, %v1420
    %v3921 = vmul.f32 %v2781, %v1420
    %v3922 = vmul.f32 %v2785, %v1420
    %v3923 = vmul.f32 %v2789, %v1420
    %v3924 = vmul.f32 %v2793, %v1420
    %v3925 = vmul.f32 %v2797, %v1420
    %v3926 = vmul.f32 %v2801, %v1420
    %v3927 = vmul.f32 %v2805, %v1420
    %v3928 = vmul.f32 %v2809, %v1420
    %3938 = vrot.lane.b32.xlu0 %v3920, 64
    %v3939 = vpop.permute.xlu0 %3938
    %3940 = vrot.lane.b32.xlu0 %v3921, 64
    %v3941 = vpop.permute.xlu0 %3940
    %3942 = vrot.lane.b32.xlu0 %v3922, 64
    %v3943 = vpop.permute.xlu0 %3942
    %3944 = vrot.lane.b32.xlu0 %v3923, 64
    %v3945 = vpop.permute.xlu0 %3944
    %3946 = vrot.lane.b32.xlu0 %v3924, 64
    %v3947 = vpop.permute.xlu0 %3946
    %3948 = vrot.lane.b32.xlu0 %v3925, 64
    %v3949 = vpop.permute.xlu0 %3948
    %3950 = vrot.lane.b32.xlu0 %v3926, 64
    %v3951 = vpop.permute.xlu0 %3950
    %3952 = vrot.lane.b32.xlu0 %v3927, 64
    %v3953 = vpop.permute.xlu0 %3952
    %3954 = vrot.lane.b32.xlu0 %v3928, 64
    %v3955 = vpop.permute.xlu0 %3954
    %v3956 = vsel %vm869, %v3939, %v3941
    %v3957 = vsel %vm869, %v3941, %v3943
    %v3958 = vsel %vm869, %v3943, %v3945
    %v3959 = vsel %vm869, %v3945, %v3947
    %v3960 = vsel %vm869, %v3947, %v3949
    %v3961 = vsel %vm869, %v3949, %v3951
    %v3962 = vsel %vm869, %v3951, %v3953
    %v3963 = vsel %vm869, %v3953, %v3955
    %v3972 = vadd.f32 %v3912, %v3956
    %v3973 = vadd.f32 %v3913, %v3957
    %v3974 = vadd.f32 %v3914, %v3958
    %v3975 = vadd.f32 %v3915, %v3959
    %v3976 = vadd.f32 %v3916, %v3960
    %v3977 = vadd.f32 %v3917, %v3961
    %v3978 = vadd.f32 %v3918, %v3962
    %v3979 = vadd.f32 %v3919, %v3963
    %v3980 = vmul.f32 %v2876, %v1484
    %v3981 = vmul.f32 %v2880, %v1484
    %v3982 = vmul.f32 %v2884, %v1484
    %v3983 = vmul.f32 %v2888, %v1484
    %v3984 = vmul.f32 %v2892, %v1484
    %v3985 = vmul.f32 %v2896, %v1484
    %v3986 = vmul.f32 %v2900, %v1484
    %v3987 = vmul.f32 %v2904, %v1484
    %v3988 = vmul.f32 %v2908, %v1484
    %3998 = vrot.lane.b32.xlu0 %v3980, 64
    %v3999 = vpop.permute.xlu0 %3998
    %4000 = vrot.lane.b32.xlu0 %v3981, 64
    %v4001 = vpop.permute.xlu0 %4000
    %4002 = vrot.lane.b32.xlu0 %v3982, 64
    %v4003 = vpop.permute.xlu0 %4002
    %4004 = vrot.lane.b32.xlu0 %v3983, 64
    %v4005 = vpop.permute.xlu0 %4004
    %4006 = vrot.lane.b32.xlu0 %v3984, 64
    %v4007 = vpop.permute.xlu0 %4006
    %4008 = vrot.lane.b32.xlu0 %v3985, 64
    %v4009 = vpop.permute.xlu0 %4008
    %4010 = vrot.lane.b32.xlu0 %v3986, 64
    %v4011 = vpop.permute.xlu0 %4010
    %4012 = vrot.lane.b32.xlu0 %v3987, 64
    %v4013 = vpop.permute.xlu0 %4012
    %4014 = vrot.lane.b32.xlu0 %v3988, 64
    %v4015 = vpop.permute.xlu0 %4014
    %v4016 = vsel %vm869, %v3999, %v4001
    %v4017 = vsel %vm869, %v4001, %v4003
    %v4018 = vsel %vm869, %v4003, %v4005
    %v4019 = vsel %vm869, %v4005, %v4007
    %v4020 = vsel %vm869, %v4007, %v4009
    %v4021 = vsel %vm869, %v4009, %v4011
    %v4022 = vsel %vm869, %v4011, %v4013
    %v4023 = vsel %vm869, %v4013, %v4015
    %v4032 = vadd.f32 %v3972, %v4016
    %v4033 = vadd.f32 %v3973, %v4017
    %v4034 = vadd.f32 %v3974, %v4018
    %v4035 = vadd.f32 %v3975, %v4019
    %v4036 = vadd.f32 %v3976, %v4020
    %v4037 = vadd.f32 %v3977, %v4021
    %v4038 = vadd.f32 %v3978, %v4022
    %v4039 = vadd.f32 %v3979, %v4023
    %v4040 = vmul.f32 %v2975, %v1548
    %v4041 = vmul.f32 %v2979, %v1548
    %v4042 = vmul.f32 %v2983, %v1548
    %v4043 = vmul.f32 %v2987, %v1548
    %v4044 = vmul.f32 %v2991, %v1548
    %v4045 = vmul.f32 %v2995, %v1548
    %v4046 = vmul.f32 %v2999, %v1548
    %v4047 = vmul.f32 %v3003, %v1548
    %v4048 = vmul.f32 %v3007, %v1548
    %4058 = vrot.lane.b32.xlu0 %v4040, 64
    %v4059 = vpop.permute.xlu0 %4058
    %4060 = vrot.lane.b32.xlu0 %v4041, 64
    %v4061 = vpop.permute.xlu0 %4060
    %4062 = vrot.lane.b32.xlu0 %v4042, 64
    %v4063 = vpop.permute.xlu0 %4062
    %4064 = vrot.lane.b32.xlu0 %v4043, 64
    %v4065 = vpop.permute.xlu0 %4064
    %4066 = vrot.lane.b32.xlu0 %v4044, 64
    %v4067 = vpop.permute.xlu0 %4066
    %4068 = vrot.lane.b32.xlu0 %v4045, 64
    %v4069 = vpop.permute.xlu0 %4068
    %4070 = vrot.lane.b32.xlu0 %v4046, 64
    %v4071 = vpop.permute.xlu0 %4070
    %4072 = vrot.lane.b32.xlu0 %v4047, 64
    %v4073 = vpop.permute.xlu0 %4072
    %4074 = vrot.lane.b32.xlu0 %v4048, 64
    %v4075 = vpop.permute.xlu0 %4074
    %v4076 = vsel %vm869, %v4059, %v4061
    %v4077 = vsel %vm869, %v4061, %v4063
    %v4078 = vsel %vm869, %v4063, %v4065
    %v4079 = vsel %vm869, %v4065, %v4067
    %v4080 = vsel %vm869, %v4067, %v4069
    %v4081 = vsel %vm869, %v4069, %v4071
    %v4082 = vsel %vm869, %v4071, %v4073
    %v4083 = vsel %vm869, %v4073, %v4075
    %v4092 = vadd.f32 %v4032, %v4076
    %v4093 = vadd.f32 %v4033, %v4077
    %v4094 = vadd.f32 %v4034, %v4078
    %v4095 = vadd.f32 %v4035, %v4079
    %v4096 = vadd.f32 %v4036, %v4080
    %v4097 = vadd.f32 %v4037, %v4081
    %v4098 = vadd.f32 %v4038, %v4082
    %v4099 = vadd.f32 %v4039, %v4083
    %v4100 = vmul.f32 %v3074, %v1612
    %v4101 = vmul.f32 %v3078, %v1612
    %v4102 = vmul.f32 %v3082, %v1612
    %v4103 = vmul.f32 %v3086, %v1612
    %v4104 = vmul.f32 %v3090, %v1612
    %v4105 = vmul.f32 %v3094, %v1612
    %v4106 = vmul.f32 %v3098, %v1612
    %v4107 = vmul.f32 %v3102, %v1612
    %v4108 = vmul.f32 %v3106, %v1612
    %4118 = vrot.lane.b32.xlu0 %v4100, 64
    %v4119 = vpop.permute.xlu0 %4118
    %4120 = vrot.lane.b32.xlu0 %v4101, 64
    %v4121 = vpop.permute.xlu0 %4120
    %4122 = vrot.lane.b32.xlu0 %v4102, 64
    %v4123 = vpop.permute.xlu0 %4122
    %4124 = vrot.lane.b32.xlu0 %v4103, 64
    %v4125 = vpop.permute.xlu0 %4124
    %4126 = vrot.lane.b32.xlu0 %v4104, 64
    %v4127 = vpop.permute.xlu0 %4126
    %4128 = vrot.lane.b32.xlu0 %v4105, 64
    %v4129 = vpop.permute.xlu0 %4128
    %4130 = vrot.lane.b32.xlu0 %v4106, 64
    %v4131 = vpop.permute.xlu0 %4130
    %4132 = vrot.lane.b32.xlu0 %v4107, 64
    %v4133 = vpop.permute.xlu0 %4132
    %4134 = vrot.lane.b32.xlu0 %v4108, 64
    %v4135 = vpop.permute.xlu0 %4134
    %v4136 = vsel %vm869, %v4119, %v4121
    %v4137 = vsel %vm869, %v4121, %v4123
    %v4138 = vsel %vm869, %v4123, %v4125
    %v4139 = vsel %vm869, %v4125, %v4127
    %v4140 = vsel %vm869, %v4127, %v4129
    %v4141 = vsel %vm869, %v4129, %v4131
    %v4142 = vsel %vm869, %v4131, %v4133
    %v4143 = vsel %vm869, %v4133, %v4135
    %v4152 = vadd.f32 %v4092, %v4136
    %v4153 = vadd.f32 %v4093, %v4137
    %v4154 = vadd.f32 %v4094, %v4138
    %v4155 = vadd.f32 %v4095, %v4139
    %v4156 = vadd.f32 %v4096, %v4140
    %v4157 = vadd.f32 %v4097, %v4141
    %v4158 = vadd.f32 %v4098, %v4142
    %v4159 = vadd.f32 %v4099, %v4143
    %v4160 = vmul.f32 %v2777, %v1676
    %v4161 = vmul.f32 %v2781, %v1676
    %v4162 = vmul.f32 %v2785, %v1676
    %v4163 = vmul.f32 %v2789, %v1676
    %v4164 = vmul.f32 %v2793, %v1676
    %v4165 = vmul.f32 %v2797, %v1676
    %v4166 = vmul.f32 %v2801, %v1676
    %v4167 = vmul.f32 %v2805, %v1676
    %v4168 = vmul.f32 %v2809, %v1676
    %4178 = vrot.lane.b32.xlu0 %v4160, 96
    %v4179 = vpop.permute.xlu0 %4178
    %4180 = vrot.lane.b32.xlu0 %v4161, 96
    %v4181 = vpop.permute.xlu0 %4180
    %4182 = vrot.lane.b32.xlu0 %v4162, 96
    %v4183 = vpop.permute.xlu0 %4182
    %4184 = vrot.lane.b32.xlu0 %v4163, 96
    %v4185 = vpop.permute.xlu0 %4184
    %4186 = vrot.lane.b32.xlu0 %v4164, 96
    %v4187 = vpop.permute.xlu0 %4186
    %4188 = vrot.lane.b32.xlu0 %v4165, 96
    %v4189 = vpop.permute.xlu0 %4188
    %4190 = vrot.lane.b32.xlu0 %v4166, 96
    %v4191 = vpop.permute.xlu0 %4190
    %4192 = vrot.lane.b32.xlu0 %v4167, 96
    %v4193 = vpop.permute.xlu0 %4192
    %4194 = vrot.lane.b32.xlu0 %v4168, 96
    %v4195 = vpop.permute.xlu0 %4194
    %v4196 = vsel %vm1714, %v4179, %v4181
    %v4197 = vsel %vm1714, %v4181, %v4183
    %v4198 = vsel %vm1714, %v4183, %v4185
    %v4199 = vsel %vm1714, %v4185, %v4187
    %v4200 = vsel %vm1714, %v4187, %v4189
    %v4201 = vsel %vm1714, %v4189, %v4191
    %v4202 = vsel %vm1714, %v4191, %v4193
    %v4203 = vsel %vm1714, %v4193, %v4195
    %v4212 = vadd.f32 %v4152, %v4196
    %v4213 = vadd.f32 %v4153, %v4197
    %v4214 = vadd.f32 %v4154, %v4198
    %v4215 = vadd.f32 %v4155, %v4199
    %v4216 = vadd.f32 %v4156, %v4200
    %v4217 = vadd.f32 %v4157, %v4201
    %v4218 = vadd.f32 %v4158, %v4202
    %v4219 = vadd.f32 %v4159, %v4203
    %v4220 = vmul.f32 %v2876, %v1741
    %v4221 = vmul.f32 %v2880, %v1741
    %v4222 = vmul.f32 %v2884, %v1741
    %v4223 = vmul.f32 %v2888, %v1741
    %v4224 = vmul.f32 %v2892, %v1741
    %v4225 = vmul.f32 %v2896, %v1741
    %v4226 = vmul.f32 %v2900, %v1741
    %v4227 = vmul.f32 %v2904, %v1741
    %v4228 = vmul.f32 %v2908, %v1741
    %4238 = vrot.lane.b32.xlu0 %v4220, 96
    %v4239 = vpop.permute.xlu0 %4238
    %4240 = vrot.lane.b32.xlu0 %v4221, 96
    %v4241 = vpop.permute.xlu0 %4240
    %4242 = vrot.lane.b32.xlu0 %v4222, 96
    %v4243 = vpop.permute.xlu0 %4242
    %4244 = vrot.lane.b32.xlu0 %v4223, 96
    %v4245 = vpop.permute.xlu0 %4244
    %4246 = vrot.lane.b32.xlu0 %v4224, 96
    %v4247 = vpop.permute.xlu0 %4246
    %4248 = vrot.lane.b32.xlu0 %v4225, 96
    %v4249 = vpop.permute.xlu0 %4248
    %4250 = vrot.lane.b32.xlu0 %v4226, 96
    %v4251 = vpop.permute.xlu0 %4250
    %4252 = vrot.lane.b32.xlu0 %v4227, 96
    %v4253 = vpop.permute.xlu0 %4252
    %4254 = vrot.lane.b32.xlu0 %v4228, 96
    %v4255 = vpop.permute.xlu0 %4254
    %v4256 = vsel %vm1714, %v4239, %v4241
    %v4257 = vsel %vm1714, %v4241, %v4243
    %v4258 = vsel %vm1714, %v4243, %v4245
    %v4259 = vsel %vm1714, %v4245, %v4247
    %v4260 = vsel %vm1714, %v4247, %v4249
    %v4261 = vsel %vm1714, %v4249, %v4251
    %v4262 = vsel %vm1714, %v4251, %v4253
    %v4263 = vsel %vm1714, %v4253, %v4255
    %v4272 = vadd.f32 %v4212, %v4256
    %v4273 = vadd.f32 %v4213, %v4257
    %v4274 = vadd.f32 %v4214, %v4258
    %v4275 = vadd.f32 %v4215, %v4259
    %v4276 = vadd.f32 %v4216, %v4260
    %v4277 = vadd.f32 %v4217, %v4261
    %v4278 = vadd.f32 %v4218, %v4262
    %v4279 = vadd.f32 %v4219, %v4263
    %v4280 = vmul.f32 %v2975, %v1805
    %v4281 = vmul.f32 %v2979, %v1805
    %v4282 = vmul.f32 %v2983, %v1805
    %v4283 = vmul.f32 %v2987, %v1805
    %v4284 = vmul.f32 %v2991, %v1805
    %v4285 = vmul.f32 %v2995, %v1805
    %v4286 = vmul.f32 %v2999, %v1805
    %v4287 = vmul.f32 %v3003, %v1805
    %v4288 = vmul.f32 %v3007, %v1805
    %4298 = vrot.lane.b32.xlu0 %v4280, 96
    %v4299 = vpop.permute.xlu0 %4298
    %4300 = vrot.lane.b32.xlu0 %v4281, 96
    %v4301 = vpop.permute.xlu0 %4300
    %4302 = vrot.lane.b32.xlu0 %v4282, 96
    %v4303 = vpop.permute.xlu0 %4302
    %4304 = vrot.lane.b32.xlu0 %v4283, 96
    %v4305 = vpop.permute.xlu0 %4304
    %4306 = vrot.lane.b32.xlu0 %v4284, 96
    %v4307 = vpop.permute.xlu0 %4306
    %4308 = vrot.lane.b32.xlu0 %v4285, 96
    %v4309 = vpop.permute.xlu0 %4308
    %4310 = vrot.lane.b32.xlu0 %v4286, 96
    %v4311 = vpop.permute.xlu0 %4310
    %4312 = vrot.lane.b32.xlu0 %v4287, 96
    %v4313 = vpop.permute.xlu0 %4312
    %4314 = vrot.lane.b32.xlu0 %v4288, 96
    %v4315 = vpop.permute.xlu0 %4314
    %v4316 = vsel %vm1714, %v4299, %v4301
    %v4317 = vsel %vm1714, %v4301, %v4303
    %v4318 = vsel %vm1714, %v4303, %v4305
    %v4319 = vsel %vm1714, %v4305, %v4307
    %v4320 = vsel %vm1714, %v4307, %v4309
    %v4321 = vsel %vm1714, %v4309, %v4311
    %v4322 = vsel %vm1714, %v4311, %v4313
    %v4323 = vsel %vm1714, %v4313, %v4315
    %v4332 = vadd.f32 %v4272, %v4316
    %v4333 = vadd.f32 %v4273, %v4317
    %v4334 = vadd.f32 %v4274, %v4318
    %v4335 = vadd.f32 %v4275, %v4319
    %v4336 = vadd.f32 %v4276, %v4320
    %v4337 = vadd.f32 %v4277, %v4321
    %v4338 = vadd.f32 %v4278, %v4322
    %v4339 = vadd.f32 %v4279, %v4323
    %v4340 = vmul.f32 %v3074, %v1869
    %v4341 = vmul.f32 %v3078, %v1869
    %v4342 = vmul.f32 %v3082, %v1869
    %v4343 = vmul.f32 %v3086, %v1869
    %v4344 = vmul.f32 %v3090, %v1869
    %v4345 = vmul.f32 %v3094, %v1869
    %v4346 = vmul.f32 %v3098, %v1869
    %v4347 = vmul.f32 %v3102, %v1869
    %v4348 = vmul.f32 %v3106, %v1869
    %4358 = vrot.lane.b32.xlu0 %v4340, 96
    %v4359 = vpop.permute.xlu0 %4358
    %4360 = vrot.lane.b32.xlu0 %v4341, 96
    %v4361 = vpop.permute.xlu0 %4360
    %4362 = vrot.lane.b32.xlu0 %v4342, 96
    %v4363 = vpop.permute.xlu0 %4362
    %4364 = vrot.lane.b32.xlu0 %v4343, 96
    %v4365 = vpop.permute.xlu0 %4364
    %4366 = vrot.lane.b32.xlu0 %v4344, 96
    %v4367 = vpop.permute.xlu0 %4366
    %4368 = vrot.lane.b32.xlu0 %v4345, 96
    %v4369 = vpop.permute.xlu0 %4368
    %4370 = vrot.lane.b32.xlu0 %v4346, 96
    %v4371 = vpop.permute.xlu0 %4370
    %4372 = vrot.lane.b32.xlu0 %v4347, 96
    %v4373 = vpop.permute.xlu0 %4372
    %4374 = vrot.lane.b32.xlu0 %v4348, 96
    %v4375 = vpop.permute.xlu0 %4374
    %v4376 = vsel %vm1714, %v4359, %v4361
    %v4377 = vsel %vm1714, %v4361, %v4363
    %v4378 = vsel %vm1714, %v4363, %v4365
    %v4379 = vsel %vm1714, %v4365, %v4367
    %v4380 = vsel %vm1714, %v4367, %v4369
    %v4381 = vsel %vm1714, %v4369, %v4371
    %v4382 = vsel %vm1714, %v4371, %v4373
    %v4383 = vsel %vm1714, %v4373, %v4375
    %v4392 = vadd.f32 %v4332, %v4376
    %v4393 = vadd.f32 %v4333, %v4377
    %v4394 = vadd.f32 %v4334, %v4378
    %v4395 = vadd.f32 %v4335, %v4379
    %v4396 = vadd.f32 %v4336, %v4380
    %v4397 = vadd.f32 %v4337, %v4381
    %v4398 = vadd.f32 %v4338, %v4382
    %v4399 = vadd.f32 %v4339, %v4383
    %v4400 = vmul.f32 %v2777, %v1933
    %v4401 = vmul.f32 %v2781, %v1933
    %v4402 = vmul.f32 %v2785, %v1933
    %v4403 = vmul.f32 %v2789, %v1933
    %v4404 = vmul.f32 %v2793, %v1933
    %v4405 = vmul.f32 %v2797, %v1933
    %v4406 = vmul.f32 %v2801, %v1933
    %v4407 = vmul.f32 %v2805, %v1933
    %v4408 = vmul.f32 %v2809, %v1933
    %4418 = vrot.lane.b32.xlu0 %v4400, 33
    %v4419 = vpop.permute.xlu0 %4418
    %4420 = vrot.lane.b32.xlu0 %v4401, 33
    %v4421 = vpop.permute.xlu0 %4420
    %4422 = vrot.lane.b32.xlu0 %v4402, 33
    %v4423 = vpop.permute.xlu0 %4422
    %4424 = vrot.lane.b32.xlu0 %v4403, 33
    %v4425 = vpop.permute.xlu0 %4424
    %4426 = vrot.lane.b32.xlu0 %v4404, 33
    %v4427 = vpop.permute.xlu0 %4426
    %4428 = vrot.lane.b32.xlu0 %v4405, 33
    %v4429 = vpop.permute.xlu0 %4428
    %4430 = vrot.lane.b32.xlu0 %v4406, 33
    %v4431 = vpop.permute.xlu0 %4430
    %4432 = vrot.lane.b32.xlu0 %v4407, 33
    %v4433 = vpop.permute.xlu0 %4432
    %4434 = vrot.lane.b32.xlu0 %v4408, 33
    %v4435 = vpop.permute.xlu0 %4434
    %v4436 = vsel %vm1971, %v4419, %v4421
    %v4437 = vsel %vm1971, %v4421, %v4423
    %v4438 = vsel %vm1971, %v4423, %v4425
    %v4439 = vsel %vm1971, %v4425, %v4427
    %v4440 = vsel %vm1971, %v4427, %v4429
    %v4441 = vsel %vm1971, %v4429, %v4431
    %v4442 = vsel %vm1971, %v4431, %v4433
    %v4443 = vsel %vm1971, %v4433, %v4435
    %v4452 = vadd.f32 %v4392, %v4436
    %v4453 = vadd.f32 %v4393, %v4437
    %v4454 = vadd.f32 %v4394, %v4438
    %v4455 = vadd.f32 %v4395, %v4439
    %v4456 = vadd.f32 %v4396, %v4440
    %v4457 = vadd.f32 %v4397, %v4441
    %v4458 = vadd.f32 %v4398, %v4442
    %v4459 = vadd.f32 %v4399, %v4443
    %v4460 = vmul.f32 %v2876, %v1998
    %v4461 = vmul.f32 %v2880, %v1998
    %v4462 = vmul.f32 %v2884, %v1998
    %v4463 = vmul.f32 %v2888, %v1998
    %v4464 = vmul.f32 %v2892, %v1998
    %v4465 = vmul.f32 %v2896, %v1998
    %v4466 = vmul.f32 %v2900, %v1998
    %v4467 = vmul.f32 %v2904, %v1998
    %v4468 = vmul.f32 %v2908, %v1998
    %4478 = vrot.lane.b32.xlu0 %v4460, 33
    %v4479 = vpop.permute.xlu0 %4478
    %4480 = vrot.lane.b32.xlu0 %v4461, 33
    %v4481 = vpop.permute.xlu0 %4480
    %4482 = vrot.lane.b32.xlu0 %v4462, 33
    %v4483 = vpop.permute.xlu0 %4482
    %4484 = vrot.lane.b32.xlu0 %v4463, 33
    %v4485 = vpop.permute.xlu0 %4484
    %4486 = vrot.lane.b32.xlu0 %v4464, 33
    %v4487 = vpop.permute.xlu0 %4486
    %4488 = vrot.lane.b32.xlu0 %v4465, 33
    %v4489 = vpop.permute.xlu0 %4488
    %4490 = vrot.lane.b32.xlu0 %v4466, 33
    %v4491 = vpop.permute.xlu0 %4490
    %4492 = vrot.lane.b32.xlu0 %v4467, 33
    %v4493 = vpop.permute.xlu0 %4492
    %4494 = vrot.lane.b32.xlu0 %v4468, 33
    %v4495 = vpop.permute.xlu0 %4494
    %v4496 = vsel %vm1971, %v4479, %v4481
    %v4497 = vsel %vm1971, %v4481, %v4483
    %v4498 = vsel %vm1971, %v4483, %v4485
    %v4499 = vsel %vm1971, %v4485, %v4487
    %v4500 = vsel %vm1971, %v4487, %v4489
    %v4501 = vsel %vm1971, %v4489, %v4491
    %v4502 = vsel %vm1971, %v4491, %v4493
    %v4503 = vsel %vm1971, %v4493, %v4495
    %v4512 = vadd.f32 %v4452, %v4496
    %v4513 = vadd.f32 %v4453, %v4497
    %v4514 = vadd.f32 %v4454, %v4498
    %v4515 = vadd.f32 %v4455, %v4499
    %v4516 = vadd.f32 %v4456, %v4500
    %v4517 = vadd.f32 %v4457, %v4501
    %v4518 = vadd.f32 %v4458, %v4502
    %v4519 = vadd.f32 %v4459, %v4503
    %v4520 = vmul.f32 %v2975, %v2062
    %v4521 = vmul.f32 %v2979, %v2062
    %v4522 = vmul.f32 %v2983, %v2062
    %v4523 = vmul.f32 %v2987, %v2062
    %v4524 = vmul.f32 %v2991, %v2062
    %v4525 = vmul.f32 %v2995, %v2062
    %v4526 = vmul.f32 %v2999, %v2062
    %v4527 = vmul.f32 %v3003, %v2062
    %v4528 = vmul.f32 %v3007, %v2062
    %4538 = vrot.lane.b32.xlu0 %v4520, 33
    %v4539 = vpop.permute.xlu0 %4538
    %4540 = vrot.lane.b32.xlu0 %v4521, 33
    %v4541 = vpop.permute.xlu0 %4540
    %4542 = vrot.lane.b32.xlu0 %v4522, 33
    %v4543 = vpop.permute.xlu0 %4542
    %4544 = vrot.lane.b32.xlu0 %v4523, 33
    %v4545 = vpop.permute.xlu0 %4544
    %4546 = vrot.lane.b32.xlu0 %v4524, 33
    %v4547 = vpop.permute.xlu0 %4546
    %4548 = vrot.lane.b32.xlu0 %v4525, 33
    %v4549 = vpop.permute.xlu0 %4548
    %4550 = vrot.lane.b32.xlu0 %v4526, 33
    %v4551 = vpop.permute.xlu0 %4550
    %4552 = vrot.lane.b32.xlu0 %v4527, 33
    %v4553 = vpop.permute.xlu0 %4552
    %4554 = vrot.lane.b32.xlu0 %v4528, 33
    %v4555 = vpop.permute.xlu0 %4554
    %v4556 = vsel %vm1971, %v4539, %v4541
    %v4557 = vsel %vm1971, %v4541, %v4543
    %v4558 = vsel %vm1971, %v4543, %v4545
    %v4559 = vsel %vm1971, %v4545, %v4547
    %v4560 = vsel %vm1971, %v4547, %v4549
    %v4561 = vsel %vm1971, %v4549, %v4551
    %v4562 = vsel %vm1971, %v4551, %v4553
    %v4563 = vsel %vm1971, %v4553, %v4555
    %v4572 = vadd.f32 %v4512, %v4556
    %v4573 = vadd.f32 %v4513, %v4557
    %v4574 = vadd.f32 %v4514, %v4558
    %v4575 = vadd.f32 %v4515, %v4559
    %v4576 = vadd.f32 %v4516, %v4560
    %v4577 = vadd.f32 %v4517, %v4561
    %v4578 = vadd.f32 %v4518, %v4562
    %v4579 = vadd.f32 %v4519, %v4563
    %v4580 = vmul.f32 %v3074, %v2126
    %v4581 = vmul.f32 %v3078, %v2126
    %v4582 = vmul.f32 %v3082, %v2126
    %v4583 = vmul.f32 %v3086, %v2126
    %v4584 = vmul.f32 %v3090, %v2126
    %v4585 = vmul.f32 %v3094, %v2126
    %v4586 = vmul.f32 %v3098, %v2126
    %v4587 = vmul.f32 %v3102, %v2126
    %v4588 = vmul.f32 %v3106, %v2126
    %4598 = vrot.lane.b32.xlu0 %v4580, 33
    %v4599 = vpop.permute.xlu0 %4598
    %4600 = vrot.lane.b32.xlu0 %v4581, 33
    %v4601 = vpop.permute.xlu0 %4600
    %4602 = vrot.lane.b32.xlu0 %v4582, 33
    %v4603 = vpop.permute.xlu0 %4602
    %4604 = vrot.lane.b32.xlu0 %v4583, 33
    %v4605 = vpop.permute.xlu0 %4604
    %4606 = vrot.lane.b32.xlu0 %v4584, 33
    %v4607 = vpop.permute.xlu0 %4606
    %4608 = vrot.lane.b32.xlu0 %v4585, 33
    %v4609 = vpop.permute.xlu0 %4608
    %4610 = vrot.lane.b32.xlu0 %v4586, 33
    %v4611 = vpop.permute.xlu0 %4610
    %4612 = vrot.lane.b32.xlu0 %v4587, 33
    %v4613 = vpop.permute.xlu0 %4612
    %4614 = vrot.lane.b32.xlu0 %v4588, 33
    %v4615 = vpop.permute.xlu0 %4614
    %v4616 = vsel %vm1971, %v4599, %v4601
    %v4617 = vsel %vm1971, %v4601, %v4603
    %v4618 = vsel %vm1971, %v4603, %v4605
    %v4619 = vsel %vm1971, %v4605, %v4607
    %v4620 = vsel %vm1971, %v4607, %v4609
    %v4621 = vsel %vm1971, %v4609, %v4611
    %v4622 = vsel %vm1971, %v4611, %v4613
    %v4623 = vsel %vm1971, %v4613, %v4615
    %v4632 = vadd.f32 %v4572, %v4616
    %v4633 = vadd.f32 %v4573, %v4617
    %v4634 = vadd.f32 %v4574, %v4618
    %v4635 = vadd.f32 %v4575, %v4619
    %v4636 = vadd.f32 %v4576, %v4620
    %v4637 = vadd.f32 %v4577, %v4621
    %v4638 = vadd.f32 %v4578, %v4622
    %v4639 = vadd.f32 %v4579, %v4623
    %v4640 = vmul.f32 %v2777, %v2190
    %v4641 = vmul.f32 %v2781, %v2190
    %v4642 = vmul.f32 %v2785, %v2190
    %v4643 = vmul.f32 %v2789, %v2190
    %v4644 = vmul.f32 %v2793, %v2190
    %v4645 = vmul.f32 %v2797, %v2190
    %v4646 = vmul.f32 %v2801, %v2190
    %v4647 = vmul.f32 %v2805, %v2190
    %v4648 = vmul.f32 %v2809, %v2190
    %4658 = vrot.lane.b32.xlu0 %v4640, 65
    %v4659 = vpop.permute.xlu0 %4658
    %4660 = vrot.lane.b32.xlu0 %v4641, 65
    %v4661 = vpop.permute.xlu0 %4660
    %4662 = vrot.lane.b32.xlu0 %v4642, 65
    %v4663 = vpop.permute.xlu0 %4662
    %4664 = vrot.lane.b32.xlu0 %v4643, 65
    %v4665 = vpop.permute.xlu0 %4664
    %4666 = vrot.lane.b32.xlu0 %v4644, 65
    %v4667 = vpop.permute.xlu0 %4666
    %4668 = vrot.lane.b32.xlu0 %v4645, 65
    %v4669 = vpop.permute.xlu0 %4668
    %4670 = vrot.lane.b32.xlu0 %v4646, 65
    %v4671 = vpop.permute.xlu0 %4670
    %4672 = vrot.lane.b32.xlu0 %v4647, 65
    %v4673 = vpop.permute.xlu0 %4672
    %4674 = vrot.lane.b32.xlu0 %v4648, 65
    %v4675 = vpop.permute.xlu0 %4674
    %v4676 = vsel %vm2228, %v4659, %v4661
    %v4677 = vsel %vm2228, %v4661, %v4663
    %v4678 = vsel %vm2228, %v4663, %v4665
    %v4679 = vsel %vm2228, %v4665, %v4667
    %v4680 = vsel %vm2228, %v4667, %v4669
    %v4681 = vsel %vm2228, %v4669, %v4671
    %v4682 = vsel %vm2228, %v4671, %v4673
    %v4683 = vsel %vm2228, %v4673, %v4675
    %v4692 = vadd.f32 %v4632, %v4676
    %v4693 = vadd.f32 %v4633, %v4677
    %v4694 = vadd.f32 %v4634, %v4678
    %v4695 = vadd.f32 %v4635, %v4679
    %v4696 = vadd.f32 %v4636, %v4680
    %v4697 = vadd.f32 %v4637, %v4681
    %v4698 = vadd.f32 %v4638, %v4682
    %v4699 = vadd.f32 %v4639, %v4683
    %v4700 = vmul.f32 %v2876, %v2255
    %v4701 = vmul.f32 %v2880, %v2255
    %v4702 = vmul.f32 %v2884, %v2255
    %v4703 = vmul.f32 %v2888, %v2255
    %v4704 = vmul.f32 %v2892, %v2255
    %v4705 = vmul.f32 %v2896, %v2255
    %v4706 = vmul.f32 %v2900, %v2255
    %v4707 = vmul.f32 %v2904, %v2255
    %v4708 = vmul.f32 %v2908, %v2255
    %4718 = vrot.lane.b32.xlu0 %v4700, 65
    %v4719 = vpop.permute.xlu0 %4718
    %4720 = vrot.lane.b32.xlu0 %v4701, 65
    %v4721 = vpop.permute.xlu0 %4720
    %4722 = vrot.lane.b32.xlu0 %v4702, 65
    %v4723 = vpop.permute.xlu0 %4722
    %4724 = vrot.lane.b32.xlu0 %v4703, 65
    %v4725 = vpop.permute.xlu0 %4724
    %4726 = vrot.lane.b32.xlu0 %v4704, 65
    %v4727 = vpop.permute.xlu0 %4726
    %4728 = vrot.lane.b32.xlu0 %v4705, 65
    %v4729 = vpop.permute.xlu0 %4728
    %4730 = vrot.lane.b32.xlu0 %v4706, 65
    %v4731 = vpop.permute.xlu0 %4730
    %4732 = vrot.lane.b32.xlu0 %v4707, 65
    %v4733 = vpop.permute.xlu0 %4732
    %4734 = vrot.lane.b32.xlu0 %v4708, 65
    %v4735 = vpop.permute.xlu0 %4734
    %v4736 = vsel %vm2228, %v4719, %v4721
    %v4737 = vsel %vm2228, %v4721, %v4723
    %v4738 = vsel %vm2228, %v4723, %v4725
    %v4739 = vsel %vm2228, %v4725, %v4727
    %v4740 = vsel %vm2228, %v4727, %v4729
    %v4741 = vsel %vm2228, %v4729, %v4731
    %v4742 = vsel %vm2228, %v4731, %v4733
    %v4743 = vsel %vm2228, %v4733, %v4735
    %v4752 = vadd.f32 %v4692, %v4736
    %v4753 = vadd.f32 %v4693, %v4737
    %v4754 = vadd.f32 %v4694, %v4738
    %v4755 = vadd.f32 %v4695, %v4739
    %v4756 = vadd.f32 %v4696, %v4740
    %v4757 = vadd.f32 %v4697, %v4741
    %v4758 = vadd.f32 %v4698, %v4742
    %v4759 = vadd.f32 %v4699, %v4743
    %v4760 = vmul.f32 %v2975, %v2319
    %v4761 = vmul.f32 %v2979, %v2319
    %v4762 = vmul.f32 %v2983, %v2319
    %v4763 = vmul.f32 %v2987, %v2319
    %v4764 = vmul.f32 %v2991, %v2319
    %v4765 = vmul.f32 %v2995, %v2319
    %v4766 = vmul.f32 %v2999, %v2319
    %v4767 = vmul.f32 %v3003, %v2319
    %v4768 = vmul.f32 %v3007, %v2319
    %4778 = vrot.lane.b32.xlu0 %v4760, 65
    %v4779 = vpop.permute.xlu0 %4778
    %4780 = vrot.lane.b32.xlu0 %v4761, 65
    %v4781 = vpop.permute.xlu0 %4780
    %4782 = vrot.lane.b32.xlu0 %v4762, 65
    %v4783 = vpop.permute.xlu0 %4782
    %4784 = vrot.lane.b32.xlu0 %v4763, 65
    %v4785 = vpop.permute.xlu0 %4784
    %4786 = vrot.lane.b32.xlu0 %v4764, 65
    %v4787 = vpop.permute.xlu0 %4786
    %4788 = vrot.lane.b32.xlu0 %v4765, 65
    %v4789 = vpop.permute.xlu0 %4788
    %4790 = vrot.lane.b32.xlu0 %v4766, 65
    %v4791 = vpop.permute.xlu0 %4790
    %4792 = vrot.lane.b32.xlu0 %v4767, 65
    %v4793 = vpop.permute.xlu0 %4792
    %4794 = vrot.lane.b32.xlu0 %v4768, 65
    %v4795 = vpop.permute.xlu0 %4794
    %v4796 = vsel %vm2228, %v4779, %v4781
    %v4797 = vsel %vm2228, %v4781, %v4783
    %v4798 = vsel %vm2228, %v4783, %v4785
    %v4799 = vsel %vm2228, %v4785, %v4787
    %v4800 = vsel %vm2228, %v4787, %v4789
    %v4801 = vsel %vm2228, %v4789, %v4791
    %v4802 = vsel %vm2228, %v4791, %v4793
    %v4803 = vsel %vm2228, %v4793, %v4795
    %v4812 = vadd.f32 %v4752, %v4796
    %v4813 = vadd.f32 %v4753, %v4797
    %v4814 = vadd.f32 %v4754, %v4798
    %v4815 = vadd.f32 %v4755, %v4799
    %v4816 = vadd.f32 %v4756, %v4800
    %v4817 = vadd.f32 %v4757, %v4801
    %v4818 = vadd.f32 %v4758, %v4802
    %v4819 = vadd.f32 %v4759, %v4803
    %v4820 = vmul.f32 %v3074, %v2383
    %v4821 = vmul.f32 %v3078, %v2383
    %v4822 = vmul.f32 %v3082, %v2383
    %v4823 = vmul.f32 %v3086, %v2383
    %v4824 = vmul.f32 %v3090, %v2383
    %v4825 = vmul.f32 %v3094, %v2383
    %v4826 = vmul.f32 %v3098, %v2383
    %v4827 = vmul.f32 %v3102, %v2383
    %v4828 = vmul.f32 %v3106, %v2383
    %4838 = vrot.lane.b32.xlu0 %v4820, 65
    %v4839 = vpop.permute.xlu0 %4838
    %4840 = vrot.lane.b32.xlu0 %v4821, 65
    %v4841 = vpop.permute.xlu0 %4840
    %4842 = vrot.lane.b32.xlu0 %v4822, 65
    %v4843 = vpop.permute.xlu0 %4842
    %4844 = vrot.lane.b32.xlu0 %v4823, 65
    %v4845 = vpop.permute.xlu0 %4844
    %4846 = vrot.lane.b32.xlu0 %v4824, 65
    %v4847 = vpop.permute.xlu0 %4846
    %4848 = vrot.lane.b32.xlu0 %v4825, 65
    %v4849 = vpop.permute.xlu0 %4848
    %4850 = vrot.lane.b32.xlu0 %v4826, 65
    %v4851 = vpop.permute.xlu0 %4850
    %4852 = vrot.lane.b32.xlu0 %v4827, 65
    %v4853 = vpop.permute.xlu0 %4852
    %4854 = vrot.lane.b32.xlu0 %v4828, 65
    %v4855 = vpop.permute.xlu0 %4854
    %v4856 = vsel %vm2228, %v4839, %v4841
    %v4857 = vsel %vm2228, %v4841, %v4843
    %v4858 = vsel %vm2228, %v4843, %v4845
    %v4859 = vsel %vm2228, %v4845, %v4847
    %v4860 = vsel %vm2228, %v4847, %v4849
    %v4861 = vsel %vm2228, %v4849, %v4851
    %v4862 = vsel %vm2228, %v4851, %v4853
    %v4863 = vsel %vm2228, %v4853, %v4855
    %v4872 = vadd.f32 %v4812, %v4856
    %v4873 = vadd.f32 %v4813, %v4857
    %v4874 = vadd.f32 %v4814, %v4858
    %v4875 = vadd.f32 %v4815, %v4859
    %v4876 = vadd.f32 %v4816, %v4860
    %v4877 = vadd.f32 %v4817, %v4861
    %v4878 = vadd.f32 %v4818, %v4862
    %v4879 = vadd.f32 %v4819, %v4863
    %v4880 = vmul.f32 %v2777, %v2447
    %v4881 = vmul.f32 %v2781, %v2447
    %v4882 = vmul.f32 %v2785, %v2447
    %v4883 = vmul.f32 %v2789, %v2447
    %v4884 = vmul.f32 %v2793, %v2447
    %v4885 = vmul.f32 %v2797, %v2447
    %v4886 = vmul.f32 %v2801, %v2447
    %v4887 = vmul.f32 %v2805, %v2447
    %v4888 = vmul.f32 %v2809, %v2447
    %4898 = vrot.lane.b32.xlu0 %v4880, 97
    %v4899 = vpop.permute.xlu0 %4898
    %4900 = vrot.lane.b32.xlu0 %v4881, 97
    %v4901 = vpop.permute.xlu0 %4900
    %4902 = vrot.lane.b32.xlu0 %v4882, 97
    %v4903 = vpop.permute.xlu0 %4902
    %4904 = vrot.lane.b32.xlu0 %v4883, 97
    %v4905 = vpop.permute.xlu0 %4904
    %4906 = vrot.lane.b32.xlu0 %v4884, 97
    %v4907 = vpop.permute.xlu0 %4906
    %4908 = vrot.lane.b32.xlu0 %v4885, 97
    %v4909 = vpop.permute.xlu0 %4908
    %4910 = vrot.lane.b32.xlu0 %v4886, 97
    %v4911 = vpop.permute.xlu0 %4910
    %4912 = vrot.lane.b32.xlu0 %v4887, 97
    %v4913 = vpop.permute.xlu0 %4912
    %4914 = vrot.lane.b32.xlu0 %v4888, 97
    %v4915 = vpop.permute.xlu0 %4914
    %v4916 = vsel %vm2485, %v4899, %v4901
    %v4917 = vsel %vm2485, %v4901, %v4903
    %v4918 = vsel %vm2485, %v4903, %v4905
    %v4919 = vsel %vm2485, %v4905, %v4907
    %v4920 = vsel %vm2485, %v4907, %v4909
    %v4921 = vsel %vm2485, %v4909, %v4911
    %v4922 = vsel %vm2485, %v4911, %v4913
    %v4923 = vsel %vm2485, %v4913, %v4915
    %v4932 = vadd.f32 %v4872, %v4916
    %v4933 = vadd.f32 %v4873, %v4917
    %v4934 = vadd.f32 %v4874, %v4918
    %v4935 = vadd.f32 %v4875, %v4919
    %v4936 = vadd.f32 %v4876, %v4920
    %v4937 = vadd.f32 %v4877, %v4921
    %v4938 = vadd.f32 %v4878, %v4922
    %v4939 = vadd.f32 %v4879, %v4923
    %v4940 = vmul.f32 %v2876, %v2512
    %v4941 = vmul.f32 %v2880, %v2512
    %v4942 = vmul.f32 %v2884, %v2512
    %v4943 = vmul.f32 %v2888, %v2512
    %v4944 = vmul.f32 %v2892, %v2512
    %v4945 = vmul.f32 %v2896, %v2512
    %v4946 = vmul.f32 %v2900, %v2512
    %v4947 = vmul.f32 %v2904, %v2512
    %v4948 = vmul.f32 %v2908, %v2512
    %4958 = vrot.lane.b32.xlu0 %v4940, 97
    %v4959 = vpop.permute.xlu0 %4958
    %4960 = vrot.lane.b32.xlu0 %v4941, 97
    %v4961 = vpop.permute.xlu0 %4960
    %4962 = vrot.lane.b32.xlu0 %v4942, 97
    %v4963 = vpop.permute.xlu0 %4962
    %4964 = vrot.lane.b32.xlu0 %v4943, 97
    %v4965 = vpop.permute.xlu0 %4964
    %4966 = vrot.lane.b32.xlu0 %v4944, 97
    %v4967 = vpop.permute.xlu0 %4966
    %4968 = vrot.lane.b32.xlu0 %v4945, 97
    %v4969 = vpop.permute.xlu0 %4968
    %4970 = vrot.lane.b32.xlu0 %v4946, 97
    %v4971 = vpop.permute.xlu0 %4970
    %4972 = vrot.lane.b32.xlu0 %v4947, 97
    %v4973 = vpop.permute.xlu0 %4972
    %4974 = vrot.lane.b32.xlu0 %v4948, 97
    %v4975 = vpop.permute.xlu0 %4974
    %v4976 = vsel %vm2485, %v4959, %v4961
    %v4977 = vsel %vm2485, %v4961, %v4963
    %v4978 = vsel %vm2485, %v4963, %v4965
    %v4979 = vsel %vm2485, %v4965, %v4967
    %v4980 = vsel %vm2485, %v4967, %v4969
    %v4981 = vsel %vm2485, %v4969, %v4971
    %v4982 = vsel %vm2485, %v4971, %v4973
    %v4983 = vsel %vm2485, %v4973, %v4975
    %v4992 = vadd.f32 %v4932, %v4976
    %v4993 = vadd.f32 %v4933, %v4977
    %v4994 = vadd.f32 %v4934, %v4978
    %v4995 = vadd.f32 %v4935, %v4979
    %v4996 = vadd.f32 %v4936, %v4980
    %v4997 = vadd.f32 %v4937, %v4981
    %v4998 = vadd.f32 %v4938, %v4982
    %v4999 = vadd.f32 %v4939, %v4983
    %v5000 = vmul.f32 %v2975, %v2576
    %v5001 = vmul.f32 %v2979, %v2576
    %v5002 = vmul.f32 %v2983, %v2576
    %v5003 = vmul.f32 %v2987, %v2576
    %v5004 = vmul.f32 %v2991, %v2576
    %v5005 = vmul.f32 %v2995, %v2576
    %v5006 = vmul.f32 %v2999, %v2576
    %v5007 = vmul.f32 %v3003, %v2576
    %v5008 = vmul.f32 %v3007, %v2576
    %5018 = vrot.lane.b32.xlu0 %v5000, 97
    %v5019 = vpop.permute.xlu0 %5018
    %5020 = vrot.lane.b32.xlu0 %v5001, 97
    %v5021 = vpop.permute.xlu0 %5020
    %5022 = vrot.lane.b32.xlu0 %v5002, 97
    %v5023 = vpop.permute.xlu0 %5022
    %5024 = vrot.lane.b32.xlu0 %v5003, 97
    %v5025 = vpop.permute.xlu0 %5024
    %5026 = vrot.lane.b32.xlu0 %v5004, 97
    %v5027 = vpop.permute.xlu0 %5026
    %5028 = vrot.lane.b32.xlu0 %v5005, 97
    %v5029 = vpop.permute.xlu0 %5028
    %5030 = vrot.lane.b32.xlu0 %v5006, 97
    %v5031 = vpop.permute.xlu0 %5030
    %5032 = vrot.lane.b32.xlu0 %v5007, 97
    %v5033 = vpop.permute.xlu0 %5032
    %5034 = vrot.lane.b32.xlu0 %v5008, 97
    %v5035 = vpop.permute.xlu0 %5034
    %v5036 = vsel %vm2485, %v5019, %v5021
    %v5037 = vsel %vm2485, %v5021, %v5023
    %v5038 = vsel %vm2485, %v5023, %v5025
    %v5039 = vsel %vm2485, %v5025, %v5027
    %v5040 = vsel %vm2485, %v5027, %v5029
    %v5041 = vsel %vm2485, %v5029, %v5031
    %v5042 = vsel %vm2485, %v5031, %v5033
    %v5043 = vsel %vm2485, %v5033, %v5035
    %v5052 = vadd.f32 %v4992, %v5036
    %v5053 = vadd.f32 %v4993, %v5037
    %v5054 = vadd.f32 %v4994, %v5038
    %v5055 = vadd.f32 %v4995, %v5039
    %v5056 = vadd.f32 %v4996, %v5040
    %v5057 = vadd.f32 %v4997, %v5041
    %v5058 = vadd.f32 %v4998, %v5042
    %v5059 = vadd.f32 %v4999, %v5043
    %v5060 = vmul.f32 %v3074, %v2640
    %v5061 = vmul.f32 %v3078, %v2640
    %v5062 = vmul.f32 %v3082, %v2640
    %v5063 = vmul.f32 %v3086, %v2640
    %v5064 = vmul.f32 %v3090, %v2640
    %v5065 = vmul.f32 %v3094, %v2640
    %v5066 = vmul.f32 %v3098, %v2640
    %v5067 = vmul.f32 %v3102, %v2640
    %v5068 = vmul.f32 %v3106, %v2640
    %5078 = vrot.lane.b32.xlu0 %v5060, 97
    %v5079 = vpop.permute.xlu0 %5078
    %5080 = vrot.lane.b32.xlu0 %v5061, 97
    %v5081 = vpop.permute.xlu0 %5080
    %5082 = vrot.lane.b32.xlu0 %v5062, 97
    %v5083 = vpop.permute.xlu0 %5082
    %5084 = vrot.lane.b32.xlu0 %v5063, 97
    %v5085 = vpop.permute.xlu0 %5084
    %5086 = vrot.lane.b32.xlu0 %v5064, 97
    %v5087 = vpop.permute.xlu0 %5086
    %5088 = vrot.lane.b32.xlu0 %v5065, 97
    %v5089 = vpop.permute.xlu0 %5088
    %5090 = vrot.lane.b32.xlu0 %v5066, 97
    %v5091 = vpop.permute.xlu0 %5090
    %5092 = vrot.lane.b32.xlu0 %v5067, 97
    %v5093 = vpop.permute.xlu0 %5092
    %5094 = vrot.lane.b32.xlu0 %v5068, 97
    %v5095 = vpop.permute.xlu0 %5094
    %v5096 = vsel %vm2485, %v5079, %v5081
    %v5097 = vsel %vm2485, %v5081, %v5083
    %v5098 = vsel %vm2485, %v5083, %v5085
    %v5099 = vsel %vm2485, %v5085, %v5087
    %v5100 = vsel %vm2485, %v5087, %v5089
    %v5101 = vsel %vm2485, %v5089, %v5091
    %v5102 = vsel %vm2485, %v5091, %v5093
    %v5103 = vsel %vm2485, %v5093, %v5095
    %v5112 = vadd.f32 %v5052, %v5096
    %v5113 = vadd.f32 %v5053, %v5097
    %v5114 = vadd.f32 %v5054, %v5098
    %v5115 = vadd.f32 %v5055, %v5099
    %v5116 = vadd.f32 %v5056, %v5100
    %v5117 = vadd.f32 %v5057, %v5101
    %v5118 = vadd.f32 %v5058, %v5102
    %v5119 = vadd.f32 %v5059, %v5103
    %v5120 = vmax.f32 %v5112, 0.0
    %v5121 = vmax.f32 %v5113, 0.0
    %v5122 = vmax.f32 %v5114, 0.0
    %v5123 = vmax.f32 %v5115, 0.0
    %v5124 = vmax.f32 %v5116, 0.0
    %v5125 = vmax.f32 %v5117, 0.0
    %v5126 = vmax.f32 %v5118, 0.0
    %v5127 = vmax.f32 %v5119, 0.0
    %s5128 = scalar_lea.vmem [#allocation5], 64
    %5129 = vst [vmem:[%s5128] sm:$0xff] %v5120
    %5130 = vst [vmem:[%s5128 + $0x8] sm:$0xff] %v5121
    %5131 = vst [vmem:[%s5128 + $0x10] sm:$0xff] %v5122
    %5132 = vst [vmem:[%s5128 + $0x18] sm:$0xff] %v5123
    %5133 = vst [vmem:[%s5128 + $0x20] sm:$0xff] %v5124
    %5134 = vst [vmem:[%s5128 + $0x28] sm:$0xff] %v5125
    %5135 = vst [vmem:[%s5128 + $0x30] sm:$0xff] %v5126
    %5136 = vst [vmem:[%s5128 + $0x38] sm:$0xff] %v5127
    // Predicated region
    $region18: #{tpu_custom_call.1} parent=1 // pred_check
      _
    $region19: #{tpu_custom_call.1} parent=1 // pred_check_branch
      %5138 = sbr.rel (0) target = $region21
    $region20: #{tpu_custom_call.1} parent=1 // pred_region
      %s5140 = ssub.s32 2048, 2048
      %5141 = vsyncadd [#allocation4], %s5140
      %s5142 = sshll.u32 [#allocation5], 4
      %s5143 = int_to_ptr.vmem [resolvable:$true] %s5142
      %5148 = dma.vmem_to_hbm [thread:$0]  %s5143, 2048, %s3, [#allocation4], 1024, 1024, 64
    $region21: #{tpu_custom_call.1} parent=1 // pred_fallthru
      _
    // Predicated region
    $region22: #{tpu_custom_call.1} parent=1 // pred_check
      _
    $region23: #{tpu_custom_call.1} parent=1 // pred_check_branch
      %5150 = sbr.rel (0) target = $region25
    $region24: #{tpu_custom_call.1} parent=1 // pred_region
      %5151 = dma.done [#allocation4], 2048
    $region25: #{tpu_custom_call.1} parent=1 // pred_fallthru
      _
    %5152 = vsyncpa [#allocation3], 1
    %5153 = vsyncpa [#allocation4], 1

</llo_original>
